<compile_context>
chip_gen: v7x
topology: tpu7x:2x2x1
jax: 0.10.0
libtpu: 0.0.40
codegen_flags: <defaults>
</compile_context>

<pallas_src>
import functools

import numpy as np
import jax
import jax.numpy as jnp
from jax.experimental import pallas as pl
from jax.experimental.pallas import tpu as pltpu


# ----------------------------- Pallas kernel -----------------------------

def _hermite_flow_kernel(xin_ref, w1_ref, wh_ref, bh_ref, mask_ref, wo_ref,
                         out_ref, *, order, n_mid):
    """Fused HermiteFlow forward on one batch tile.

    xin_ref : (TB, C)             f32       merged [x | t | 1 | 0-pad] input
    w1_ref  : (2, C, Np)          f32/bf16  per-branch fused first-layer weights
    wh_ref  : (2, n_mid, Np, Np)  f32/bf16  per-branch block-diag hidden weights
    bh_ref  : (2, n_mid, 1, Np)   f32       hidden biases
    mask_ref: (order+1, Np)       f32       0/1 polynomial -> lane expansion
    wo_ref  : (2, Np, OP)         f32/bf16  per-branch stacked output weights
    out_ref : (TB, OP)            f32       lane-dense output (OP >= 128)
    """
    mxu_dtype = w1_ref.dtype
    xin = xin_ref[...]                              # (TB, C) f32
    xin_m = xin.astype(mxu_dtype)
    mask = mask_ref[...]                            # (M, Np) f32

    acc = jnp.zeros(out_ref.shape, jnp.float32)
    for br in range(2):                             # 0 = ms branch, 1 = ts branch
        # fused first layer: [x | t | 1] @ W1 (bias folded into the const-1 col)
        h = jnp.dot(xin_m, w1_ref[br], preferred_element_type=jnp.float32)
        h = jnp.maximum(h, 0.0)

        # fused per-branch hidden layers (n_mid is tiny & static -> unrolled)
        for l in range(n_mid):
            h = jnp.dot(h.astype(mxu_dtype), wh_ref[br, l],
                        preferred_element_type=jnp.float32)
            h = jnp.maximum(h + bh_ref[br, l], 0.0)

        # Hermite weights H_k(z), expanded to a per-lane scale through the
        # precomputed 0/1 masks -- pure VPU, no concat / extra MXU pushes.
        z = xin[:, br:br + 1]                       # x[:,0] for ms, x[:,1] for ts
        hk_m1 = jnp.ones_like(z)                    # H_0
        scale = hk_m1 * mask[0:1, :]
        if order >= 1:
            hk = 2.0 * z                            # H_1
            scale = scale + hk * mask[1:2, :]
            for k in range(2, order + 1):
                hk, hk_m1 = 2.0 * z * hk - 2.0 * (k - 1) * hk_m1, hk
                scale = scale + hk * mask[k:k + 1, :]

        # final contraction; output biases ride along via the padding-lane
        # "bias units" (activation 1, Wo row = b_out): no extra matmul / add.
        acc = acc + jnp.dot((h * scale).astype(mxu_dtype), wo_ref[br],
                            preferred_element_type=jnp.float32)

    out_ref[...] = acc.astype(out_ref.dtype)


# ----------------------- host-side weight re-layout -----------------------

def pack_params(params, *, order, lane=128, mxu_dtype=jnp.float32):
    """Fuse the 2*(order+1) FlowMLPs into two per-branch, lane-padded slabs.

    Per-branch lane layout (Np = round_up((order+1)*H + (order+1), 128)):
      lanes [k*H, (k+1)*H)   : hidden units of polynomial k's MLP
      lane  (order+1)*H + k  : "bias unit" of polynomial k (carries 1.0; its Wo
                                row is that MLP's output bias)
      remaining lanes        : dead zero padding
    """
    w_in, b_in, w_hid, b_hid, w_out, b_out = (
        np.asarray(p, np.float32) for p in params)
    n_mlp, in_dim, H = w_in.shape
    M = order + 1
    assert n_mlp == 2 * M
    half = in_dim - 1
    dim = 2 * half
    n_mid = w_hid.shape[1]

    n_units = M * H + M
    n_pad = ((n_units + lane - 1) // lane) * lane
    in_cols = ((dim + 2 + 7) // 8) * 8              # [x | t | 1 | 0-pad]
    t_col, one_col = dim, dim + 1
    out_pad = max(lane, ((dim + lane - 1) // lane) * lane)   # lane-dense output

    W1 = np.zeros((2, in_cols, n_pad), np.float32)
    Wh = np.zeros((2, n_mid, n_pad, n_pad), np.float32)
    bh = np.zeros((2, n_mid, 1, n_pad), np.float32)
    mask = np.zeros((M, n_pad), np.float32)
    Wo = np.zeros((2, n_pad, out_pad), np.float32)

    for br in range(2):                 # 0 = ms (out cols [:half]), 1 = ts
        xs = half if br == 0 else 0     # ms sees x[:, half:], ts sees x[:, :half]
        oc = 0 if br == 0 else half     # output column offset
        for k in range(M):
            m = br * M + k
            s, e = k * H, (k + 1) * H
            bl = M * H + k              # bias-unit lane for polynomial k
            W1[br, xs:xs + half, s:e] = w_in[m, :half, :]
            W1[br, t_col, s:e] = w_in[m, half, :]
            W1[br, one_col, s:e] = b_in[m, 0, :]
            W1[br, one_col, bl] = 1.0                 # ReLU(1) = 1 -> bias carrier
            for l in range(n_mid):
                Wh[br, l, s:e, s:e] = w_hid[m, l]
                bh[br, l, 0, s:e] = b_hid[m, l, 0, :]
                Wh[br, l, bl, bl] = 1.0               # keep the bias carrier at 1
            Wo[br, s:e, oc:oc + half] = w_out[m]
            Wo[br, bl, oc:oc + half] = b_out[m, 0, :]
            if br == 0:                 # lane layout identical in both branches
                mask[k, s:e] = 1.0
                mask[k, bl] = 1.0

    W1, Wh, Wo = (jnp.asarray(a, mxu_dtype) for a in (W1, Wh, Wo))
    return (W1, Wh, jnp.asarray(bh), jnp.asarray(mask), Wo)


# -------------------------------- wrapper ---------------------------------

def hermite_flow_forward(x, t, packed, *, order, block_b=512):
    """Batch-tiled pallas_call; all weight slabs stay VMEM-resident across the
    grid (constant index_maps), batch axis is 'parallel' for megacore."""
    W1, Wh, bh, mask, Wo = packed
    B, dim = x.shape
    in_cols = W1.shape[1]
    out_pad = Wo.shape[-1]
    n_mid = Wh.shape[1]
    TB = block_b
    Bp = pl.cdiv(B, TB) * TB

    # single merged input stream: [x | t | 1 | 0-pad]  (folds the first-layer
    # bias and the time column into one matmul; removes the (TB,1) t stream).
    xin = jnp.concatenate(
        [x, t, jnp.ones((B, 1), x.dtype),
         jnp.zeros((B, in_cols - dim - 2), x.dtype)], axis=1)
    if Bp != B:                          # pad batch to a whole number of tiles
        xin = jnp.pad(xin, ((0, Bp - B), (0, 0)))

    kernel = functools.partial(_hermite_flow_kernel, order=order, n_mid=n_mid)

    def resident(a):                     # whole array, constant block index
        return pl.BlockSpec(a.shape, lambda i, nd=a.ndim: (0,) * nd)

    out = pl.pallas_call(
        kernel,
        out_shape=jax.ShapeDtypeStruct((Bp, out_pad), jnp.float32),
        grid=(Bp // TB,),
        in_specs=[
            pl.BlockSpec((TB, in_cols), lambda i: (i, 0)),
            resident(W1), resident(Wh), resident(bh),
            resident(mask), resident(Wo),
        ],
        out_specs=pl.BlockSpec((TB, out_pad), lambda i: (i, 0)),
        compiler_params=pltpu.CompilerParams(
            dimension_semantics=("parallel",)),
    )(xin, W1, Wh, bh, mask, Wo)
    return out[:B, :dim]


# --------------------- deterministic parameter init ----------------------

def init_params(key, dim, hidden_dim, num_layers, order):
    """PyTorch-Linear-style uniform(-1/sqrt(fan_in), 1/sqrt(fan_in)) init,
    stacked across the 2*(order+1) FlowMLPs (ms first, then ts)."""
    half = dim // 2
    in_dim = half + 1
    n_mlp = 2 * (order + 1)
    n_mid = num_layers - 1
    ks = jax.random.split(key, 6)

    def unif(k, shape, fan_in):
        bound = 1.0 / jnp.sqrt(jnp.float32(fan_in))
        return jax.random.uniform(k, shape, jnp.float32, -bound, bound)

    w_in = unif(ks[0], (n_mlp, in_dim, hidden_dim), in_dim)
    b_in = unif(ks[1], (n_mlp, 1, hidden_dim), in_dim)
    w_hid = unif(ks[2], (n_mlp, n_mid, hidden_dim, hidden_dim), hidden_dim)
    b_hid = unif(ks[3], (n_mlp, n_mid, 1, hidden_dim), hidden_dim)
    w_out = unif(ks[4], (n_mlp, hidden_dim, half), hidden_dim)
    b_out = unif(ks[5], (n_mlp, 1, half), hidden_dim)
    return (w_in, b_in, w_hid, b_hid, w_out, b_out)


# ------------------------- pure-JAX reference ----------------------------

def hermite_flow_reference(x, t, params, *, order):
    (w_in, b_in, w_hid, b_hid, w_out, b_out) = params
    half = x.shape[1] // 2
    M = order + 1

    def mlp(m, inp):
        h = jnp.maximum(inp @ w_in[m] + b_in[m], 0.0)
        for l in range(w_hid.shape[1]):
            h = jnp.maximum(h @ w_hid[m, l] + b_hid[m, l], 0.0)
        return h @ w_out[m] + b_out[m]

    def hermite(z):
        hs = [jnp.ones_like(z), 2.0 * z]
        for k in range(2, order + 1):
            hs.append(2.0 * z * hs[k - 1] - 2.0 * (k - 1) * hs[k - 2])
        return hs[:order + 1]

    x1 = jnp.concatenate([x[:, :half], t], axis=1)
    x2 = jnp.concatenate([x[:, half:], t], axis=1)
    h1 = hermite(x[:, 0:1])
    h2 = hermite(x[:, 1:2])
    left = sum(h1[k] * mlp(k, x2) for k in range(M))
    right = sum(h2[k] * mlp(M + k, x1) for k in range(M))
    return jnp.concatenate([left, right], axis=1)


# --------------------------------- main ----------------------------------

if __name__ == "__main__":
    # Shapes consistent with the module: dim=4 (dim//2=2), hidden_dim_s=32,
    # hidden_layer_number=2, order=2. Batch=1024 with TB=512 gives a grid of
    # 2 parallel blocks (one per v7x TensorCore) while amortizing step overhead.
    dim, hidden_dim, num_layers, order = 4, 32, 2, 2
    batch, block_b = 1024, 512

    key = jax.random.PRNGKey(0)
    k_x, k_t, k_p = jax.random.split(key, 3)
    x = jax.random.normal(k_x, (batch, dim), jnp.float32)
    t = jax.random.uniform(k_t, (batch, 1), jnp.float32)
    params = init_params(k_p, dim, hidden_dim, num_layers, order)
    ref = hermite_flow_reference(x, t, params, order=order)

    # f32 path: exact check on all generations.
    packed = pack_params(params, order=order)
    out = hermite_flow_forward(x, t, packed, order=order, block_b=block_b)
    out = jax.block_until_ready(out)
    assert out.shape == (batch, dim) and out.dtype == jnp.float32
    max_err = jnp.max(jnp.abs(out - ref))
    assert jnp.allclose(out, ref, atol=1e-4, rtol=1e-4), max_err

    # bf16-operand / f32-accumulate path (~2x MXU throughput on v6e/v7x, half
    # the resident-weight VMEM / DMA bytes); tolerance loosened for bf16.
    packed_bf16 = pack_params(params, order=order, mxu_dtype=jnp.bfloat16)
    out_bf16 = hermite_flow_forward(x, t, packed_bf16, order=order,
                                    block_b=block_b)
    out_bf16 = jax.block_until_ready(out_bf16)
    err_bf16 = float(jnp.max(jnp.abs(out_bf16 - ref)))
    bound_bf16 = 3e-2 * float(1.0 + jnp.max(jnp.abs(ref)))
    assert err_bf16 <= bound_bf16, (err_bf16, bound_bf16)

    print("KERNEL_OK")
</pallas_src>

<mosaic_0001>
module attributes {stable_mosaic.version = 11 : i64} {
  func.func @_hermite_flow_kernel(%arg0: i32, %arg1: memref<512x8xf32, #tpu.memory_space<vmem>>, %arg2: memref<2x8x128xf32, #tpu.memory_space<vmem>>, %arg3: memref<2x1x128x128xf32, #tpu.memory_space<vmem>>, %arg4: memref<2x1x1x128xf32, #tpu.memory_space<vmem>>, %arg5: memref<3x128xf32, #tpu.memory_space<vmem>>, %arg6: memref<2x128x128xf32, #tpu.memory_space<vmem>>, %arg7: memref<512x128xf32, #tpu.memory_space<vmem>>) attributes {dimension_semantics = [#tpu.dimension_semantics<parallel>], iteration_bounds = array<i64: 2>, scalar_prefetch = 0 : i64, scratch_operands = 0 : i64, tpu.core_type = #tpu.core_type<tc>, window_params = [{transform_indices = @transform_0, window_bounds = array<i64: 512, 8>}, {pipeline_mode = #tpu.pipeline_mode<synchronous>, transform_indices = @transform_1, window_bounds = array<i64: 2, 8, 128>}, {pipeline_mode = #tpu.pipeline_mode<synchronous>, transform_indices = @transform_2, window_bounds = array<i64: 2, 1, 128, 128>}, {pipeline_mode = #tpu.pipeline_mode<synchronous>, transform_indices = @transform_3, window_bounds = array<i64: 2, 1, 1, 128>}, {pipeline_mode = #tpu.pipeline_mode<synchronous>, transform_indices = @transform_4, window_bounds = array<i64: 3, 128>}, {pipeline_mode = #tpu.pipeline_mode<synchronous>, transform_indices = @transform_5, window_bounds = array<i64: 2, 128, 128>}, {transform_indices = @transform_6, window_bounds = array<i64: 512, 128>}]} {
    %c0 = arith.constant 0 : index
    %c0_0 = arith.constant 0 : index
    %0 = vector.load %arg1[%c0, %c0_0] : memref<512x8xf32, #tpu.memory_space<vmem>>, vector<512x8xf32>
    %c0_1 = arith.constant 0 : index
    %c0_2 = arith.constant 0 : index
    %1 = vector.load %arg5[%c0_1, %c0_2] : memref<3x128xf32, #tpu.memory_space<vmem>>, vector<3x128xf32>
    %cst = arith.constant 0.000000e+00 : f32
    %2 = vector.broadcast %cst : f32 to vector<512x128xf32>
    %c0_3 = arith.constant 0 : index
    %c0_4 = arith.constant 0 : index
    %c0_5 = arith.constant 0 : index
    %3 = vector.load %arg2[%c0_3, %c0_4, %c0_5] : memref<2x8x128xf32, #tpu.memory_space<vmem>>, vector<1x8x128xf32>
    %4 = vector.shape_cast %3 : vector<1x8x128xf32> to vector<8x128xf32>
    %cst_6 = arith.constant dense<0.000000e+00> : vector<512x128xf32>
    %5 = tpu.matmul %0, %4, %cst_6 {dimension_numbers = #tpu.dot_dimension_numbers<[1], [0], [0], [1], [0, 0, 1, 1], [], []>} : vector<512x8xf32>, vector<8x128xf32>, vector<512x128xf32> -> vector<512x128xf32>
    %cst_7 = arith.constant 0.000000e+00 : f32
    %6 = vector.broadcast %cst_7 : f32 to vector<512x128xf32>
    %7 = arith.maximumf %5, %6 : vector<512x128xf32>
    %c0_8 = arith.constant 0 : index
    %c0_9 = arith.constant 0 : index
    %c0_10 = arith.constant 0 : index
    %c0_11 = arith.constant 0 : index
    %8 = vector.load %arg3[%c0_8, %c0_9, %c0_10, %c0_11] : memref<2x1x128x128xf32, #tpu.memory_space<vmem>>, vector<1x1x128x128xf32>
    %9 = vector.shape_cast %8 : vector<1x1x128x128xf32> to vector<128x128xf32>
    %cst_12 = arith.constant dense<0.000000e+00> : vector<512x128xf32>
    %10 = tpu.matmul %7, %9, %cst_12 {dimension_numbers = #tpu.dot_dimension_numbers<[1], [0], [0], [1], [0, 0, 1, 1], [], []>} : vector<512x128xf32>, vector<128x128xf32>, vector<512x128xf32> -> vector<512x128xf32>
    %c0_13 = arith.constant 0 : index
    %c0_14 = arith.constant 0 : index
    %c0_15 = arith.constant 0 : index
    %c0_16 = arith.constant 0 : index
    %11 = vector.load %arg4[%c0_13, %c0_14, %c0_15, %c0_16] : memref<2x1x1x128xf32, #tpu.memory_space<vmem>>, vector<1x1x1x128xf32>
    %12 = vector.shape_cast %11 : vector<1x1x1x128xf32> to vector<1x128xf32>
    %13 = vector.broadcast %12 : vector<1x128xf32> to vector<512x128xf32>
    %14 = arith.addf %10, %13 : vector<512x128xf32>
    %cst_17 = arith.constant 0.000000e+00 : f32
    %15 = vector.broadcast %cst_17 : f32 to vector<512x128xf32>
    %16 = arith.maximumf %14, %15 : vector<512x128xf32>
    %17 = vector.extract_strided_slice %0 {offsets = [0, 0], sizes = [512, 1], strides = [1, 1]} : vector<512x8xf32> to vector<512x1xf32>
    %cst_18 = arith.constant 1.000000e+00 : f32
    %18 = vector.broadcast %cst_18 : f32 to vector<512x1xf32>
    %19 = vector.extract_strided_slice %1 {offsets = [0, 0], sizes = [1, 128], strides = [1, 1]} : vector<3x128xf32> to vector<1x128xf32>
    %20 = vector.broadcast %18 : vector<512x1xf32> to vector<512x128xf32>
    %21 = vector.broadcast %19 : vector<1x128xf32> to vector<512x128xf32>
    %22 = arith.mulf %20, %21 : vector<512x128xf32>
    %cst_19 = arith.constant 2.000000e+00 : f32
    %23 = vector.broadcast %cst_19 : f32 to vector<512x1xf32>
    %24 = arith.mulf %23, %17 : vector<512x1xf32>
    %25 = vector.extract_strided_slice %1 {offsets = [1, 0], sizes = [1, 128], strides = [1, 1]} : vector<3x128xf32> to vector<1x128xf32>
    %26 = vector.broadcast %24 : vector<512x1xf32> to vector<512x128xf32>
    %27 = vector.broadcast %25 : vector<1x128xf32> to vector<512x128xf32>
    %28 = arith.mulf %26, %27 : vector<512x128xf32>
    %29 = arith.addf %22, %28 : vector<512x128xf32>
    %cst_20 = arith.constant 2.000000e+00 : f32
    %30 = vector.broadcast %cst_20 : f32 to vector<512x1xf32>
    %31 = arith.mulf %30, %17 : vector<512x1xf32>
    %32 = arith.mulf %31, %24 : vector<512x1xf32>
    %cst_21 = arith.constant 2.000000e+00 : f32
    %33 = vector.broadcast %cst_21 : f32 to vector<512x1xf32>
    %34 = arith.mulf %33, %18 : vector<512x1xf32>
    %35 = arith.subf %32, %34 : vector<512x1xf32>
    %36 = vector.extract_strided_slice %1 {offsets = [2, 0], sizes = [1, 128], strides = [1, 1]} : vector<3x128xf32> to vector<1x128xf32>
    %37 = vector.broadcast %35 : vector<512x1xf32> to vector<512x128xf32>
    %38 = vector.broadcast %36 : vector<1x128xf32> to vector<512x128xf32>
    %39 = arith.mulf %37, %38 : vector<512x128xf32>
    %40 = arith.addf %29, %39 : vector<512x128xf32>
    %41 = arith.mulf %16, %40 : vector<512x128xf32>
    %c0_22 = arith.constant 0 : index
    %c0_23 = arith.constant 0 : index
    %c0_24 = arith.constant 0 : index
    %42 = vector.load %arg6[%c0_22, %c0_23, %c0_24] : memref<2x128x128xf32, #tpu.memory_space<vmem>>, vector<1x128x128xf32>
    %43 = vector.shape_cast %42 : vector<1x128x128xf32> to vector<128x128xf32>
    %cst_25 = arith.constant dense<0.000000e+00> : vector<512x128xf32>
    %44 = tpu.matmul %41, %43, %cst_25 {dimension_numbers = #tpu.dot_dimension_numbers<[1], [0], [0], [1], [0, 0, 1, 1], [], []>} : vector<512x128xf32>, vector<128x128xf32>, vector<512x128xf32> -> vector<512x128xf32>
    %45 = arith.addf %2, %44 : vector<512x128xf32>
    %c1 = arith.constant 1 : index
    %c0_26 = arith.constant 0 : index
    %c0_27 = arith.constant 0 : index
    %46 = vector.load %arg2[%c1, %c0_26, %c0_27] : memref<2x8x128xf32, #tpu.memory_space<vmem>>, vector<1x8x128xf32>
    %47 = vector.shape_cast %46 : vector<1x8x128xf32> to vector<8x128xf32>
    %cst_28 = arith.constant dense<0.000000e+00> : vector<512x128xf32>
    %48 = tpu.matmul %0, %47, %cst_28 {dimension_numbers = #tpu.dot_dimension_numbers<[1], [0], [0], [1], [0, 0, 1, 1], [], []>} : vector<512x8xf32>, vector<8x128xf32>, vector<512x128xf32> -> vector<512x128xf32>
    %cst_29 = arith.constant 0.000000e+00 : f32
    %49 = vector.broadcast %cst_29 : f32 to vector<512x128xf32>
    %50 = arith.maximumf %48, %49 : vector<512x128xf32>
    %c1_30 = arith.constant 1 : index
    %c0_31 = arith.constant 0 : index
    %c0_32 = arith.constant 0 : index
    %c0_33 = arith.constant 0 : index
    %51 = vector.load %arg3[%c1_30, %c0_31, %c0_32, %c0_33] : memref<2x1x128x128xf32, #tpu.memory_space<vmem>>, vector<1x1x128x128xf32>
    %52 = vector.shape_cast %51 : vector<1x1x128x128xf32> to vector<128x128xf32>
    %cst_34 = arith.constant dense<0.000000e+00> : vector<512x128xf32>
    %53 = tpu.matmul %50, %52, %cst_34 {dimension_numbers = #tpu.dot_dimension_numbers<[1], [0], [0], [1], [0, 0, 1, 1], [], []>} : vector<512x128xf32>, vector<128x128xf32>, vector<512x128xf32> -> vector<512x128xf32>
    %c1_35 = arith.constant 1 : index
    %c0_36 = arith.constant 0 : index
    %c0_37 = arith.constant 0 : index
    %c0_38 = arith.constant 0 : index
    %54 = vector.load %arg4[%c1_35, %c0_36, %c0_37, %c0_38] : memref<2x1x1x128xf32, #tpu.memory_space<vmem>>, vector<1x1x1x128xf32>
    %55 = vector.shape_cast %54 : vector<1x1x1x128xf32> to vector<1x128xf32>
    %56 = vector.broadcast %55 : vector<1x128xf32> to vector<512x128xf32>
    %57 = arith.addf %53, %56 : vector<512x128xf32>
    %cst_39 = arith.constant 0.000000e+00 : f32
    %58 = vector.broadcast %cst_39 : f32 to vector<512x128xf32>
    %59 = arith.maximumf %57, %58 : vector<512x128xf32>
    %60 = vector.extract_strided_slice %0 {offsets = [0, 1], sizes = [512, 1], strides = [1, 1]} : vector<512x8xf32> to vector<512x1xf32>
    %cst_40 = arith.constant 1.000000e+00 : f32
    %61 = vector.broadcast %cst_40 : f32 to vector<512x1xf32>
    %62 = vector.extract_strided_slice %1 {offsets = [0, 0], sizes = [1, 128], strides = [1, 1]} : vector<3x128xf32> to vector<1x128xf32>
    %63 = vector.broadcast %61 : vector<512x1xf32> to vector<512x128xf32>
    %64 = vector.broadcast %62 : vector<1x128xf32> to vector<512x128xf32>
    %65 = arith.mulf %63, %64 : vector<512x128xf32>
    %cst_41 = arith.constant 2.000000e+00 : f32
    %66 = vector.broadcast %cst_41 : f32 to vector<512x1xf32>
    %67 = arith.mulf %66, %60 : vector<512x1xf32>
    %68 = vector.extract_strided_slice %1 {offsets = [1, 0], sizes = [1, 128], strides = [1, 1]} : vector<3x128xf32> to vector<1x128xf32>
    %69 = vector.broadcast %67 : vector<512x1xf32> to vector<512x128xf32>
    %70 = vector.broadcast %68 : vector<1x128xf32> to vector<512x128xf32>
    %71 = arith.mulf %69, %70 : vector<512x128xf32>
    %72 = arith.addf %65, %71 : vector<512x128xf32>
    %cst_42 = arith.constant 2.000000e+00 : f32
    %73 = vector.broadcast %cst_42 : f32 to vector<512x1xf32>
    %74 = arith.mulf %73, %60 : vector<512x1xf32>
    %75 = arith.mulf %74, %67 : vector<512x1xf32>
    %cst_43 = arith.constant 2.000000e+00 : f32
    %76 = vector.broadcast %cst_43 : f32 to vector<512x1xf32>
    %77 = arith.mulf %76, %61 : vector<512x1xf32>
    %78 = arith.subf %75, %77 : vector<512x1xf32>
    %79 = vector.extract_strided_slice %1 {offsets = [2, 0], sizes = [1, 128], strides = [1, 1]} : vector<3x128xf32> to vector<1x128xf32>
    %80 = vector.broadcast %78 : vector<512x1xf32> to vector<512x128xf32>
    %81 = vector.broadcast %79 : vector<1x128xf32> to vector<512x128xf32>
    %82 = arith.mulf %80, %81 : vector<512x128xf32>
    %83 = arith.addf %72, %82 : vector<512x128xf32>
    %84 = arith.mulf %59, %83 : vector<512x128xf32>
    %c1_44 = arith.constant 1 : index
    %c0_45 = arith.constant 0 : index
    %c0_46 = arith.constant 0 : index
    %85 = vector.load %arg6[%c1_44, %c0_45, %c0_46] : memref<2x128x128xf32, #tpu.memory_space<vmem>>, vector<1x128x128xf32>
    %86 = vector.shape_cast %85 : vector<1x128x128xf32> to vector<128x128xf32>
    %cst_47 = arith.constant dense<0.000000e+00> : vector<512x128xf32>
    %87 = tpu.matmul %84, %86, %cst_47 {dimension_numbers = #tpu.dot_dimension_numbers<[1], [0], [0], [1], [0, 0, 1, 1], [], []>} : vector<512x128xf32>, vector<128x128xf32>, vector<512x128xf32> -> vector<512x128xf32>
    %88 = arith.addf %45, %87 : vector<512x128xf32>
    %c0_48 = arith.constant 0 : index
    %c0_49 = arith.constant 0 : index
    %89 = vector.load %arg7[%c0_48, %c0_49] : memref<512x128xf32, #tpu.memory_space<vmem>>, vector<512x128xf32>
    tpu.vector_store %arg7[%c0_48, %c0_49], %88 {strides = array<i32>} : memref<512x128xf32, #tpu.memory_space<vmem>>, vector<512x128xf32>,
    return
  }
  func.func @transform_0(%arg0: i32) -> (i32, i32) {
    %c0_i32 = arith.constant 0 : i32
    %c0_i32_0 = arith.constant 0 : i32
    return %arg0, %c0_i32 : i32, i32
  }
  func.func @transform_1(%arg0: i32) -> (i32, i32, i32) {
    %c0_i32 = arith.constant 0 : i32
    %c0_i32_0 = arith.constant 0 : i32
    %c0_i32_1 = arith.constant 0 : i32
    %c0_i32_2 = arith.constant 0 : i32
    return %c0_i32, %c0_i32_0, %c0_i32_1 : i32, i32, i32
  }
  func.func @transform_2(%arg0: i32) -> (i32, i32, i32, i32) {
    %c0_i32 = arith.constant 0 : i32
    %c0_i32_0 = arith.constant 0 : i32
    %c0_i32_1 = arith.constant 0 : i32
    %c0_i32_2 = arith.constant 0 : i32
    %c0_i32_3 = arith.constant 0 : i32
    return %c0_i32, %c0_i32_0, %c0_i32_1, %c0_i32_2 : i32, i32, i32, i32
  }
  func.func @transform_3(%arg0: i32) -> (i32, i32, i32, i32) {
    %c0_i32 = arith.constant 0 : i32
    %c0_i32_0 = arith.constant 0 : i32
    %c0_i32_1 = arith.constant 0 : i32
    %c0_i32_2 = arith.constant 0 : i32
    %c0_i32_3 = arith.constant 0 : i32
    return %c0_i32, %c0_i32_0, %c0_i32_1, %c0_i32_2 : i32, i32, i32, i32
  }
  func.func @transform_4(%arg0: i32) -> (i32, i32) {
    %c0_i32 = arith.constant 0 : i32
    %c0_i32_0 = arith.constant 0 : i32
    %c0_i32_1 = arith.constant 0 : i32
    return %c0_i32, %c0_i32_0 : i32, i32
  }
  func.func @transform_5(%arg0: i32) -> (i32, i32, i32) {
    %c0_i32 = arith.constant 0 : i32
    %c0_i32_0 = arith.constant 0 : i32
    %c0_i32_1 = arith.constant 0 : i32
    %c0_i32_2 = arith.constant 0 : i32
    return %c0_i32, %c0_i32_0, %c0_i32_1 : i32, i32, i32
  }
  func.func @transform_6(%arg0: i32) -> (i32, i32) {
    %c0_i32 = arith.constant 0 : i32
    %c0_i32_0 = arith.constant 0 : i32
    return %arg0, %c0_i32 : i32, i32
  }
}

</mosaic_0001>

<llo_original>
// kernel: tpu_custom_call.1
$region0: #{tpu_custom_call.1}
  #allocation0 [shape = 'u32[]', space=smem, size = 0x4, offset = 0x4, fixed_abs, tag = 'smem constant byte address 0x4 - core index']
  #allocation1 [shape = 'u32[144,128]{1,0:T(1,128)}', space=vmem, size = 0x12000, scoped, tag = 'internal scratch']
  %s0 = inlined_call_operand.vmem [shape: f32[1024,8], index: 0, kind: input, shape index: {}]
  %s1 = inlined_call_operand.vmem [shape: f32[2,8,128], index: 1, kind: input, shape index: {}]
  %s2 = inlined_call_operand.vmem [shape: f32[2,1,128,128], index: 2, kind: input, shape index: {}]
  %s3 = inlined_call_operand.vmem [shape: f32[2,1,1,128], index: 3, kind: input, shape index: {}]
  %s4 = inlined_call_operand.vmem [shape: f32[3,128], index: 4, kind: input, shape index: {}]
  %s5 = inlined_call_operand.vmem [shape: f32[2,128,128], index: 5, kind: input, shape index: {}]
  %s6 = inlined_call_operand.hbm [shape: f32[1024,128], index: 6, kind: output, shape index: {}]
  %s7 = sld [smem:[#allocation0]]
  $region57: #{tpu_custom_call.1} parent=0
    _
  %s9 = ssub.s32 1, %s7
  %s10 = scalar_select 0, %s9, %s7
  $region1: #{tpu_custom_call.1} parent=0
    #allocation2 [shape = 'u8[524288]{0}', space=vmem, size = 0x80000, scoped, tag = 'output window, operand 0']
    #allocation3 [shape = 's32[2]{0}', space=sflag, size = 0x8, scoped, tag = 'scoped memory for tpu_custom_call.1']
    %11 = vsyncpa [#allocation3], 0
    %s12 = scalar_lea.sflag [#allocation3], 1
    %13 = vsyncpa %s12, 0
    loop: start=0, step=1, limit=4
    $region2: #{tpu_custom_call.1} parent=1 // loop_pre_header
      _
    $region3: #{tpu_custom_call.1} parent=1 // loop_header
      %s15 = sphi 0, %s19
      %p16 = scmp.ge.s32.totalorder %s15, 4
      %s25 = sphi 0, %s27
      %s28 = sphi 0, %s25
      %s29 = sphi 0, %s28
      %s45 = sphi 0, %s29
      %s49 = sphi 0, %s49
      %s51 = sphi 0, %s49
      %s52 = sphi 0, %s51
      %s66 = sphi 0, %s52
      %s70 = sphi 0, %s70
      %s72 = sphi 0, %s70
      %s73 = sphi 0, %s72
      %s87 = sphi 0, %s73
      %s91 = sphi 0, %s91
      %s93 = sphi 0, %s91
      %s94 = sphi 0, %s93
      %s108 = sphi 0, %s94
      %s112 = sphi 0, %s112
      %s114 = sphi 0, %s112
      %s115 = sphi 0, %s114
      %s129 = sphi 0, %s115
      %s133 = sphi 0, %s133
      %s135 = sphi 0, %s133
      %s136 = sphi 0, %s135
      %s150 = sphi 0, %s136
      %s156 = sphi 0, %s158
      %s159 = sphi 0, %s156
      %s160 = sphi 0, %s159
      %s176 = sphi 0, %s160
    $region4: #{tpu_custom_call.1} parent=1 // loop_header_branch
      %18 = sbr.rel (%p16) target = $region8
    $region5: #{tpu_custom_call.1} parent=1 // loop_body
      %s20 = ssub.s32 %s15, 1
      %s21 = ssub.s32 %s15, 2
      %s22 = sadd.s32 %s15, 1
      %s23 = ssub.s32 %s15, %s22
      %p24 = scmp.eq.s32.totalorder %s23, 0
      %s26 = sadd.s32 %s25, 1
      %s27 = scalar_select %p24, %s25, %s26
      %p30 = pneg %p24
      %p31 = scmp.eq.s32.totalorder %s15, 1
      %p32 = por %p30, %p31
      %p33 = scmp.ne.s32.totalorder %s25, %s28
      %p34 = scmp.eq.s32.totalorder %s15, 0
      %p35 = por %p33, %p34
      %p36 = scmp.ne.s32.totalorder %s25, %s28
      %p37 = scmp.eq.s32.totalorder %s20, 1
      %p38 = por %p36, %p37
      %p39 = scmp.ne.s32.totalorder %s28, %s29
      %p40 = scmp.eq.s32.totalorder %s20, 0
      %p41 = por %p39, %p40
      %p42 = scmp.ne.s32.totalorder %s28, %s29
      %p43 = scmp.eq.s32.totalorder %s21, 1
      %p44 = por %p42, %p43
      %p46 = scmp.ne.s32.totalorder %s29, %s45
      %p47 = scmp.eq.s32.totalorder %s21, 0
      %p48 = por %p46, %p47
      %s50 = sadd.s32 %s49, 1
      %p53 = scmp.eq.s32.totalorder %s15, 1
      %p54 = scmp.ne.s32.totalorder %s49, %s51
      %p55 = scmp.eq.s32.totalorder %s15, 0
      %p56 = por %p54, %p55
      %p57 = scmp.ne.s32.totalorder %s49, %s51
      %p58 = scmp.eq.s32.totalorder %s20, 1
      %p59 = por %p57, %p58
      %p60 = scmp.ne.s32.totalorder %s51, %s52
      %p61 = scmp.eq.s32.totalorder %s20, 0
      %p62 = por %p60, %p61
      %p63 = scmp.ne.s32.totalorder %s51, %s52
      %p64 = scmp.eq.s32.totalorder %s21, 1
      %p65 = por %p63, %p64
      %p67 = scmp.ne.s32.totalorder %s52, %s66
      %p68 = scmp.eq.s32.totalorder %s21, 0
      %p69 = por %p67, %p68
      %s71 = sadd.s32 %s70, 1
      %p74 = scmp.eq.s32.totalorder %s15, 1
      %p75 = scmp.ne.s32.totalorder %s70, %s72
      %p76 = scmp.eq.s32.totalorder %s15, 0
      %p77 = por %p75, %p76
      %p78 = scmp.ne.s32.totalorder %s70, %s72
      %p79 = scmp.eq.s32.totalorder %s20, 1
      %p80 = por %p78, %p79
      %p81 = scmp.ne.s32.totalorder %s72, %s73
      %p82 = scmp.eq.s32.totalorder %s20, 0
      %p83 = por %p81, %p82
      %p84 = scmp.ne.s32.totalorder %s72, %s73
      %p85 = scmp.eq.s32.totalorder %s21, 1
      %p86 = por %p84, %p85
      %p88 = scmp.ne.s32.totalorder %s73, %s87
      %p89 = scmp.eq.s32.totalorder %s21, 0
      %p90 = por %p88, %p89
      %s92 = sadd.s32 %s91, 1
      %p95 = scmp.eq.s32.totalorder %s15, 1
      %p96 = scmp.ne.s32.totalorder %s91, %s93
      %p97 = scmp.eq.s32.totalorder %s15, 0
      %p98 = por %p96, %p97
      %p99 = scmp.ne.s32.totalorder %s91, %s93
      %p100 = scmp.eq.s32.totalorder %s20, 1
      %p101 = por %p99, %p100
      %p102 = scmp.ne.s32.totalorder %s93, %s94
      %p103 = scmp.eq.s32.totalorder %s20, 0
      %p104 = por %p102, %p103
      %p105 = scmp.ne.s32.totalorder %s93, %s94
      %p106 = scmp.eq.s32.totalorder %s21, 1
      %p107 = por %p105, %p106
      %p109 = scmp.ne.s32.totalorder %s94, %s108
      %p110 = scmp.eq.s32.totalorder %s21, 0
      %p111 = por %p109, %p110
      %s113 = sadd.s32 %s112, 1
      %p116 = scmp.eq.s32.totalorder %s15, 1
      %p117 = scmp.ne.s32.totalorder %s112, %s114
      %p118 = scmp.eq.s32.totalorder %s15, 0
      %p119 = por %p117, %p118
      %p120 = scmp.ne.s32.totalorder %s112, %s114
      %p121 = scmp.eq.s32.totalorder %s20, 1
      %p122 = por %p120, %p121
      %p123 = scmp.ne.s32.totalorder %s114, %s115
      %p124 = scmp.eq.s32.totalorder %s20, 0
      %p125 = por %p123, %p124
      %p126 = scmp.ne.s32.totalorder %s114, %s115
      %p127 = scmp.eq.s32.totalorder %s21, 1
      %p128 = por %p126, %p127
      %p130 = scmp.ne.s32.totalorder %s115, %s129
      %p131 = scmp.eq.s32.totalorder %s21, 0
      %p132 = por %p130, %p131
      %s134 = sadd.s32 %s133, 1
      %p137 = scmp.eq.s32.totalorder %s15, 1
      %p138 = scmp.ne.s32.totalorder %s133, %s135
      %p139 = scmp.eq.s32.totalorder %s15, 0
      %p140 = por %p138, %p139
      %p141 = scmp.ne.s32.totalorder %s133, %s135
      %p142 = scmp.eq.s32.totalorder %s20, 1
      %p143 = por %p141, %p142
      %p144 = scmp.ne.s32.totalorder %s135, %s136
      %p145 = scmp.eq.s32.totalorder %s20, 0
      %p146 = por %p144, %p145
      %p147 = scmp.ne.s32.totalorder %s135, %s136
      %p148 = scmp.eq.s32.totalorder %s21, 1
      %p149 = por %p147, %p148
      %p151 = scmp.ne.s32.totalorder %s136, %s150
      %p152 = scmp.eq.s32.totalorder %s21, 0
      %p153 = por %p151, %p152
      %s154 = ssub.s32 %s15, %s22
      %p155 = scmp.eq.s32.totalorder %s154, 0
      %s157 = sadd.s32 %s156, 1
      %s158 = scalar_select %p155, %s156, %s157
      %p161 = pneg %p155
      %p162 = scmp.eq.s32.totalorder %s15, 1
      %p163 = por %p161, %p162
      %p164 = scmp.ne.s32.totalorder %s156, %s159
      %p165 = scmp.eq.s32.totalorder %s15, 0
      %p166 = por %p164, %p165
      %p167 = scmp.ne.s32.totalorder %s156, %s159
      %p168 = scmp.eq.s32.totalorder %s20, 1
      %p169 = por %p167, %p168
      %p170 = scmp.ne.s32.totalorder %s159, %s160
      %p171 = scmp.eq.s32.totalorder %s20, 0
      %p172 = por %p170, %p171
      %p173 = scmp.ne.s32.totalorder %s159, %s160
      %p174 = scmp.eq.s32.totalorder %s21, 1
      %p175 = por %p173, %p174
      %p177 = scmp.ne.s32.totalorder %s160, %s176
      %p178 = scmp.eq.s32.totalorder %s21, 0
      %p179 = por %p177, %p178
      %p180 = scmp.le.s32.totalorder 1, %s15
      %p181 = scmp.lt.s32.totalorder %s15, 3
      %p182 = pnand %p180, %p181
      %p183 = pneg %p182
      // Predicated region
      $region9: #{tpu_custom_call.1} parent=5 // pred_check
        _
      $region10: #{tpu_custom_call.1} parent=5 // pred_check_branch
        %185 = sbr.rel (%p182) target = $region12
      $region11: #{tpu_custom_call.1} parent=5 // pred_region
        %s186 = ssub.s32 %s15, 1
        // Predicated region
        $region13: #{tpu_custom_call.1} parent=11 // pred_check
          %p187 = pneg %p62
        $region14: #{tpu_custom_call.1} parent=11 // pred_check_branch
          %189 = sbr.rel (%p187) target = $region16
        $region15: #{tpu_custom_call.1} parent=11 // pred_region
          _
        $region16: #{tpu_custom_call.1} parent=11 // pred_fallthru
          _
        // Predicated region
        $region17: #{tpu_custom_call.1} parent=11 // pred_check
          %p190 = pneg %p83
        $region18: #{tpu_custom_call.1} parent=11 // pred_check_branch
          %192 = sbr.rel (%p190) target = $region20
        $region19: #{tpu_custom_call.1} parent=11 // pred_region
          _
        $region20: #{tpu_custom_call.1} parent=11 // pred_fallthru
          _
        // Predicated region
        $region21: #{tpu_custom_call.1} parent=11 // pred_check
          %p193 = pneg %p104
        $region22: #{tpu_custom_call.1} parent=11 // pred_check_branch
          %195 = sbr.rel (%p193) target = $region24
        $region23: #{tpu_custom_call.1} parent=11 // pred_region
          _
        $region24: #{tpu_custom_call.1} parent=11 // pred_fallthru
          _
        // Predicated region
        $region25: #{tpu_custom_call.1} parent=11 // pred_check
          %p196 = pneg %p125
        $region26: #{tpu_custom_call.1} parent=11 // pred_check_branch
          %198 = sbr.rel (%p196) target = $region28
        $region27: #{tpu_custom_call.1} parent=11 // pred_region
          _
        $region28: #{tpu_custom_call.1} parent=11 // pred_fallthru
          _
        // Predicated region
        $region29: #{tpu_custom_call.1} parent=11 // pred_check
          %p199 = pneg %p146
        $region30: #{tpu_custom_call.1} parent=11 // pred_check_branch
          %201 = sbr.rel (%p199) target = $region32
        $region31: #{tpu_custom_call.1} parent=11 // pred_region
          _
        $region32: #{tpu_custom_call.1} parent=11 // pred_fallthru
          _
      $region12: #{tpu_custom_call.1} parent=5 // pred_fallthru
        _
      %p202 = scmp.lt.s32.totalorder %s15, 2
      // Predicated region
      $region33: #{tpu_custom_call.1} parent=5 // pred_check
        %p203 = pneg %p202
      $region34: #{tpu_custom_call.1} parent=5 // pred_check_branch
        %205 = sbr.rel (%p203) target = $region36
      $region35: #{tpu_custom_call.1} parent=5 // pred_region
        // Predicated region
        $region37: #{tpu_custom_call.1} parent=35 // pred_check
          %p206 = pneg %p35
        $region38: #{tpu_custom_call.1} parent=35 // pred_check_branch
          %208 = sbr.rel (%p206) target = $region40
        $region39: #{tpu_custom_call.1} parent=35 // pred_region
          %s209 = smul.u32 64, %s15
          %p210 = scmp.lt.s32.totalorder %s209, 127
          %s211 = scalar_select %p210, %s209, 127
          %s212 = smul.addr %s211, 8
          %s213 = scalar_lea.vmem %s0, %s212
          %s214 = smul.u32 64, %s15
        $region40: #{tpu_custom_call.1} parent=35 // pred_fallthru
          _
      $region36: #{tpu_custom_call.1} parent=5 // pred_fallthru
        _
      %p215 = scmp.le.s32.totalorder 1, %s15
      %p216 = scmp.lt.s32.totalorder %s15, 3
      %p217 = pnand %p215, %p216
      %p218 = pneg %p217
      // Predicated region
      $region41: #{tpu_custom_call.1} parent=5 // pred_check
        _
      $region42: #{tpu_custom_call.1} parent=5 // pred_check_branch
        %220 = sbr.rel (%p217) target = $region44
      $region43: #{tpu_custom_call.1} parent=5 // pred_region
        %s221 = ssub.s32 %s15, 1
        %s222 = smul.u32 64, %s20
        %p223 = scmp.lt.s32.totalorder %s222, 127
        %s224 = scalar_select %p223, %s222, 127
        %s225 = smul.addr %s224, 8
        %s226 = scalar_lea.vmem %s0, %s225
        %p227 = pneg %p41
        %p228 = pneg %p38
        %p229 = pneg %p62
        %p230 = pneg %p59
        %p231 = pneg %p83
        %p232 = pneg %p80
        %p233 = pneg %p104
        %p234 = pneg %p101
        %p235 = pneg %p125
        %p236 = pneg %p122
        %p237 = pneg %p146
        %p238 = pneg %p143
        %p239 = pneg %p172
        %p240 = pneg %p169
        %s241 = sand.u32 %s159, 1
        %s242 = scalar_lea.sflag [#allocation3], %s241
        %s243 = sand.u32 %s159, 1
        %s244 = smul.addr %s243, 512
        %s245 = scalar_lea.vmem [#allocation2], %s244
        %s246 = smul.u32 64, %s20
        %p247 = scmp.lt.s32.totalorder %s246, 127
        %s248 = scalar_select %p247, %s246, 127
        %s249 = smul.addr %s248, 8
        %s250 = scalar_lea.vmem %s0, %s249
        %s251 = smul.u32 64, %s20
        %s252 = smul.u32 64, %s20
        %v253 = vld [vmem:[%s250] sm:$0xff]
        %v254 = vld [vmem:[%s250 + $0x8] sm:$0xff]
        %v255 = vld [vmem:[%s250 + $0x10] sm:$0xff]
        %v256 = vld [vmem:[%s250 + $0x18] sm:$0xff]
        %v257 = vld [vmem:[%s250 + $0x20] sm:$0xff]
        %v258 = vld [vmem:[%s250 + $0x28] sm:$0xff]
        %v259 = vld [vmem:[%s250 + $0x30] sm:$0xff]
        %v260 = vld [vmem:[%s250 + $0x38] sm:$0xff]
        %v261 = vld [vmem:[%s250 + $0x40] sm:$0xff]
        %v262 = vld [vmem:[%s250 + $0x48] sm:$0xff]
        %v263 = vld [vmem:[%s250 + $0x50] sm:$0xff]
        %v264 = vld [vmem:[%s250 + $0x58] sm:$0xff]
        %v265 = vld [vmem:[%s250 + $0x60] sm:$0xff]
        %v266 = vld [vmem:[%s250 + $0x68] sm:$0xff]
        %v267 = vld [vmem:[%s250 + $0x70] sm:$0xff]
        %v268 = vld [vmem:[%s250 + $0x78] sm:$0xff]
        %v269 = vld [vmem:[%s250 + $0x80] sm:$0xff]
        %v270 = vld [vmem:[%s250 + $0x88] sm:$0xff]
        %v271 = vld [vmem:[%s250 + $0x90] sm:$0xff]
        %v272 = vld [vmem:[%s250 + $0x98] sm:$0xff]
        %v273 = vld [vmem:[%s250 + $0xa0] sm:$0xff]
        %v274 = vld [vmem:[%s250 + $0xa8] sm:$0xff]
        %v275 = vld [vmem:[%s250 + $0xb0] sm:$0xff]
        %v276 = vld [vmem:[%s250 + $0xb8] sm:$0xff]
        %v277 = vld [vmem:[%s250 + $0xc0] sm:$0xff]
        %v278 = vld [vmem:[%s250 + $0xc8] sm:$0xff]
        %v279 = vld [vmem:[%s250 + $0xd0] sm:$0xff]
        %v280 = vld [vmem:[%s250 + $0xd8] sm:$0xff]
        %v281 = vld [vmem:[%s250 + $0xe0] sm:$0xff]
        %v282 = vld [vmem:[%s250 + $0xe8] sm:$0xff]
        %v283 = vld [vmem:[%s250 + $0xf0] sm:$0xff]
        %v284 = vld [vmem:[%s250 + $0xf8] sm:$0xff]
        %v285 = vld [vmem:[%s250 + $0x100] sm:$0xff]
        %v286 = vld [vmem:[%s250 + $0x108] sm:$0xff]
        %v287 = vld [vmem:[%s250 + $0x110] sm:$0xff]
        %v288 = vld [vmem:[%s250 + $0x118] sm:$0xff]
        %v289 = vld [vmem:[%s250 + $0x120] sm:$0xff]
        %v290 = vld [vmem:[%s250 + $0x128] sm:$0xff]
        %v291 = vld [vmem:[%s250 + $0x130] sm:$0xff]
        %v292 = vld [vmem:[%s250 + $0x138] sm:$0xff]
        %v293 = vld [vmem:[%s250 + $0x140] sm:$0xff]
        %v294 = vld [vmem:[%s250 + $0x148] sm:$0xff]
        %v295 = vld [vmem:[%s250 + $0x150] sm:$0xff]
        %v296 = vld [vmem:[%s250 + $0x158] sm:$0xff]
        %v297 = vld [vmem:[%s250 + $0x160] sm:$0xff]
        %v298 = vld [vmem:[%s250 + $0x168] sm:$0xff]
        %v299 = vld [vmem:[%s250 + $0x170] sm:$0xff]
        %v300 = vld [vmem:[%s250 + $0x178] sm:$0xff]
        %v301 = vld [vmem:[%s250 + $0x180] sm:$0xff]
        %v302 = vld [vmem:[%s250 + $0x188] sm:$0xff]
        %v303 = vld [vmem:[%s250 + $0x190] sm:$0xff]
        %v304 = vld [vmem:[%s250 + $0x198] sm:$0xff]
        %v305 = vld [vmem:[%s250 + $0x1a0] sm:$0xff]
        %v306 = vld [vmem:[%s250 + $0x1a8] sm:$0xff]
        %v307 = vld [vmem:[%s250 + $0x1b0] sm:$0xff]
        %v308 = vld [vmem:[%s250 + $0x1b8] sm:$0xff]
        %v309 = vld [vmem:[%s250 + $0x1c0] sm:$0xff]
        %v310 = vld [vmem:[%s250 + $0x1c8] sm:$0xff]
        %v311 = vld [vmem:[%s250 + $0x1d0] sm:$0xff]
        %v312 = vld [vmem:[%s250 + $0x1d8] sm:$0xff]
        %v313 = vld [vmem:[%s250 + $0x1e0] sm:$0xff]
        %v314 = vld [vmem:[%s250 + $0x1e8] sm:$0xff]
        %v315 = vld [vmem:[%s250 + $0x1f0] sm:$0xff]
        %v316 = vld [vmem:[%s250 + $0x1f8] sm:$0xff]
        %v317 = vld [vmem:[%s4] sm:$0x7]
        %v318 = vld [vmem:[%s1] sm:$0xff]
        %vm319 = vcmask 64512
        %v321 = vsel %vm319, %v253, 0
        %v324 = vsel %vm319, %v254, 0
        %v327 = vsel %vm319, %v255, 0
        %v330 = vsel %vm319, %v256, 0
        %v333 = vsel %vm319, %v257, 0
        %v336 = vsel %vm319, %v258, 0
        %v339 = vsel %vm319, %v259, 0
        %v342 = vsel %vm319, %v260, 0
        %v345 = vsel %vm319, %v261, 0
        %v348 = vsel %vm319, %v262, 0
        %v351 = vsel %vm319, %v263, 0
        %v354 = vsel %vm319, %v264, 0
        %v357 = vsel %vm319, %v265, 0
        %v360 = vsel %vm319, %v266, 0
        %v363 = vsel %vm319, %v267, 0
        %v366 = vsel %vm319, %v268, 0
        %v369 = vsel %vm319, %v269, 0
        %v372 = vsel %vm319, %v270, 0
        %v375 = vsel %vm319, %v271, 0
        %v378 = vsel %vm319, %v272, 0
        %v381 = vsel %vm319, %v273, 0
        %v384 = vsel %vm319, %v274, 0
        %v387 = vsel %vm319, %v275, 0
        %v390 = vsel %vm319, %v276, 0
        %v393 = vsel %vm319, %v277, 0
        %v396 = vsel %vm319, %v278, 0
        %v399 = vsel %vm319, %v279, 0
        %v402 = vsel %vm319, %v280, 0
        %v405 = vsel %vm319, %v281, 0
        %v408 = vsel %vm319, %v282, 0
        %v411 = vsel %vm319, %v283, 0
        %v414 = vsel %vm319, %v284, 0
        %v417 = vsel %vm319, %v285, 0
        %v420 = vsel %vm319, %v286, 0
        %v423 = vsel %vm319, %v287, 0
        %v426 = vsel %vm319, %v288, 0
        %v429 = vsel %vm319, %v289, 0
        %v432 = vsel %vm319, %v290, 0
        %v435 = vsel %vm319, %v291, 0
        %v438 = vsel %vm319, %v292, 0
        %v441 = vsel %vm319, %v293, 0
        %v444 = vsel %vm319, %v294, 0
        %v447 = vsel %vm319, %v295, 0
        %v450 = vsel %vm319, %v296, 0
        %v453 = vsel %vm319, %v297, 0
        %v456 = vsel %vm319, %v298, 0
        %v459 = vsel %vm319, %v299, 0
        %v462 = vsel %vm319, %v300, 0
        %v465 = vsel %vm319, %v301, 0
        %v468 = vsel %vm319, %v302, 0
        %v471 = vsel %vm319, %v303, 0
        %v474 = vsel %vm319, %v304, 0
        %v477 = vsel %vm319, %v305, 0
        %v480 = vsel %vm319, %v306, 0
        %v483 = vsel %vm319, %v307, 0
        %v486 = vsel %vm319, %v308, 0
        %v489 = vsel %vm319, %v309, 0
        %v492 = vsel %vm319, %v310, 0
        %v495 = vsel %vm319, %v311, 0
        %v498 = vsel %vm319, %v312, 0
        %v501 = vsel %vm319, %v313, 0
        %v504 = vsel %vm319, %v314, 0
        %v507 = vsel %vm319, %v315, 0
        %v510 = vsel %vm319, %v316, 0
        %512 = vmatprep.subr.mxu0 0.0
        %513 = vmatpush1.msra.mxu0 %v318
        %514 = vmatprep.subr.mxu0 0.0
        %515 = vmatpush1.msra.mxu0 0.0
        %516 = vmatprep.subr.mxu0 0.0
        %517 = vmatpush1.msra.mxu0 0.0
        %518 = vmatprep.subr.mxu0 0.0
        %519 = vmatpush1.msra.mxu0 0.0
        %520 = vmatprep.subr.mxu0 0.0
        %521 = vmatpush1.msra.mxu0 0.0
        %522 = vmatprep.subr.mxu0 0.0
        %523 = vmatpush1.msra.mxu0 0.0
        %524 = vmatprep.subr.mxu0 0.0
        %525 = vmatpush1.msra.mxu0 0.0
        %526 = vmatprep.subr.mxu0 0.0
        %527 = vmatpush1.msra.mxu0 0.0
        %528 = vmatprep.subr.mxu0 0.0
        %529 = vmatpush1.msra.mxu0 0.0
        %530 = vmatprep.subr.mxu0 0.0
        %531 = vmatpush1.msra.mxu0 0.0
        %532 = vmatprep.subr.mxu0 0.0
        %533 = vmatpush1.msra.mxu0 0.0
        %534 = vmatprep.subr.mxu0 0.0
        %535 = vmatpush1.msra.mxu0 0.0
        %536 = vmatprep.subr.mxu0 0.0
        %537 = vmatpush1.msra.mxu0 0.0
        %538 = vmatprep.subr.mxu0 0.0
        %539 = vmatpush1.msra.mxu0 0.0
        %540 = vmatprep.subr.mxu0 0.0
        %541 = vmatpush1.msra.mxu0 0.0
        %542 = vmatprep.subr.mxu0 0.0
        %543 = vmatpush1.msra.mxu0 0.0
        %544 = vmatprep.subr.mxu0 0.0
        %545 = vmatpush1.msra.mxu0 0.0
        %546 = vmatprep.subr.mxu0 0.0
        %547 = vmatpush1.msra.mxu0 0.0
        %548 = vmatprep.subr.mxu0 0.0
        %549 = vmatpush1.msra.mxu0 0.0
        %550 = vmatprep.subr.mxu0 0.0
        %551 = vmatpush1.msra.mxu0 0.0
        %552 = vmatprep.subr.mxu0 0.0
        %553 = vmatpush1.msra.mxu0 0.0
        %554 = vmatprep.subr.mxu0 0.0
        %555 = vmatpush1.msra.mxu0 0.0
        %556 = vmatprep.subr.mxu0 0.0
        %557 = vmatpush1.msra.mxu0 0.0
        %558 = vmatprep.subr.mxu0 0.0
        %559 = vmatpush1.msra.mxu0 0.0
        %560 = vmatprep.subr.mxu0 0.0
        %561 = vmatpush1.msra.mxu0 0.0
        %562 = vmatprep.subr.mxu0 0.0
        %563 = vmatpush1.msra.mxu0 0.0
        %564 = vmatprep.subr.mxu0 0.0
        %565 = vmatpush1.msra.mxu0 0.0
        %566 = vmatprep.subr.mxu0 0.0
        %567 = vmatpush1.msra.mxu0 0.0
        %568 = vmatprep.subr.mxu0 0.0
        %569 = vmatpush1.msra.mxu0 0.0
        %570 = vmatprep.subr.mxu0 0.0
        %571 = vmatpush1.msra.mxu0 0.0
        %572 = vmatprep.subr.mxu0 0.0
        %573 = vmatpush1.msra.mxu0 0.0
        %574 = vmatprep.subr.mxu0 0.0
        %575 = vmatpush1.msra.mxu0 0.0
        %576 = vmatprep.mubr.f32.mxu0 0.0
        %577 = vmatmul.mubr.f32.gmra.mrb[0].mxu0 %v321
        %v578 = vpop.f32.mrb[0].mxu0
        %v579 = vadd.f32 0.0, %v578
        %v580 = vpop.f32.mrb[0].mxu0
        %581 = vmatprep.mubr.f32.mxu0 0.0
        %582 = vmatmul.mubr.f32.gmra.mrb[0].mxu0 %v324
        %v583 = vpop.f32.mrb[0].mxu0
        %v584 = vadd.f32 0.0, %v583
        %v585 = vpop.f32.mrb[0].mxu0
        %586 = vmatprep.mubr.f32.mxu0 0.0
        %587 = vmatmul.mubr.f32.gmra.mrb[0].mxu0 %v327
        %v588 = vpop.f32.mrb[0].mxu0
        %v589 = vadd.f32 0.0, %v588
        %v590 = vpop.f32.mrb[0].mxu0
        %591 = vmatprep.mubr.f32.mxu0 0.0
        %592 = vmatmul.mubr.f32.gmra.mrb[0].mxu0 %v330
        %v593 = vpop.f32.mrb[0].mxu0
        %v594 = vadd.f32 0.0, %v593
        %v595 = vpop.f32.mrb[0].mxu0
        %596 = vmatprep.mubr.f32.mxu0 0.0
        %597 = vmatmul.mubr.f32.gmra.mrb[0].mxu0 %v333
        %v598 = vpop.f32.mrb[0].mxu0
        %v599 = vadd.f32 0.0, %v598
        %v600 = vpop.f32.mrb[0].mxu0
        %601 = vmatprep.mubr.f32.mxu0 0.0
        %602 = vmatmul.mubr.f32.gmra.mrb[0].mxu0 %v336
        %v603 = vpop.f32.mrb[0].mxu0
        %v604 = vadd.f32 0.0, %v603
        %v605 = vpop.f32.mrb[0].mxu0
        %606 = vmatprep.mubr.f32.mxu0 0.0
        %607 = vmatmul.mubr.f32.gmra.mrb[0].mxu0 %v339
        %v608 = vpop.f32.mrb[0].mxu0
        %v609 = vadd.f32 0.0, %v608
        %v610 = vpop.f32.mrb[0].mxu0
        %611 = vmatprep.mubr.f32.mxu0 0.0
        %612 = vmatmul.mubr.f32.gmra.mrb[0].mxu0 %v342
        %v613 = vpop.f32.mrb[0].mxu0
        %v614 = vadd.f32 0.0, %v613
        %v615 = vpop.f32.mrb[0].mxu0
        %616 = vmatprep.mubr.f32.mxu0 0.0
        %617 = vmatmul.mubr.f32.gmra.mrb[0].mxu0 %v345
        %v618 = vpop.f32.mrb[0].mxu0
        %v619 = vadd.f32 0.0, %v618
        %v620 = vpop.f32.mrb[0].mxu0
        %621 = vmatprep.mubr.f32.mxu0 0.0
        %622 = vmatmul.mubr.f32.gmra.mrb[0].mxu0 %v348
        %v623 = vpop.f32.mrb[0].mxu0
        %v624 = vadd.f32 0.0, %v623
        %v625 = vpop.f32.mrb[0].mxu0
        %626 = vmatprep.mubr.f32.mxu0 0.0
        %627 = vmatmul.mubr.f32.gmra.mrb[0].mxu0 %v351
        %v628 = vpop.f32.mrb[0].mxu0
        %v629 = vadd.f32 0.0, %v628
        %v630 = vpop.f32.mrb[0].mxu0
        %631 = vmatprep.mubr.f32.mxu0 0.0
        %632 = vmatmul.mubr.f32.gmra.mrb[0].mxu0 %v354
        %v633 = vpop.f32.mrb[0].mxu0
        %v634 = vadd.f32 0.0, %v633
        %v635 = vpop.f32.mrb[0].mxu0
        %636 = vmatprep.mubr.f32.mxu0 0.0
        %637 = vmatmul.mubr.f32.gmra.mrb[0].mxu0 %v357
        %v638 = vpop.f32.mrb[0].mxu0
        %v639 = vadd.f32 0.0, %v638
        %v640 = vpop.f32.mrb[0].mxu0
        %641 = vmatprep.mubr.f32.mxu0 0.0
        %642 = vmatmul.mubr.f32.gmra.mrb[0].mxu0 %v360
        %v643 = vpop.f32.mrb[0].mxu0
        %v644 = vadd.f32 0.0, %v643
        %v645 = vpop.f32.mrb[0].mxu0
        %646 = vmatprep.mubr.f32.mxu0 0.0
        %647 = vmatmul.mubr.f32.gmra.mrb[0].mxu0 %v363
        %v648 = vpop.f32.mrb[0].mxu0
        %v649 = vadd.f32 0.0, %v648
        %v650 = vpop.f32.mrb[0].mxu0
        %651 = vmatprep.mubr.f32.mxu0 0.0
        %652 = vmatmul.mubr.f32.gmra.mrb[0].mxu0 %v366
        %v653 = vpop.f32.mrb[0].mxu0
        %v654 = vadd.f32 0.0, %v653
        %v655 = vpop.f32.mrb[0].mxu0
        %656 = vmatprep.mubr.f32.mxu0 0.0
        %657 = vmatmul.mubr.f32.gmra.mrb[0].mxu0 %v369
        %v658 = vpop.f32.mrb[0].mxu0
        %v659 = vadd.f32 0.0, %v658
        %v660 = vpop.f32.mrb[0].mxu0
        %661 = vmatprep.mubr.f32.mxu0 0.0
        %662 = vmatmul.mubr.f32.gmra.mrb[0].mxu0 %v372
        %v663 = vpop.f32.mrb[0].mxu0
        %v664 = vadd.f32 0.0, %v663
        %v665 = vpop.f32.mrb[0].mxu0
        %666 = vmatprep.mubr.f32.mxu0 0.0
        %667 = vmatmul.mubr.f32.gmra.mrb[0].mxu0 %v375
        %v668 = vpop.f32.mrb[0].mxu0
        %v669 = vadd.f32 0.0, %v668
        %v670 = vpop.f32.mrb[0].mxu0
        %671 = vmatprep.mubr.f32.mxu0 0.0
        %672 = vmatmul.mubr.f32.gmra.mrb[0].mxu0 %v378
        %v673 = vpop.f32.mrb[0].mxu0
        %v674 = vadd.f32 0.0, %v673
        %v675 = vpop.f32.mrb[0].mxu0
        %676 = vmatprep.mubr.f32.mxu0 0.0
        %677 = vmatmul.mubr.f32.gmra.mrb[0].mxu0 %v381
        %v678 = vpop.f32.mrb[0].mxu0
        %v679 = vadd.f32 0.0, %v678
        %v680 = vpop.f32.mrb[0].mxu0
        %681 = vmatprep.mubr.f32.mxu0 0.0
        %682 = vmatmul.mubr.f32.gmra.mrb[0].mxu0 %v384
        %v683 = vpop.f32.mrb[0].mxu0
        %v684 = vadd.f32 0.0, %v683
        %v685 = vpop.f32.mrb[0].mxu0
        %686 = vmatprep.mubr.f32.mxu0 0.0
        %687 = vmatmul.mubr.f32.gmra.mrb[0].mxu0 %v387
        %v688 = vpop.f32.mrb[0].mxu0
        %v689 = vadd.f32 0.0, %v688
        %v690 = vpop.f32.mrb[0].mxu0
        %691 = vmatprep.mubr.f32.mxu0 0.0
        %692 = vmatmul.mubr.f32.gmra.mrb[0].mxu0 %v390
        %v693 = vpop.f32.mrb[0].mxu0
        %v694 = vadd.f32 0.0, %v693
        %v695 = vpop.f32.mrb[0].mxu0
        %696 = vmatprep.mubr.f32.mxu0 0.0
        %697 = vmatmul.mubr.f32.gmra.mrb[0].mxu0 %v393
        %v698 = vpop.f32.mrb[0].mxu0
        %v699 = vadd.f32 0.0, %v698
        %v700 = vpop.f32.mrb[0].mxu0
        %701 = vmatprep.mubr.f32.mxu0 0.0
        %702 = vmatmul.mubr.f32.gmra.mrb[0].mxu0 %v396
        %v703 = vpop.f32.mrb[0].mxu0
        %v704 = vadd.f32 0.0, %v703
        %v705 = vpop.f32.mrb[0].mxu0
        %706 = vmatprep.mubr.f32.mxu0 0.0
        %707 = vmatmul.mubr.f32.gmra.mrb[0].mxu0 %v399
        %v708 = vpop.f32.mrb[0].mxu0
        %v709 = vadd.f32 0.0, %v708
        %v710 = vpop.f32.mrb[0].mxu0
        %711 = vmatprep.mubr.f32.mxu0 0.0
        %712 = vmatmul.mubr.f32.gmra.mrb[0].mxu0 %v402
        %v713 = vpop.f32.mrb[0].mxu0
        %v714 = vadd.f32 0.0, %v713
        %v715 = vpop.f32.mrb[0].mxu0
        %716 = vmatprep.mubr.f32.mxu0 0.0
        %717 = vmatmul.mubr.f32.gmra.mrb[0].mxu0 %v405
        %v718 = vpop.f32.mrb[0].mxu0
        %v719 = vadd.f32 0.0, %v718
        %v720 = vpop.f32.mrb[0].mxu0
        %721 = vmatprep.mubr.f32.mxu0 0.0
        %722 = vmatmul.mubr.f32.gmra.mrb[0].mxu0 %v408
        %v723 = vpop.f32.mrb[0].mxu0
        %v724 = vadd.f32 0.0, %v723
        %v725 = vpop.f32.mrb[0].mxu0
        %726 = vmatprep.mubr.f32.mxu0 0.0
        %727 = vmatmul.mubr.f32.gmra.mrb[0].mxu0 %v411
        %v728 = vpop.f32.mrb[0].mxu0
        %v729 = vadd.f32 0.0, %v728
        %v730 = vpop.f32.mrb[0].mxu0
        %731 = vmatprep.mubr.f32.mxu0 0.0
        %732 = vmatmul.mubr.f32.gmra.mrb[0].mxu0 %v414
        %v733 = vpop.f32.mrb[0].mxu0
        %v734 = vadd.f32 0.0, %v733
        %v735 = vpop.f32.mrb[0].mxu0
        %736 = vmatprep.mubr.f32.mxu0 0.0
        %737 = vmatmul.mubr.f32.gmra.mrb[0].mxu0 %v417
        %v738 = vpop.f32.mrb[0].mxu0
        %v739 = vadd.f32 0.0, %v738
        %v740 = vpop.f32.mrb[0].mxu0
        %741 = vmatprep.mubr.f32.mxu0 0.0
        %742 = vmatmul.mubr.f32.gmra.mrb[0].mxu0 %v420
        %v743 = vpop.f32.mrb[0].mxu0
        %v744 = vadd.f32 0.0, %v743
        %v745 = vpop.f32.mrb[0].mxu0
        %746 = vmatprep.mubr.f32.mxu0 0.0
        %747 = vmatmul.mubr.f32.gmra.mrb[0].mxu0 %v423
        %v748 = vpop.f32.mrb[0].mxu0
        %v749 = vadd.f32 0.0, %v748
        %v750 = vpop.f32.mrb[0].mxu0
        %751 = vmatprep.mubr.f32.mxu0 0.0
        %752 = vmatmul.mubr.f32.gmra.mrb[0].mxu0 %v426
        %v753 = vpop.f32.mrb[0].mxu0
        %v754 = vadd.f32 0.0, %v753
        %v755 = vpop.f32.mrb[0].mxu0
        %756 = vmatprep.mubr.f32.mxu0 0.0
        %757 = vmatmul.mubr.f32.gmra.mrb[0].mxu0 %v429
        %v758 = vpop.f32.mrb[0].mxu0
        %v759 = vadd.f32 0.0, %v758
        %v760 = vpop.f32.mrb[0].mxu0
        %761 = vmatprep.mubr.f32.mxu0 0.0
        %762 = vmatmul.mubr.f32.gmra.mrb[0].mxu0 %v432
        %v763 = vpop.f32.mrb[0].mxu0
        %v764 = vadd.f32 0.0, %v763
        %v765 = vpop.f32.mrb[0].mxu0
        %766 = vmatprep.mubr.f32.mxu0 0.0
        %767 = vmatmul.mubr.f32.gmra.mrb[0].mxu0 %v435
        %v768 = vpop.f32.mrb[0].mxu0
        %v769 = vadd.f32 0.0, %v768
        %v770 = vpop.f32.mrb[0].mxu0
        %771 = vmatprep.mubr.f32.mxu0 0.0
        %772 = vmatmul.mubr.f32.gmra.mrb[0].mxu0 %v438
        %v773 = vpop.f32.mrb[0].mxu0
        %v774 = vadd.f32 0.0, %v773
        %v775 = vpop.f32.mrb[0].mxu0
        %776 = vmatprep.mubr.f32.mxu0 0.0
        %777 = vmatmul.mubr.f32.gmra.mrb[0].mxu0 %v441
        %v778 = vpop.f32.mrb[0].mxu0
        %v779 = vadd.f32 0.0, %v778
        %v780 = vpop.f32.mrb[0].mxu0
        %781 = vmatprep.mubr.f32.mxu0 0.0
        %782 = vmatmul.mubr.f32.gmra.mrb[0].mxu0 %v444
        %v783 = vpop.f32.mrb[0].mxu0
        %v784 = vadd.f32 0.0, %v783
        %v785 = vpop.f32.mrb[0].mxu0
        %786 = vmatprep.mubr.f32.mxu0 0.0
        %787 = vmatmul.mubr.f32.gmra.mrb[0].mxu0 %v447
        %v788 = vpop.f32.mrb[0].mxu0
        %v789 = vadd.f32 0.0, %v788
        %v790 = vpop.f32.mrb[0].mxu0
        %791 = vmatprep.mubr.f32.mxu0 0.0
        %792 = vmatmul.mubr.f32.gmra.mrb[0].mxu0 %v450
        %v793 = vpop.f32.mrb[0].mxu0
        %v794 = vadd.f32 0.0, %v793
        %v795 = vpop.f32.mrb[0].mxu0
        %796 = vmatprep.mubr.f32.mxu0 0.0
        %797 = vmatmul.mubr.f32.gmra.mrb[0].mxu0 %v453
        %v798 = vpop.f32.mrb[0].mxu0
        %v799 = vadd.f32 0.0, %v798
        %v800 = vpop.f32.mrb[0].mxu0
        %801 = vmatprep.mubr.f32.mxu0 0.0
        %802 = vmatmul.mubr.f32.gmra.mrb[0].mxu0 %v456
        %v803 = vpop.f32.mrb[0].mxu0
        %v804 = vadd.f32 0.0, %v803
        %v805 = vpop.f32.mrb[0].mxu0
        %806 = vmatprep.mubr.f32.mxu0 0.0
        %807 = vmatmul.mubr.f32.gmra.mrb[0].mxu0 %v459
        %v808 = vpop.f32.mrb[0].mxu0
        %v809 = vadd.f32 0.0, %v808
        %v810 = vpop.f32.mrb[0].mxu0
        %811 = vmatprep.mubr.f32.mxu0 0.0
        %812 = vmatmul.mubr.f32.gmra.mrb[0].mxu0 %v462
        %v813 = vpop.f32.mrb[0].mxu0
        %v814 = vadd.f32 0.0, %v813
        %v815 = vpop.f32.mrb[0].mxu0
        %816 = vmatprep.mubr.f32.mxu0 0.0
        %817 = vmatmul.mubr.f32.gmra.mrb[0].mxu0 %v465
        %v818 = vpop.f32.mrb[0].mxu0
        %v819 = vadd.f32 0.0, %v818
        %v820 = vpop.f32.mrb[0].mxu0
        %821 = vmatprep.mubr.f32.mxu0 0.0
        %822 = vmatmul.mubr.f32.gmra.mrb[0].mxu0 %v468
        %v823 = vpop.f32.mrb[0].mxu0
        %v824 = vadd.f32 0.0, %v823
        %v825 = vpop.f32.mrb[0].mxu0
        %826 = vmatprep.mubr.f32.mxu0 0.0
        %827 = vmatmul.mubr.f32.gmra.mrb[0].mxu0 %v471
        %v828 = vpop.f32.mrb[0].mxu0
        %v829 = vadd.f32 0.0, %v828
        %v830 = vpop.f32.mrb[0].mxu0
        %831 = vmatprep.mubr.f32.mxu0 0.0
        %832 = vmatmul.mubr.f32.gmra.mrb[0].mxu0 %v474
        %v833 = vpop.f32.mrb[0].mxu0
        %v834 = vadd.f32 0.0, %v833
        %v835 = vpop.f32.mrb[0].mxu0
        %836 = vmatprep.mubr.f32.mxu0 0.0
        %837 = vmatmul.mubr.f32.gmra.mrb[0].mxu0 %v477
        %v838 = vpop.f32.mrb[0].mxu0
        %v839 = vadd.f32 0.0, %v838
        %v840 = vpop.f32.mrb[0].mxu0
        %841 = vmatprep.mubr.f32.mxu0 0.0
        %842 = vmatmul.mubr.f32.gmra.mrb[0].mxu0 %v480
        %v843 = vpop.f32.mrb[0].mxu0
        %v844 = vadd.f32 0.0, %v843
        %v845 = vpop.f32.mrb[0].mxu0
        %846 = vmatprep.mubr.f32.mxu0 0.0
        %847 = vmatmul.mubr.f32.gmra.mrb[0].mxu0 %v483
        %v848 = vpop.f32.mrb[0].mxu0
        %v849 = vadd.f32 0.0, %v848
        %v850 = vpop.f32.mrb[0].mxu0
        %851 = vmatprep.mubr.f32.mxu0 0.0
        %852 = vmatmul.mubr.f32.gmra.mrb[0].mxu0 %v486
        %v853 = vpop.f32.mrb[0].mxu0
        %v854 = vadd.f32 0.0, %v853
        %v855 = vpop.f32.mrb[0].mxu0
        %856 = vmatprep.mubr.f32.mxu0 0.0
        %857 = vmatmul.mubr.f32.gmra.mrb[0].mxu0 %v489
        %v858 = vpop.f32.mrb[0].mxu0
        %v859 = vadd.f32 0.0, %v858
        %v860 = vpop.f32.mrb[0].mxu0
        %861 = vmatprep.mubr.f32.mxu0 0.0
        %862 = vmatmul.mubr.f32.gmra.mrb[0].mxu0 %v492
        %v863 = vpop.f32.mrb[0].mxu0
        %v864 = vadd.f32 0.0, %v863
        %v865 = vpop.f32.mrb[0].mxu0
        %866 = vmatprep.mubr.f32.mxu0 0.0
        %867 = vmatmul.mubr.f32.gmra.mrb[0].mxu0 %v495
        %v868 = vpop.f32.mrb[0].mxu0
        %v869 = vadd.f32 0.0, %v868
        %v870 = vpop.f32.mrb[0].mxu0
        %871 = vmatprep.mubr.f32.mxu0 0.0
        %872 = vmatmul.mubr.f32.gmra.mrb[0].mxu0 %v498
        %v873 = vpop.f32.mrb[0].mxu0
        %v874 = vadd.f32 0.0, %v873
        %v875 = vpop.f32.mrb[0].mxu0
        %876 = vmatprep.mubr.f32.mxu0 0.0
        %877 = vmatmul.mubr.f32.gmra.mrb[0].mxu0 %v501
        %v878 = vpop.f32.mrb[0].mxu0
        %v879 = vadd.f32 0.0, %v878
        %v880 = vpop.f32.mrb[0].mxu0
        %881 = vmatprep.mubr.f32.mxu0 0.0
        %882 = vmatmul.mubr.f32.gmra.mrb[0].mxu0 %v504
        %v883 = vpop.f32.mrb[0].mxu0
        %v884 = vadd.f32 0.0, %v883
        %v885 = vpop.f32.mrb[0].mxu0
        %886 = vmatprep.mubr.f32.mxu0 0.0
        %887 = vmatmul.mubr.f32.gmra.mrb[0].mxu0 %v507
        %v888 = vpop.f32.mrb[0].mxu0
        %v889 = vadd.f32 0.0, %v888
        %v890 = vpop.f32.mrb[0].mxu0
        %891 = vmatprep.mubr.f32.mxu0 0.0
        %892 = vmatmul.mubr.f32.gmra.mrb[0].mxu0 %v510
        %v893 = vpop.f32.mrb[0].mxu0
        %v894 = vadd.f32 0.0, %v893
        %v895 = vpop.f32.mrb[0].mxu0
        %896 = vdwg.mxu0
        %v897 = vmax.f32 %v579, 0.0
        %v898 = vmax.f32 %v584, 0.0
        %v899 = vmax.f32 %v589, 0.0
        %v900 = vmax.f32 %v594, 0.0
        %v901 = vmax.f32 %v599, 0.0
        %v902 = vmax.f32 %v604, 0.0
        %v903 = vmax.f32 %v609, 0.0
        %v904 = vmax.f32 %v614, 0.0
        %v905 = vmax.f32 %v619, 0.0
        %v906 = vmax.f32 %v624, 0.0
        %v907 = vmax.f32 %v629, 0.0
        %v908 = vmax.f32 %v634, 0.0
        %v909 = vmax.f32 %v639, 0.0
        %v910 = vmax.f32 %v644, 0.0
        %v911 = vmax.f32 %v649, 0.0
        %v912 = vmax.f32 %v654, 0.0
        %v913 = vmax.f32 %v659, 0.0
        %v914 = vmax.f32 %v664, 0.0
        %v915 = vmax.f32 %v669, 0.0
        %v916 = vmax.f32 %v674, 0.0
        %v917 = vmax.f32 %v679, 0.0
        %v918 = vmax.f32 %v684, 0.0
        %v919 = vmax.f32 %v689, 0.0
        %v920 = vmax.f32 %v694, 0.0
        %v921 = vmax.f32 %v699, 0.0
        %v922 = vmax.f32 %v704, 0.0
        %v923 = vmax.f32 %v709, 0.0
        %v924 = vmax.f32 %v714, 0.0
        %v925 = vmax.f32 %v719, 0.0
        %v926 = vmax.f32 %v724, 0.0
        %v927 = vmax.f32 %v729, 0.0
        %v928 = vmax.f32 %v734, 0.0
        %v929 = vmax.f32 %v739, 0.0
        %v930 = vmax.f32 %v744, 0.0
        %v931 = vmax.f32 %v749, 0.0
        %v932 = vmax.f32 %v754, 0.0
        %v933 = vmax.f32 %v759, 0.0
        %v934 = vmax.f32 %v764, 0.0
        %v935 = vmax.f32 %v769, 0.0
        %v936 = vmax.f32 %v774, 0.0
        %v937 = vmax.f32 %v779, 0.0
        %v938 = vmax.f32 %v784, 0.0
        %v939 = vmax.f32 %v789, 0.0
        %v940 = vmax.f32 %v794, 0.0
        %v941 = vmax.f32 %v799, 0.0
        %v942 = vmax.f32 %v804, 0.0
        %v943 = vmax.f32 %v809, 0.0
        %v944 = vmax.f32 %v814, 0.0
        %v945 = vmax.f32 %v819, 0.0
        %v946 = vmax.f32 %v824, 0.0
        %v947 = vmax.f32 %v829, 0.0
        %v948 = vmax.f32 %v834, 0.0
        %v949 = vmax.f32 %v839, 0.0
        %v950 = vmax.f32 %v844, 0.0
        %v951 = vmax.f32 %v849, 0.0
        %v952 = vmax.f32 %v854, 0.0
        %v953 = vmax.f32 %v859, 0.0
        %v954 = vmax.f32 %v864, 0.0
        %v955 = vmax.f32 %v869, 0.0
        %v956 = vmax.f32 %v874, 0.0
        %v957 = vmax.f32 %v879, 0.0
        %v958 = vmax.f32 %v884, 0.0
        %v959 = vmax.f32 %v889, 0.0
        %v960 = vmax.f32 %v894, 0.0
        %v961 = vld [vmem:[%s2] sm:$0xff]
        %v962 = vld [vmem:[%s2 + $0x8] sm:$0xff]
        %v963 = vld [vmem:[%s2 + $0x10] sm:$0xff]
        %v964 = vld [vmem:[%s2 + $0x18] sm:$0xff]
        %v965 = vld [vmem:[%s2 + $0x20] sm:$0xff]
        %v966 = vld [vmem:[%s2 + $0x28] sm:$0xff]
        %v967 = vld [vmem:[%s2 + $0x30] sm:$0xff]
        %v968 = vld [vmem:[%s2 + $0x38] sm:$0xff]
        %v969 = vld [vmem:[%s2 + $0x40] sm:$0xff]
        %v970 = vld [vmem:[%s2 + $0x48] sm:$0xff]
        %v971 = vld [vmem:[%s2 + $0x50] sm:$0xff]
        %v972 = vld [vmem:[%s2 + $0x58] sm:$0xff]
        %v973 = vld [vmem:[%s2 + $0x60] sm:$0xff]
        %v974 = vld [vmem:[%s2 + $0x68] sm:$0xff]
        %v975 = vld [vmem:[%s2 + $0x70] sm:$0xff]
        %v976 = vld [vmem:[%s2 + $0x78] sm:$0xff]
        %v977 = vld [vmem:[%s3] sm:$0x1]
        %v979 = vlaneseq
        %v980 = vshrl.u32 %v979, 7
        %v981 = vsub.s32 0, %v980
        %v982 = vrot.slane %v977, %v981
        %984 = vmatprep.subr.mxu0 0.0
        %985 = vmatpush1.msra.mxu0 %v961
        %986 = vmatprep.subr.mxu0 0.0
        %987 = vmatpush1.msra.mxu0 %v962
        %988 = vmatprep.subr.mxu0 0.0
        %989 = vmatpush1.msra.mxu0 %v963
        %990 = vmatprep.subr.mxu0 0.0
        %991 = vmatpush1.msra.mxu0 %v964
        %992 = vmatprep.subr.mxu0 0.0
        %993 = vmatpush1.msra.mxu0 %v965
        %994 = vmatprep.subr.mxu0 0.0
        %995 = vmatpush1.msra.mxu0 %v966
        %996 = vmatprep.subr.mxu0 0.0
        %997 = vmatpush1.msra.mxu0 %v967
        %998 = vmatprep.subr.mxu0 0.0
        %999 = vmatpush1.msra.mxu0 %v968
        %1000 = vmatprep.subr.mxu0 0.0
        %1001 = vmatpush1.msra.mxu0 %v969
        %1002 = vmatprep.subr.mxu0 0.0
        %1003 = vmatpush1.msra.mxu0 %v970
        %1004 = vmatprep.subr.mxu0 0.0
        %1005 = vmatpush1.msra.mxu0 %v971
        %1006 = vmatprep.subr.mxu0 0.0
        %1007 = vmatpush1.msra.mxu0 %v972
        %1008 = vmatprep.subr.mxu0 0.0
        %1009 = vmatpush1.msra.mxu0 %v973
        %1010 = vmatprep.subr.mxu0 0.0
        %1011 = vmatpush1.msra.mxu0 %v974
        %1012 = vmatprep.subr.mxu0 0.0
        %1013 = vmatpush1.msra.mxu0 %v975
        %1014 = vmatprep.subr.mxu0 0.0
        %1015 = vmatpush1.msra.mxu0 %v976
        %1016 = vmatprep.subr.mxu0 0.0
        %1017 = vmatpush1.msra.mxu0 0.0
        %1018 = vmatprep.subr.mxu0 0.0
        %1019 = vmatpush1.msra.mxu0 0.0
        %1020 = vmatprep.subr.mxu0 0.0
        %1021 = vmatpush1.msra.mxu0 0.0
        %1022 = vmatprep.subr.mxu0 0.0
        %1023 = vmatpush1.msra.mxu0 0.0
        %1024 = vmatprep.subr.mxu0 0.0
        %1025 = vmatpush1.msra.mxu0 0.0
        %1026 = vmatprep.subr.mxu0 0.0
        %1027 = vmatpush1.msra.mxu0 0.0
        %1028 = vmatprep.subr.mxu0 0.0
        %1029 = vmatpush1.msra.mxu0 0.0
        %1030 = vmatprep.subr.mxu0 0.0
        %1031 = vmatpush1.msra.mxu0 0.0
        %1032 = vmatprep.subr.mxu0 0.0
        %1033 = vmatpush1.msra.mxu0 0.0
        %1034 = vmatprep.subr.mxu0 0.0
        %1035 = vmatpush1.msra.mxu0 0.0
        %1036 = vmatprep.subr.mxu0 0.0
        %1037 = vmatpush1.msra.mxu0 0.0
        %1038 = vmatprep.subr.mxu0 0.0
        %1039 = vmatpush1.msra.mxu0 0.0
        %1040 = vmatprep.subr.mxu0 0.0
        %1041 = vmatpush1.msra.mxu0 0.0
        %1042 = vmatprep.subr.mxu0 0.0
        %1043 = vmatpush1.msra.mxu0 0.0
        %1044 = vmatprep.subr.mxu0 0.0
        %1045 = vmatpush1.msra.mxu0 0.0
        %1046 = vmatprep.subr.mxu0 0.0
        %1047 = vmatpush1.msra.mxu0 0.0
        %1048 = vmatprep.mubr.f32.mxu0 0.0
        %1049 = vmatmul.mubr.f32.gmra.mrb[0].mxu0 %v897
        %v1050 = vpop.f32.mrb[0].mxu0
        %v1051 = vadd.f32 %v982, %v1050
        %v1052 = vpop.f32.mrb[0].mxu0
        %1053 = vmatprep.mubr.f32.mxu0 0.0
        %1054 = vmatmul.mubr.f32.gmra.mrb[0].mxu0 %v898
        %v1055 = vpop.f32.mrb[0].mxu0
        %v1056 = vadd.f32 %v982, %v1055
        %v1057 = vpop.f32.mrb[0].mxu0
        %1058 = vmatprep.mubr.f32.mxu0 0.0
        %1059 = vmatmul.mubr.f32.gmra.mrb[0].mxu0 %v899
        %v1060 = vpop.f32.mrb[0].mxu0
        %v1061 = vadd.f32 %v982, %v1060
        %v1062 = vpop.f32.mrb[0].mxu0
        %1063 = vmatprep.mubr.f32.mxu0 0.0
        %1064 = vmatmul.mubr.f32.gmra.mrb[0].mxu0 %v900
        %v1065 = vpop.f32.mrb[0].mxu0
        %v1066 = vadd.f32 %v982, %v1065
        %v1067 = vpop.f32.mrb[0].mxu0
        %1068 = vmatprep.mubr.f32.mxu0 0.0
        %1069 = vmatmul.mubr.f32.gmra.mrb[0].mxu0 %v901
        %v1070 = vpop.f32.mrb[0].mxu0
        %v1071 = vadd.f32 %v982, %v1070
        %v1072 = vpop.f32.mrb[0].mxu0
        %1073 = vmatprep.mubr.f32.mxu0 0.0
        %1074 = vmatmul.mubr.f32.gmra.mrb[0].mxu0 %v902
        %v1075 = vpop.f32.mrb[0].mxu0
        %v1076 = vadd.f32 %v982, %v1075
        %v1077 = vpop.f32.mrb[0].mxu0
        %1078 = vmatprep.mubr.f32.mxu0 0.0
        %1079 = vmatmul.mubr.f32.gmra.mrb[0].mxu0 %v903
        %v1080 = vpop.f32.mrb[0].mxu0
        %v1081 = vadd.f32 %v982, %v1080
        %v1082 = vpop.f32.mrb[0].mxu0
        %1083 = vmatprep.mubr.f32.mxu0 0.0
        %1084 = vmatmul.mubr.f32.gmra.mrb[0].mxu0 %v904
        %v1085 = vpop.f32.mrb[0].mxu0
        %v1086 = vadd.f32 %v982, %v1085
        %v1087 = vpop.f32.mrb[0].mxu0
        %1088 = vmatprep.mubr.f32.mxu0 0.0
        %1089 = vmatmul.mubr.f32.gmra.mrb[0].mxu0 %v905
        %v1090 = vpop.f32.mrb[0].mxu0
        %v1091 = vadd.f32 %v982, %v1090
        %v1092 = vpop.f32.mrb[0].mxu0
        %1093 = vmatprep.mubr.f32.mxu0 0.0
        %1094 = vmatmul.mubr.f32.gmra.mrb[0].mxu0 %v906
        %v1095 = vpop.f32.mrb[0].mxu0
        %v1096 = vadd.f32 %v982, %v1095
        %v1097 = vpop.f32.mrb[0].mxu0
        %1098 = vmatprep.mubr.f32.mxu0 0.0
        %1099 = vmatmul.mubr.f32.gmra.mrb[0].mxu0 %v907
        %v1100 = vpop.f32.mrb[0].mxu0
        %v1101 = vadd.f32 %v982, %v1100
        %v1102 = vpop.f32.mrb[0].mxu0
        %1103 = vmatprep.mubr.f32.mxu0 0.0
        %1104 = vmatmul.mubr.f32.gmra.mrb[0].mxu0 %v908
        %v1105 = vpop.f32.mrb[0].mxu0
        %v1106 = vadd.f32 %v982, %v1105
        %v1107 = vpop.f32.mrb[0].mxu0
        %1108 = vmatprep.mubr.f32.mxu0 0.0
        %1109 = vmatmul.mubr.f32.gmra.mrb[0].mxu0 %v909
        %v1110 = vpop.f32.mrb[0].mxu0
        %v1111 = vadd.f32 %v982, %v1110
        %v1112 = vpop.f32.mrb[0].mxu0
        %1113 = vmatprep.mubr.f32.mxu0 0.0
        %1114 = vmatmul.mubr.f32.gmra.mrb[0].mxu0 %v910
        %v1115 = vpop.f32.mrb[0].mxu0
        %v1116 = vadd.f32 %v982, %v1115
        %v1117 = vpop.f32.mrb[0].mxu0
        %1118 = vmatprep.mubr.f32.mxu0 0.0
        %1119 = vmatmul.mubr.f32.gmra.mrb[0].mxu0 %v911
        %v1120 = vpop.f32.mrb[0].mxu0
        %v1121 = vadd.f32 %v982, %v1120
        %v1122 = vpop.f32.mrb[0].mxu0
        %1123 = vmatprep.mubr.f32.mxu0 0.0
        %1124 = vmatmul.mubr.f32.gmra.mrb[0].mxu0 %v912
        %v1125 = vpop.f32.mrb[0].mxu0
        %v1126 = vadd.f32 %v982, %v1125
        %v1127 = vpop.f32.mrb[0].mxu0
        %1128 = vmatprep.mubr.f32.mxu0 0.0
        %1129 = vmatmul.mubr.f32.gmra.mrb[0].mxu0 %v913
        %v1130 = vpop.f32.mrb[0].mxu0
        %v1131 = vadd.f32 %v982, %v1130
        %v1132 = vpop.f32.mrb[0].mxu0
        %1133 = vmatprep.mubr.f32.mxu0 0.0
        %1134 = vmatmul.mubr.f32.gmra.mrb[0].mxu0 %v914
        %v1135 = vpop.f32.mrb[0].mxu0
        %v1136 = vadd.f32 %v982, %v1135
        %v1137 = vpop.f32.mrb[0].mxu0
        %1138 = vmatprep.mubr.f32.mxu0 0.0
        %1139 = vmatmul.mubr.f32.gmra.mrb[0].mxu0 %v915
        %v1140 = vpop.f32.mrb[0].mxu0
        %v1141 = vadd.f32 %v982, %v1140
        %v1142 = vpop.f32.mrb[0].mxu0
        %1143 = vmatprep.mubr.f32.mxu0 0.0
        %1144 = vmatmul.mubr.f32.gmra.mrb[0].mxu0 %v916
        %v1145 = vpop.f32.mrb[0].mxu0
        %v1146 = vadd.f32 %v982, %v1145
        %v1147 = vpop.f32.mrb[0].mxu0
        %1148 = vmatprep.mubr.f32.mxu0 0.0
        %1149 = vmatmul.mubr.f32.gmra.mrb[0].mxu0 %v917
        %v1150 = vpop.f32.mrb[0].mxu0
        %v1151 = vadd.f32 %v982, %v1150
        %v1152 = vpop.f32.mrb[0].mxu0
        %1153 = vmatprep.mubr.f32.mxu0 0.0
        %1154 = vmatmul.mubr.f32.gmra.mrb[0].mxu0 %v918
        %v1155 = vpop.f32.mrb[0].mxu0
        %v1156 = vadd.f32 %v982, %v1155
        %v1157 = vpop.f32.mrb[0].mxu0
        %1158 = vmatprep.mubr.f32.mxu0 0.0
        %1159 = vmatmul.mubr.f32.gmra.mrb[0].mxu0 %v919
        %v1160 = vpop.f32.mrb[0].mxu0
        %v1161 = vadd.f32 %v982, %v1160
        %v1162 = vpop.f32.mrb[0].mxu0
        %1163 = vmatprep.mubr.f32.mxu0 0.0
        %1164 = vmatmul.mubr.f32.gmra.mrb[0].mxu0 %v920
        %v1165 = vpop.f32.mrb[0].mxu0
        %v1166 = vadd.f32 %v982, %v1165
        %v1167 = vpop.f32.mrb[0].mxu0
        %1168 = vmatprep.mubr.f32.mxu0 0.0
        %1169 = vmatmul.mubr.f32.gmra.mrb[0].mxu0 %v921
        %v1170 = vpop.f32.mrb[0].mxu0
        %v1171 = vadd.f32 %v982, %v1170
        %v1172 = vpop.f32.mrb[0].mxu0
        %1173 = vmatprep.mubr.f32.mxu0 0.0
        %1174 = vmatmul.mubr.f32.gmra.mrb[0].mxu0 %v922
        %v1175 = vpop.f32.mrb[0].mxu0
        %v1176 = vadd.f32 %v982, %v1175
        %v1177 = vpop.f32.mrb[0].mxu0
        %1178 = vmatprep.mubr.f32.mxu0 0.0
        %1179 = vmatmul.mubr.f32.gmra.mrb[0].mxu0 %v923
        %v1180 = vpop.f32.mrb[0].mxu0
        %v1181 = vadd.f32 %v982, %v1180
        %v1182 = vpop.f32.mrb[0].mxu0
        %1183 = vmatprep.mubr.f32.mxu0 0.0
        %1184 = vmatmul.mubr.f32.gmra.mrb[0].mxu0 %v924
        %v1185 = vpop.f32.mrb[0].mxu0
        %v1186 = vadd.f32 %v982, %v1185
        %v1187 = vpop.f32.mrb[0].mxu0
        %1188 = vmatprep.mubr.f32.mxu0 0.0
        %1189 = vmatmul.mubr.f32.gmra.mrb[0].mxu0 %v925
        %v1190 = vpop.f32.mrb[0].mxu0
        %v1191 = vadd.f32 %v982, %v1190
        %v1192 = vpop.f32.mrb[0].mxu0
        %1193 = vmatprep.mubr.f32.mxu0 0.0
        %1194 = vmatmul.mubr.f32.gmra.mrb[0].mxu0 %v926
        %v1195 = vpop.f32.mrb[0].mxu0
        %v1196 = vadd.f32 %v982, %v1195
        %v1197 = vpop.f32.mrb[0].mxu0
        %1198 = vmatprep.mubr.f32.mxu0 0.0
        %1199 = vmatmul.mubr.f32.gmra.mrb[0].mxu0 %v927
        %v1200 = vpop.f32.mrb[0].mxu0
        %v1201 = vadd.f32 %v982, %v1200
        %v1202 = vpop.f32.mrb[0].mxu0
        %1203 = vmatprep.mubr.f32.mxu0 0.0
        %1204 = vmatmul.mubr.f32.gmra.mrb[0].mxu0 %v928
        %v1205 = vpop.f32.mrb[0].mxu0
        %v1206 = vadd.f32 %v982, %v1205
        %v1207 = vpop.f32.mrb[0].mxu0
        %1208 = vmatprep.mubr.f32.mxu0 0.0
        %1209 = vmatmul.mubr.f32.gmra.mrb[0].mxu0 %v929
        %v1210 = vpop.f32.mrb[0].mxu0
        %v1211 = vadd.f32 %v982, %v1210
        %v1212 = vpop.f32.mrb[0].mxu0
        %1213 = vmatprep.mubr.f32.mxu0 0.0
        %1214 = vmatmul.mubr.f32.gmra.mrb[0].mxu0 %v930
        %v1215 = vpop.f32.mrb[0].mxu0
        %v1216 = vadd.f32 %v982, %v1215
        %v1217 = vpop.f32.mrb[0].mxu0
        %1218 = vmatprep.mubr.f32.mxu0 0.0
        %1219 = vmatmul.mubr.f32.gmra.mrb[0].mxu0 %v931
        %v1220 = vpop.f32.mrb[0].mxu0
        %v1221 = vadd.f32 %v982, %v1220
        %v1222 = vpop.f32.mrb[0].mxu0
        %1223 = vmatprep.mubr.f32.mxu0 0.0
        %1224 = vmatmul.mubr.f32.gmra.mrb[0].mxu0 %v932
        %v1225 = vpop.f32.mrb[0].mxu0
        %v1226 = vadd.f32 %v982, %v1225
        %v1227 = vpop.f32.mrb[0].mxu0
        %1228 = vmatprep.mubr.f32.mxu0 0.0
        %1229 = vmatmul.mubr.f32.gmra.mrb[0].mxu0 %v933
        %v1230 = vpop.f32.mrb[0].mxu0
        %v1231 = vadd.f32 %v982, %v1230
        %v1232 = vpop.f32.mrb[0].mxu0
        %1233 = vmatprep.mubr.f32.mxu0 0.0
        %1234 = vmatmul.mubr.f32.gmra.mrb[0].mxu0 %v934
        %v1235 = vpop.f32.mrb[0].mxu0
        %v1236 = vadd.f32 %v982, %v1235
        %v1237 = vpop.f32.mrb[0].mxu0
        %1238 = vmatprep.mubr.f32.mxu0 0.0
        %1239 = vmatmul.mubr.f32.gmra.mrb[0].mxu0 %v935
        %v1240 = vpop.f32.mrb[0].mxu0
        %v1241 = vadd.f32 %v982, %v1240
        %v1242 = vpop.f32.mrb[0].mxu0
        %1243 = vmatprep.mubr.f32.mxu0 0.0
        %1244 = vmatmul.mubr.f32.gmra.mrb[0].mxu0 %v936
        %v1245 = vpop.f32.mrb[0].mxu0
        %v1246 = vadd.f32 %v982, %v1245
        %v1247 = vpop.f32.mrb[0].mxu0
        %1248 = vmatprep.mubr.f32.mxu0 0.0
        %1249 = vmatmul.mubr.f32.gmra.mrb[0].mxu0 %v937
        %v1250 = vpop.f32.mrb[0].mxu0
        %v1251 = vadd.f32 %v982, %v1250
        %v1252 = vpop.f32.mrb[0].mxu0
        %1253 = vmatprep.mubr.f32.mxu0 0.0
        %1254 = vmatmul.mubr.f32.gmra.mrb[0].mxu0 %v938
        %v1255 = vpop.f32.mrb[0].mxu0
        %v1256 = vadd.f32 %v982, %v1255
        %v1257 = vpop.f32.mrb[0].mxu0
        %1258 = vmatprep.mubr.f32.mxu0 0.0
        %1259 = vmatmul.mubr.f32.gmra.mrb[0].mxu0 %v939
        %v1260 = vpop.f32.mrb[0].mxu0
        %v1261 = vadd.f32 %v982, %v1260
        %v1262 = vpop.f32.mrb[0].mxu0
        %1263 = vmatprep.mubr.f32.mxu0 0.0
        %1264 = vmatmul.mubr.f32.gmra.mrb[0].mxu0 %v940
        %v1265 = vpop.f32.mrb[0].mxu0
        %v1266 = vadd.f32 %v982, %v1265
        %v1267 = vpop.f32.mrb[0].mxu0
        %1268 = vmatprep.mubr.f32.mxu0 0.0
        %1269 = vmatmul.mubr.f32.gmra.mrb[0].mxu0 %v941
        %v1270 = vpop.f32.mrb[0].mxu0
        %v1271 = vadd.f32 %v982, %v1270
        %v1272 = vpop.f32.mrb[0].mxu0
        %1273 = vmatprep.mubr.f32.mxu0 0.0
        %1274 = vmatmul.mubr.f32.gmra.mrb[0].mxu0 %v942
        %v1275 = vpop.f32.mrb[0].mxu0
        %v1276 = vadd.f32 %v982, %v1275
        %v1277 = vpop.f32.mrb[0].mxu0
        %1278 = vmatprep.mubr.f32.mxu0 0.0
        %1279 = vmatmul.mubr.f32.gmra.mrb[0].mxu0 %v943
        %v1280 = vpop.f32.mrb[0].mxu0
        %v1281 = vadd.f32 %v982, %v1280
        %v1282 = vpop.f32.mrb[0].mxu0
        %1283 = vmatprep.mubr.f32.mxu0 0.0
        %1284 = vmatmul.mubr.f32.gmra.mrb[0].mxu0 %v944
        %v1285 = vpop.f32.mrb[0].mxu0
        %v1286 = vadd.f32 %v982, %v1285
        %v1287 = vpop.f32.mrb[0].mxu0
        %1288 = vmatprep.mubr.f32.mxu0 0.0
        %1289 = vmatmul.mubr.f32.gmra.mrb[0].mxu0 %v945
        %v1290 = vpop.f32.mrb[0].mxu0
        %v1291 = vadd.f32 %v982, %v1290
        %v1292 = vpop.f32.mrb[0].mxu0
        %1293 = vmatprep.mubr.f32.mxu0 0.0
        %1294 = vmatmul.mubr.f32.gmra.mrb[0].mxu0 %v946
        %v1295 = vpop.f32.mrb[0].mxu0
        %v1296 = vadd.f32 %v982, %v1295
        %v1297 = vpop.f32.mrb[0].mxu0
        %1298 = vmatprep.mubr.f32.mxu0 0.0
        %1299 = vmatmul.mubr.f32.gmra.mrb[0].mxu0 %v947
        %v1300 = vpop.f32.mrb[0].mxu0
        %v1301 = vadd.f32 %v982, %v1300
        %v1302 = vpop.f32.mrb[0].mxu0
        %1303 = vmatprep.mubr.f32.mxu0 0.0
        %1304 = vmatmul.mubr.f32.gmra.mrb[0].mxu0 %v948
        %v1305 = vpop.f32.mrb[0].mxu0
        %v1306 = vadd.f32 %v982, %v1305
        %v1307 = vpop.f32.mrb[0].mxu0
        %1308 = vmatprep.mubr.f32.mxu0 0.0
        %1309 = vmatmul.mubr.f32.gmra.mrb[0].mxu0 %v949
        %v1310 = vpop.f32.mrb[0].mxu0
        %v1311 = vadd.f32 %v982, %v1310
        %v1312 = vpop.f32.mrb[0].mxu0
        %1313 = vmatprep.mubr.f32.mxu0 0.0
        %1314 = vmatmul.mubr.f32.gmra.mrb[0].mxu0 %v950
        %v1315 = vpop.f32.mrb[0].mxu0
        %v1316 = vadd.f32 %v982, %v1315
        %v1317 = vpop.f32.mrb[0].mxu0
        %1318 = vmatprep.mubr.f32.mxu0 0.0
        %1319 = vmatmul.mubr.f32.gmra.mrb[0].mxu0 %v951
        %v1320 = vpop.f32.mrb[0].mxu0
        %v1321 = vadd.f32 %v982, %v1320
        %v1322 = vpop.f32.mrb[0].mxu0
        %1323 = vmatprep.mubr.f32.mxu0 0.0
        %1324 = vmatmul.mubr.f32.gmra.mrb[0].mxu0 %v952
        %v1325 = vpop.f32.mrb[0].mxu0
        %v1326 = vadd.f32 %v982, %v1325
        %v1327 = vpop.f32.mrb[0].mxu0
        %1328 = vmatprep.mubr.f32.mxu0 0.0
        %1329 = vmatmul.mubr.f32.gmra.mrb[0].mxu0 %v953
        %v1330 = vpop.f32.mrb[0].mxu0
        %v1331 = vadd.f32 %v982, %v1330
        %v1332 = vpop.f32.mrb[0].mxu0
        %1333 = vmatprep.mubr.f32.mxu0 0.0
        %1334 = vmatmul.mubr.f32.gmra.mrb[0].mxu0 %v954
        %v1335 = vpop.f32.mrb[0].mxu0
        %v1336 = vadd.f32 %v982, %v1335
        %v1337 = vpop.f32.mrb[0].mxu0
        %1338 = vmatprep.mubr.f32.mxu0 0.0
        %1339 = vmatmul.mubr.f32.gmra.mrb[0].mxu0 %v955
        %v1340 = vpop.f32.mrb[0].mxu0
        %v1341 = vadd.f32 %v982, %v1340
        %v1342 = vpop.f32.mrb[0].mxu0
        %1343 = vmatprep.mubr.f32.mxu0 0.0
        %1344 = vmatmul.mubr.f32.gmra.mrb[0].mxu0 %v956
        %v1345 = vpop.f32.mrb[0].mxu0
        %v1346 = vadd.f32 %v982, %v1345
        %v1347 = vpop.f32.mrb[0].mxu0
        %1348 = vmatprep.mubr.f32.mxu0 0.0
        %1349 = vmatmul.mubr.f32.gmra.mrb[0].mxu0 %v957
        %v1350 = vpop.f32.mrb[0].mxu0
        %v1351 = vadd.f32 %v982, %v1350
        %v1352 = vpop.f32.mrb[0].mxu0
        %1353 = vmatprep.mubr.f32.mxu0 0.0
        %1354 = vmatmul.mubr.f32.gmra.mrb[0].mxu0 %v958
        %v1355 = vpop.f32.mrb[0].mxu0
        %v1356 = vadd.f32 %v982, %v1355
        %v1357 = vpop.f32.mrb[0].mxu0
        %1358 = vmatprep.mubr.f32.mxu0 0.0
        %1359 = vmatmul.mubr.f32.gmra.mrb[0].mxu0 %v959
        %v1360 = vpop.f32.mrb[0].mxu0
        %v1361 = vadd.f32 %v982, %v1360
        %v1362 = vpop.f32.mrb[0].mxu0
        %1363 = vmatprep.mubr.f32.mxu0 0.0
        %1364 = vmatmul.mubr.f32.gmra.mrb[0].mxu0 %v960
        %v1365 = vpop.f32.mrb[0].mxu0
        %v1366 = vadd.f32 %v982, %v1365
        %v1367 = vpop.f32.mrb[0].mxu0
        %1368 = vdwg.mxu0
        %v1369 = vmax.f32 %v1051, 0.0
        %v1370 = vmax.f32 %v1056, 0.0
        %v1371 = vmax.f32 %v1061, 0.0
        %v1372 = vmax.f32 %v1066, 0.0
        %v1373 = vmax.f32 %v1071, 0.0
        %v1374 = vmax.f32 %v1076, 0.0
        %v1375 = vmax.f32 %v1081, 0.0
        %v1376 = vmax.f32 %v1086, 0.0
        %v1377 = vmax.f32 %v1091, 0.0
        %v1378 = vmax.f32 %v1096, 0.0
        %v1379 = vmax.f32 %v1101, 0.0
        %v1380 = vmax.f32 %v1106, 0.0
        %v1381 = vmax.f32 %v1111, 0.0
        %v1382 = vmax.f32 %v1116, 0.0
        %v1383 = vmax.f32 %v1121, 0.0
        %v1384 = vmax.f32 %v1126, 0.0
        %v1385 = vmax.f32 %v1131, 0.0
        %v1386 = vmax.f32 %v1136, 0.0
        %v1387 = vmax.f32 %v1141, 0.0
        %v1388 = vmax.f32 %v1146, 0.0
        %v1389 = vmax.f32 %v1151, 0.0
        %v1390 = vmax.f32 %v1156, 0.0
        %v1391 = vmax.f32 %v1161, 0.0
        %v1392 = vmax.f32 %v1166, 0.0
        %v1393 = vmax.f32 %v1171, 0.0
        %v1394 = vmax.f32 %v1176, 0.0
        %v1395 = vmax.f32 %v1181, 0.0
        %v1396 = vmax.f32 %v1186, 0.0
        %v1397 = vmax.f32 %v1191, 0.0
        %v1398 = vmax.f32 %v1196, 0.0
        %v1399 = vmax.f32 %v1201, 0.0
        %v1400 = vmax.f32 %v1206, 0.0
        %v1401 = vmax.f32 %v1211, 0.0
        %v1402 = vmax.f32 %v1216, 0.0
        %v1403 = vmax.f32 %v1221, 0.0
        %v1404 = vmax.f32 %v1226, 0.0
        %v1405 = vmax.f32 %v1231, 0.0
        %v1406 = vmax.f32 %v1236, 0.0
        %v1407 = vmax.f32 %v1241, 0.0
        %v1408 = vmax.f32 %v1246, 0.0
        %v1409 = vmax.f32 %v1251, 0.0
        %v1410 = vmax.f32 %v1256, 0.0
        %v1411 = vmax.f32 %v1261, 0.0
        %v1412 = vmax.f32 %v1266, 0.0
        %v1413 = vmax.f32 %v1271, 0.0
        %v1414 = vmax.f32 %v1276, 0.0
        %v1415 = vmax.f32 %v1281, 0.0
        %v1416 = vmax.f32 %v1286, 0.0
        %v1417 = vmax.f32 %v1291, 0.0
        %v1418 = vmax.f32 %v1296, 0.0
        %v1419 = vmax.f32 %v1301, 0.0
        %v1420 = vmax.f32 %v1306, 0.0
        %v1421 = vmax.f32 %v1311, 0.0
        %v1422 = vmax.f32 %v1316, 0.0
        %v1423 = vmax.f32 %v1321, 0.0
        %v1424 = vmax.f32 %v1326, 0.0
        %v1425 = vmax.f32 %v1331, 0.0
        %v1426 = vmax.f32 %v1336, 0.0
        %v1427 = vmax.f32 %v1341, 0.0
        %v1428 = vmax.f32 %v1346, 0.0
        %v1429 = vmax.f32 %v1351, 0.0
        %v1430 = vmax.f32 %v1356, 0.0
        %v1431 = vmax.f32 %v1361, 0.0
        %v1432 = vmax.f32 %v1366, 0.0
        %v1433 = vlaneseq
        %v1434 = vshrl.u32 %v1433, 7
        %v1435 = vsub.s32 0, %v1434
        %v1436 = vrot.slane %v317, %v1435
        %v1437 = vmul.f32 %v253, 2.0
        %v1438 = vmul.f32 %v254, 2.0
        %v1439 = vmul.f32 %v255, 2.0
        %v1440 = vmul.f32 %v256, 2.0
        %v1441 = vmul.f32 %v257, 2.0
        %v1442 = vmul.f32 %v258, 2.0
        %v1443 = vmul.f32 %v259, 2.0
        %v1444 = vmul.f32 %v260, 2.0
        %v1445 = vmul.f32 %v261, 2.0
        %v1446 = vmul.f32 %v262, 2.0
        %v1447 = vmul.f32 %v263, 2.0
        %v1448 = vmul.f32 %v264, 2.0
        %v1449 = vmul.f32 %v265, 2.0
        %v1450 = vmul.f32 %v266, 2.0
        %v1451 = vmul.f32 %v267, 2.0
        %v1452 = vmul.f32 %v268, 2.0
        %v1453 = vmul.f32 %v269, 2.0
        %v1454 = vmul.f32 %v270, 2.0
        %v1455 = vmul.f32 %v271, 2.0
        %v1456 = vmul.f32 %v272, 2.0
        %v1457 = vmul.f32 %v273, 2.0
        %v1458 = vmul.f32 %v274, 2.0
        %v1459 = vmul.f32 %v275, 2.0
        %v1460 = vmul.f32 %v276, 2.0
        %v1461 = vmul.f32 %v277, 2.0
        %v1462 = vmul.f32 %v278, 2.0
        %v1463 = vmul.f32 %v279, 2.0
        %v1464 = vmul.f32 %v280, 2.0
        %v1465 = vmul.f32 %v281, 2.0
        %v1466 = vmul.f32 %v282, 2.0
        %v1467 = vmul.f32 %v283, 2.0
        %v1468 = vmul.f32 %v284, 2.0
        %v1469 = vmul.f32 %v285, 2.0
        %v1470 = vmul.f32 %v286, 2.0
        %v1471 = vmul.f32 %v287, 2.0
        %v1472 = vmul.f32 %v288, 2.0
        %v1473 = vmul.f32 %v289, 2.0
        %v1474 = vmul.f32 %v290, 2.0
        %v1475 = vmul.f32 %v291, 2.0
        %v1476 = vmul.f32 %v292, 2.0
        %v1477 = vmul.f32 %v293, 2.0
        %v1478 = vmul.f32 %v294, 2.0
        %v1479 = vmul.f32 %v295, 2.0
        %v1480 = vmul.f32 %v296, 2.0
        %v1481 = vmul.f32 %v297, 2.0
        %v1482 = vmul.f32 %v298, 2.0
        %v1483 = vmul.f32 %v299, 2.0
        %v1484 = vmul.f32 %v300, 2.0
        %v1485 = vmul.f32 %v301, 2.0
        %v1486 = vmul.f32 %v302, 2.0
        %v1487 = vmul.f32 %v303, 2.0
        %v1488 = vmul.f32 %v304, 2.0
        %v1489 = vmul.f32 %v305, 2.0
        %v1490 = vmul.f32 %v306, 2.0
        %v1491 = vmul.f32 %v307, 2.0
        %v1492 = vmul.f32 %v308, 2.0
        %v1493 = vmul.f32 %v309, 2.0
        %v1494 = vmul.f32 %v310, 2.0
        %v1495 = vmul.f32 %v311, 2.0
        %v1496 = vmul.f32 %v312, 2.0
        %v1497 = vmul.f32 %v313, 2.0
        %v1498 = vmul.f32 %v314, 2.0
        %v1499 = vmul.f32 %v315, 2.0
        %v1500 = vmul.f32 %v316, 2.0
        %1502 = vset.pattern.permute.xlu0 0
        %1503 = vperm.xlu0 %1502, %v1437
        %v1504 = vpop.permute.xlu0 %1503
        %1507 = vset.pattern.permute.xlu0 0
        %1508 = vperm.xlu0 %1507, %v1438
        %v1509 = vpop.permute.xlu0 %1508
        %1512 = vset.pattern.permute.xlu0 0
        %1513 = vperm.xlu0 %1512, %v1439
        %v1514 = vpop.permute.xlu0 %1513
        %1517 = vset.pattern.permute.xlu0 0
        %1518 = vperm.xlu0 %1517, %v1440
        %v1519 = vpop.permute.xlu0 %1518
        %1522 = vset.pattern.permute.xlu0 0
        %1523 = vperm.xlu0 %1522, %v1441
        %v1524 = vpop.permute.xlu0 %1523
        %1527 = vset.pattern.permute.xlu0 0
        %1528 = vperm.xlu0 %1527, %v1442
        %v1529 = vpop.permute.xlu0 %1528
        %1532 = vset.pattern.permute.xlu0 0
        %1533 = vperm.xlu0 %1532, %v1443
        %v1534 = vpop.permute.xlu0 %1533
        %1537 = vset.pattern.permute.xlu0 0
        %1538 = vperm.xlu0 %1537, %v1444
        %v1539 = vpop.permute.xlu0 %1538
        %1542 = vset.pattern.permute.xlu0 0
        %1543 = vperm.xlu0 %1542, %v1445
        %v1544 = vpop.permute.xlu0 %1543
        %1547 = vset.pattern.permute.xlu0 0
        %1548 = vperm.xlu0 %1547, %v1446
        %v1549 = vpop.permute.xlu0 %1548
        %1552 = vset.pattern.permute.xlu0 0
        %1553 = vperm.xlu0 %1552, %v1447
        %v1554 = vpop.permute.xlu0 %1553
        %1557 = vset.pattern.permute.xlu0 0
        %1558 = vperm.xlu0 %1557, %v1448
        %v1559 = vpop.permute.xlu0 %1558
        %1562 = vset.pattern.permute.xlu0 0
        %1563 = vperm.xlu0 %1562, %v1449
        %v1564 = vpop.permute.xlu0 %1563
        %1567 = vset.pattern.permute.xlu0 0
        %1568 = vperm.xlu0 %1567, %v1450
        %v1569 = vpop.permute.xlu0 %1568
        %1572 = vset.pattern.permute.xlu0 0
        %1573 = vperm.xlu0 %1572, %v1451
        %v1574 = vpop.permute.xlu0 %1573
        %1577 = vset.pattern.permute.xlu0 0
        %1578 = vperm.xlu0 %1577, %v1452
        %v1579 = vpop.permute.xlu0 %1578
        %1582 = vset.pattern.permute.xlu0 0
        %1583 = vperm.xlu0 %1582, %v1453
        %v1584 = vpop.permute.xlu0 %1583
        %1587 = vset.pattern.permute.xlu0 0
        %1588 = vperm.xlu0 %1587, %v1454
        %v1589 = vpop.permute.xlu0 %1588
        %1592 = vset.pattern.permute.xlu0 0
        %1593 = vperm.xlu0 %1592, %v1455
        %v1594 = vpop.permute.xlu0 %1593
        %1597 = vset.pattern.permute.xlu0 0
        %1598 = vperm.xlu0 %1597, %v1456
        %v1599 = vpop.permute.xlu0 %1598
        %1602 = vset.pattern.permute.xlu0 0
        %1603 = vperm.xlu0 %1602, %v1457
        %v1604 = vpop.permute.xlu0 %1603
        %1607 = vset.pattern.permute.xlu0 0
        %1608 = vperm.xlu0 %1607, %v1458
        %v1609 = vpop.permute.xlu0 %1608
        %1612 = vset.pattern.permute.xlu0 0
        %1613 = vperm.xlu0 %1612, %v1459
        %v1614 = vpop.permute.xlu0 %1613
        %1617 = vset.pattern.permute.xlu0 0
        %1618 = vperm.xlu0 %1617, %v1460
        %v1619 = vpop.permute.xlu0 %1618
        %1622 = vset.pattern.permute.xlu0 0
        %1623 = vperm.xlu0 %1622, %v1461
        %v1624 = vpop.permute.xlu0 %1623
        %1627 = vset.pattern.permute.xlu0 0
        %1628 = vperm.xlu0 %1627, %v1462
        %v1629 = vpop.permute.xlu0 %1628
        %1632 = vset.pattern.permute.xlu0 0
        %1633 = vperm.xlu0 %1632, %v1463
        %v1634 = vpop.permute.xlu0 %1633
        %1637 = vset.pattern.permute.xlu0 0
        %1638 = vperm.xlu0 %1637, %v1464
        %v1639 = vpop.permute.xlu0 %1638
        %1642 = vset.pattern.permute.xlu0 0
        %1643 = vperm.xlu0 %1642, %v1465
        %v1644 = vpop.permute.xlu0 %1643
        %1647 = vset.pattern.permute.xlu0 0
        %1648 = vperm.xlu0 %1647, %v1466
        %v1649 = vpop.permute.xlu0 %1648
        %1652 = vset.pattern.permute.xlu0 0
        %1653 = vperm.xlu0 %1652, %v1467
        %v1654 = vpop.permute.xlu0 %1653
        %1657 = vset.pattern.permute.xlu0 0
        %1658 = vperm.xlu0 %1657, %v1468
        %v1659 = vpop.permute.xlu0 %1658
        %1662 = vset.pattern.permute.xlu0 0
        %1663 = vperm.xlu0 %1662, %v1469
        %v1664 = vpop.permute.xlu0 %1663
        %1667 = vset.pattern.permute.xlu0 0
        %1668 = vperm.xlu0 %1667, %v1470
        %v1669 = vpop.permute.xlu0 %1668
        %1672 = vset.pattern.permute.xlu0 0
        %1673 = vperm.xlu0 %1672, %v1471
        %v1674 = vpop.permute.xlu0 %1673
        %1677 = vset.pattern.permute.xlu0 0
        %1678 = vperm.xlu0 %1677, %v1472
        %v1679 = vpop.permute.xlu0 %1678
        %1682 = vset.pattern.permute.xlu0 0
        %1683 = vperm.xlu0 %1682, %v1473
        %v1684 = vpop.permute.xlu0 %1683
        %1687 = vset.pattern.permute.xlu0 0
        %1688 = vperm.xlu0 %1687, %v1474
        %v1689 = vpop.permute.xlu0 %1688
        %1692 = vset.pattern.permute.xlu0 0
        %1693 = vperm.xlu0 %1692, %v1475
        %v1694 = vpop.permute.xlu0 %1693
        %1697 = vset.pattern.permute.xlu0 0
        %1698 = vperm.xlu0 %1697, %v1476
        %v1699 = vpop.permute.xlu0 %1698
        %1702 = vset.pattern.permute.xlu0 0
        %1703 = vperm.xlu0 %1702, %v1477
        %v1704 = vpop.permute.xlu0 %1703
        %1707 = vset.pattern.permute.xlu0 0
        %1708 = vperm.xlu0 %1707, %v1478
        %v1709 = vpop.permute.xlu0 %1708
        %1712 = vset.pattern.permute.xlu0 0
        %1713 = vperm.xlu0 %1712, %v1479
        %v1714 = vpop.permute.xlu0 %1713
        %1717 = vset.pattern.permute.xlu0 0
        %1718 = vperm.xlu0 %1717, %v1480
        %v1719 = vpop.permute.xlu0 %1718
        %1722 = vset.pattern.permute.xlu0 0
        %1723 = vperm.xlu0 %1722, %v1481
        %v1724 = vpop.permute.xlu0 %1723
        %1727 = vset.pattern.permute.xlu0 0
        %1728 = vperm.xlu0 %1727, %v1482
        %v1729 = vpop.permute.xlu0 %1728
        %1732 = vset.pattern.permute.xlu0 0
        %1733 = vperm.xlu0 %1732, %v1483
        %v1734 = vpop.permute.xlu0 %1733
        %1737 = vset.pattern.permute.xlu0 0
        %1738 = vperm.xlu0 %1737, %v1484
        %v1739 = vpop.permute.xlu0 %1738
        %1742 = vset.pattern.permute.xlu0 0
        %1743 = vperm.xlu0 %1742, %v1485
        %v1744 = vpop.permute.xlu0 %1743
        %1747 = vset.pattern.permute.xlu0 0
        %1748 = vperm.xlu0 %1747, %v1486
        %v1749 = vpop.permute.xlu0 %1748
        %1752 = vset.pattern.permute.xlu0 0
        %1753 = vperm.xlu0 %1752, %v1487
        %v1754 = vpop.permute.xlu0 %1753
        %1757 = vset.pattern.permute.xlu0 0
        %1758 = vperm.xlu0 %1757, %v1488
        %v1759 = vpop.permute.xlu0 %1758
        %1762 = vset.pattern.permute.xlu0 0
        %1763 = vperm.xlu0 %1762, %v1489
        %v1764 = vpop.permute.xlu0 %1763
        %1767 = vset.pattern.permute.xlu0 0
        %1768 = vperm.xlu0 %1767, %v1490
        %v1769 = vpop.permute.xlu0 %1768
        %1772 = vset.pattern.permute.xlu0 0
        %1773 = vperm.xlu0 %1772, %v1491
        %v1774 = vpop.permute.xlu0 %1773
        %1777 = vset.pattern.permute.xlu0 0
        %1778 = vperm.xlu0 %1777, %v1492
        %v1779 = vpop.permute.xlu0 %1778
        %1782 = vset.pattern.permute.xlu0 0
        %1783 = vperm.xlu0 %1782, %v1493
        %v1784 = vpop.permute.xlu0 %1783
        %1787 = vset.pattern.permute.xlu0 0
        %1788 = vperm.xlu0 %1787, %v1494
        %v1789 = vpop.permute.xlu0 %1788
        %1792 = vset.pattern.permute.xlu0 0
        %1793 = vperm.xlu0 %1792, %v1495
        %v1794 = vpop.permute.xlu0 %1793
        %1797 = vset.pattern.permute.xlu0 0
        %1798 = vperm.xlu0 %1797, %v1496
        %v1799 = vpop.permute.xlu0 %1798
        %1802 = vset.pattern.permute.xlu0 0
        %1803 = vperm.xlu0 %1802, %v1497
        %v1804 = vpop.permute.xlu0 %1803
        %1807 = vset.pattern.permute.xlu0 0
        %1808 = vperm.xlu0 %1807, %v1498
        %v1809 = vpop.permute.xlu0 %1808
        %1812 = vset.pattern.permute.xlu0 0
        %1813 = vperm.xlu0 %1812, %v1499
        %v1814 = vpop.permute.xlu0 %1813
        %1817 = vset.pattern.permute.xlu0 0
        %1818 = vperm.xlu0 %1817, %v1500
        %v1819 = vpop.permute.xlu0 %1818
        %v1821 = vlaneseq
        %v1822 = vshrl.u32 %v1821, 7
        %v1823 = vsub.s32 1, %v1822
        %v1824 = vrot.slane %v317, %v1823
        %v1825 = vmul.f32 %v1504, %v1824
        %v1826 = vmul.f32 %v1509, %v1824
        %v1827 = vmul.f32 %v1514, %v1824
        %v1828 = vmul.f32 %v1519, %v1824
        %v1829 = vmul.f32 %v1524, %v1824
        %v1830 = vmul.f32 %v1529, %v1824
        %v1831 = vmul.f32 %v1534, %v1824
        %v1832 = vmul.f32 %v1539, %v1824
        %v1833 = vmul.f32 %v1544, %v1824
        %v1834 = vmul.f32 %v1549, %v1824
        %v1835 = vmul.f32 %v1554, %v1824
        %v1836 = vmul.f32 %v1559, %v1824
        %v1837 = vmul.f32 %v1564, %v1824
        %v1838 = vmul.f32 %v1569, %v1824
        %v1839 = vmul.f32 %v1574, %v1824
        %v1840 = vmul.f32 %v1579, %v1824
        %v1841 = vmul.f32 %v1584, %v1824
        %v1842 = vmul.f32 %v1589, %v1824
        %v1843 = vmul.f32 %v1594, %v1824
        %v1844 = vmul.f32 %v1599, %v1824
        %v1845 = vmul.f32 %v1604, %v1824
        %v1846 = vmul.f32 %v1609, %v1824
        %v1847 = vmul.f32 %v1614, %v1824
        %v1848 = vmul.f32 %v1619, %v1824
        %v1849 = vmul.f32 %v1624, %v1824
        %v1850 = vmul.f32 %v1629, %v1824
        %v1851 = vmul.f32 %v1634, %v1824
        %v1852 = vmul.f32 %v1639, %v1824
        %v1853 = vmul.f32 %v1644, %v1824
        %v1854 = vmul.f32 %v1649, %v1824
        %v1855 = vmul.f32 %v1654, %v1824
        %v1856 = vmul.f32 %v1659, %v1824
        %v1857 = vmul.f32 %v1664, %v1824
        %v1858 = vmul.f32 %v1669, %v1824
        %v1859 = vmul.f32 %v1674, %v1824
        %v1860 = vmul.f32 %v1679, %v1824
        %v1861 = vmul.f32 %v1684, %v1824
        %v1862 = vmul.f32 %v1689, %v1824
        %v1863 = vmul.f32 %v1694, %v1824
        %v1864 = vmul.f32 %v1699, %v1824
        %v1865 = vmul.f32 %v1704, %v1824
        %v1866 = vmul.f32 %v1709, %v1824
        %v1867 = vmul.f32 %v1714, %v1824
        %v1868 = vmul.f32 %v1719, %v1824
        %v1869 = vmul.f32 %v1724, %v1824
        %v1870 = vmul.f32 %v1729, %v1824
        %v1871 = vmul.f32 %v1734, %v1824
        %v1872 = vmul.f32 %v1739, %v1824
        %v1873 = vmul.f32 %v1744, %v1824
        %v1874 = vmul.f32 %v1749, %v1824
        %v1875 = vmul.f32 %v1754, %v1824
        %v1876 = vmul.f32 %v1759, %v1824
        %v1877 = vmul.f32 %v1764, %v1824
        %v1878 = vmul.f32 %v1769, %v1824
        %v1879 = vmul.f32 %v1774, %v1824
        %v1880 = vmul.f32 %v1779, %v1824
        %v1881 = vmul.f32 %v1784, %v1824
        %v1882 = vmul.f32 %v1789, %v1824
        %v1883 = vmul.f32 %v1794, %v1824
        %v1884 = vmul.f32 %v1799, %v1824
        %v1885 = vmul.f32 %v1804, %v1824
        %v1886 = vmul.f32 %v1809, %v1824
        %v1887 = vmul.f32 %v1814, %v1824
        %v1888 = vmul.f32 %v1819, %v1824
        %v1889 = vadd.f32 %v1436, %v1825
        %v1890 = vadd.f32 %v1436, %v1826
        %v1891 = vadd.f32 %v1436, %v1827
        %v1892 = vadd.f32 %v1436, %v1828
        %v1893 = vadd.f32 %v1436, %v1829
        %v1894 = vadd.f32 %v1436, %v1830
        %v1895 = vadd.f32 %v1436, %v1831
        %v1896 = vadd.f32 %v1436, %v1832
        %v1897 = vadd.f32 %v1436, %v1833
        %v1898 = vadd.f32 %v1436, %v1834
        %v1899 = vadd.f32 %v1436, %v1835
        %v1900 = vadd.f32 %v1436, %v1836
        %v1901 = vadd.f32 %v1436, %v1837
        %v1902 = vadd.f32 %v1436, %v1838
        %v1903 = vadd.f32 %v1436, %v1839
        %v1904 = vadd.f32 %v1436, %v1840
        %v1905 = vadd.f32 %v1436, %v1841
        %v1906 = vadd.f32 %v1436, %v1842
        %v1907 = vadd.f32 %v1436, %v1843
        %v1908 = vadd.f32 %v1436, %v1844
        %v1909 = vadd.f32 %v1436, %v1845
        %v1910 = vadd.f32 %v1436, %v1846
        %v1911 = vadd.f32 %v1436, %v1847
        %v1912 = vadd.f32 %v1436, %v1848
        %v1913 = vadd.f32 %v1436, %v1849
        %v1914 = vadd.f32 %v1436, %v1850
        %v1915 = vadd.f32 %v1436, %v1851
        %v1916 = vadd.f32 %v1436, %v1852
        %v1917 = vadd.f32 %v1436, %v1853
        %v1918 = vadd.f32 %v1436, %v1854
        %v1919 = vadd.f32 %v1436, %v1855
        %v1920 = vadd.f32 %v1436, %v1856
        %v1921 = vadd.f32 %v1436, %v1857
        %v1922 = vadd.f32 %v1436, %v1858
        %v1923 = vadd.f32 %v1436, %v1859
        %v1924 = vadd.f32 %v1436, %v1860
        %v1925 = vadd.f32 %v1436, %v1861
        %v1926 = vadd.f32 %v1436, %v1862
        %v1927 = vadd.f32 %v1436, %v1863
        %v1928 = vadd.f32 %v1436, %v1864
        %v1929 = vadd.f32 %v1436, %v1865
        %v1930 = vadd.f32 %v1436, %v1866
        %v1931 = vadd.f32 %v1436, %v1867
        %v1932 = vadd.f32 %v1436, %v1868
        %v1933 = vadd.f32 %v1436, %v1869
        %v1934 = vadd.f32 %v1436, %v1870
        %v1935 = vadd.f32 %v1436, %v1871
        %v1936 = vadd.f32 %v1436, %v1872
        %v1937 = vadd.f32 %v1436, %v1873
        %v1938 = vadd.f32 %v1436, %v1874
        %v1939 = vadd.f32 %v1436, %v1875
        %v1940 = vadd.f32 %v1436, %v1876
        %v1941 = vadd.f32 %v1436, %v1877
        %v1942 = vadd.f32 %v1436, %v1878
        %v1943 = vadd.f32 %v1436, %v1879
        %v1944 = vadd.f32 %v1436, %v1880
        %v1945 = vadd.f32 %v1436, %v1881
        %v1946 = vadd.f32 %v1436, %v1882
        %v1947 = vadd.f32 %v1436, %v1883
        %v1948 = vadd.f32 %v1436, %v1884
        %v1949 = vadd.f32 %v1436, %v1885
        %v1950 = vadd.f32 %v1436, %v1886
        %v1951 = vadd.f32 %v1436, %v1887
        %v1952 = vadd.f32 %v1436, %v1888
        %v1953 = vmul.f32 %v1437, %v1437
        %v1954 = vmul.f32 %v1438, %v1438
        %v1955 = vmul.f32 %v1439, %v1439
        %v1956 = vmul.f32 %v1440, %v1440
        %v1957 = vmul.f32 %v1441, %v1441
        %v1958 = vmul.f32 %v1442, %v1442
        %v1959 = vmul.f32 %v1443, %v1443
        %v1960 = vmul.f32 %v1444, %v1444
        %v1961 = vmul.f32 %v1445, %v1445
        %v1962 = vmul.f32 %v1446, %v1446
        %v1963 = vmul.f32 %v1447, %v1447
        %v1964 = vmul.f32 %v1448, %v1448
        %v1965 = vmul.f32 %v1449, %v1449
        %v1966 = vmul.f32 %v1450, %v1450
        %v1967 = vmul.f32 %v1451, %v1451
        %v1968 = vmul.f32 %v1452, %v1452
        %v1969 = vmul.f32 %v1453, %v1453
        %v1970 = vmul.f32 %v1454, %v1454
        %v1971 = vmul.f32 %v1455, %v1455
        %v1972 = vmul.f32 %v1456, %v1456
        %v1973 = vmul.f32 %v1457, %v1457
        %v1974 = vmul.f32 %v1458, %v1458
        %v1975 = vmul.f32 %v1459, %v1459
        %v1976 = vmul.f32 %v1460, %v1460
        %v1977 = vmul.f32 %v1461, %v1461
        %v1978 = vmul.f32 %v1462, %v1462
        %v1979 = vmul.f32 %v1463, %v1463
        %v1980 = vmul.f32 %v1464, %v1464
        %v1981 = vmul.f32 %v1465, %v1465
        %v1982 = vmul.f32 %v1466, %v1466
        %v1983 = vmul.f32 %v1467, %v1467
        %v1984 = vmul.f32 %v1468, %v1468
        %v1985 = vmul.f32 %v1469, %v1469
        %v1986 = vmul.f32 %v1470, %v1470
        %v1987 = vmul.f32 %v1471, %v1471
        %v1988 = vmul.f32 %v1472, %v1472
        %v1989 = vmul.f32 %v1473, %v1473
        %v1990 = vmul.f32 %v1474, %v1474
        %v1991 = vmul.f32 %v1475, %v1475
        %v1992 = vmul.f32 %v1476, %v1476
        %v1993 = vmul.f32 %v1477, %v1477
        %v1994 = vmul.f32 %v1478, %v1478
        %v1995 = vmul.f32 %v1479, %v1479
        %v1996 = vmul.f32 %v1480, %v1480
        %v1997 = vmul.f32 %v1481, %v1481
        %v1998 = vmul.f32 %v1482, %v1482
        %v1999 = vmul.f32 %v1483, %v1483
        %v2000 = vmul.f32 %v1484, %v1484
        %v2001 = vmul.f32 %v1485, %v1485
        %v2002 = vmul.f32 %v1486, %v1486
        %v2003 = vmul.f32 %v1487, %v1487
        %v2004 = vmul.f32 %v1488, %v1488
        %v2005 = vmul.f32 %v1489, %v1489
        %v2006 = vmul.f32 %v1490, %v1490
        %v2007 = vmul.f32 %v1491, %v1491
        %v2008 = vmul.f32 %v1492, %v1492
        %v2009 = vmul.f32 %v1493, %v1493
        %v2010 = vmul.f32 %v1494, %v1494
        %v2011 = vmul.f32 %v1495, %v1495
        %v2012 = vmul.f32 %v1496, %v1496
        %v2013 = vmul.f32 %v1497, %v1497
        %v2014 = vmul.f32 %v1498, %v1498
        %v2015 = vmul.f32 %v1499, %v1499
        %v2016 = vmul.f32 %v1500, %v1500
        %v2017 = vsub.f32 %v1953, 2.0
        %v2018 = vsub.f32 %v1954, 2.0
        %v2019 = vsub.f32 %v1955, 2.0
        %v2020 = vsub.f32 %v1956, 2.0
        %v2021 = vsub.f32 %v1957, 2.0
        %v2022 = vsub.f32 %v1958, 2.0
        %v2023 = vsub.f32 %v1959, 2.0
        %v2024 = vsub.f32 %v1960, 2.0
        %v2025 = vsub.f32 %v1961, 2.0
        %v2026 = vsub.f32 %v1962, 2.0
        %v2027 = vsub.f32 %v1963, 2.0
        %v2028 = vsub.f32 %v1964, 2.0
        %v2029 = vsub.f32 %v1965, 2.0
        %v2030 = vsub.f32 %v1966, 2.0
        %v2031 = vsub.f32 %v1967, 2.0
        %v2032 = vsub.f32 %v1968, 2.0
        %v2033 = vsub.f32 %v1969, 2.0
        %v2034 = vsub.f32 %v1970, 2.0
        %v2035 = vsub.f32 %v1971, 2.0
        %v2036 = vsub.f32 %v1972, 2.0
        %v2037 = vsub.f32 %v1973, 2.0
        %v2038 = vsub.f32 %v1974, 2.0
        %v2039 = vsub.f32 %v1975, 2.0
        %v2040 = vsub.f32 %v1976, 2.0
        %v2041 = vsub.f32 %v1977, 2.0
        %v2042 = vsub.f32 %v1978, 2.0
        %v2043 = vsub.f32 %v1979, 2.0
        %v2044 = vsub.f32 %v1980, 2.0
        %v2045 = vsub.f32 %v1981, 2.0
        %v2046 = vsub.f32 %v1982, 2.0
        %v2047 = vsub.f32 %v1983, 2.0
        %v2048 = vsub.f32 %v1984, 2.0
        %v2049 = vsub.f32 %v1985, 2.0
        %v2050 = vsub.f32 %v1986, 2.0
        %v2051 = vsub.f32 %v1987, 2.0
        %v2052 = vsub.f32 %v1988, 2.0
        %v2053 = vsub.f32 %v1989, 2.0
        %v2054 = vsub.f32 %v1990, 2.0
        %v2055 = vsub.f32 %v1991, 2.0
        %v2056 = vsub.f32 %v1992, 2.0
        %v2057 = vsub.f32 %v1993, 2.0
        %v2058 = vsub.f32 %v1994, 2.0
        %v2059 = vsub.f32 %v1995, 2.0
        %v2060 = vsub.f32 %v1996, 2.0
        %v2061 = vsub.f32 %v1997, 2.0
        %v2062 = vsub.f32 %v1998, 2.0
        %v2063 = vsub.f32 %v1999, 2.0
        %v2064 = vsub.f32 %v2000, 2.0
        %v2065 = vsub.f32 %v2001, 2.0
        %v2066 = vsub.f32 %v2002, 2.0
        %v2067 = vsub.f32 %v2003, 2.0
        %v2068 = vsub.f32 %v2004, 2.0
        %v2069 = vsub.f32 %v2005, 2.0
        %v2070 = vsub.f32 %v2006, 2.0
        %v2071 = vsub.f32 %v2007, 2.0
        %v2072 = vsub.f32 %v2008, 2.0
        %v2073 = vsub.f32 %v2009, 2.0
        %v2074 = vsub.f32 %v2010, 2.0
        %v2075 = vsub.f32 %v2011, 2.0
        %v2076 = vsub.f32 %v2012, 2.0
        %v2077 = vsub.f32 %v2013, 2.0
        %v2078 = vsub.f32 %v2014, 2.0
        %v2079 = vsub.f32 %v2015, 2.0
        %v2080 = vsub.f32 %v2016, 2.0
        %2082 = vset.pattern.permute.xlu0 0
        %2083 = vperm.xlu0 %2082, %v2017
        %v2084 = vpop.permute.xlu0 %2083
        %2087 = vset.pattern.permute.xlu0 0
        %2088 = vperm.xlu0 %2087, %v2018
        %v2089 = vpop.permute.xlu0 %2088
        %2092 = vset.pattern.permute.xlu0 0
        %2093 = vperm.xlu0 %2092, %v2019
        %v2094 = vpop.permute.xlu0 %2093
        %2097 = vset.pattern.permute.xlu0 0
        %2098 = vperm.xlu0 %2097, %v2020
        %v2099 = vpop.permute.xlu0 %2098
        %2102 = vset.pattern.permute.xlu0 0
        %2103 = vperm.xlu0 %2102, %v2021
        %v2104 = vpop.permute.xlu0 %2103
        %2107 = vset.pattern.permute.xlu0 0
        %2108 = vperm.xlu0 %2107, %v2022
        %v2109 = vpop.permute.xlu0 %2108
        %2112 = vset.pattern.permute.xlu0 0
        %2113 = vperm.xlu0 %2112, %v2023
        %v2114 = vpop.permute.xlu0 %2113
        %2117 = vset.pattern.permute.xlu0 0
        %2118 = vperm.xlu0 %2117, %v2024
        %v2119 = vpop.permute.xlu0 %2118
        %2122 = vset.pattern.permute.xlu0 0
        %2123 = vperm.xlu0 %2122, %v2025
        %v2124 = vpop.permute.xlu0 %2123
        %2127 = vset.pattern.permute.xlu0 0
        %2128 = vperm.xlu0 %2127, %v2026
        %v2129 = vpop.permute.xlu0 %2128
        %2132 = vset.pattern.permute.xlu0 0
        %2133 = vperm.xlu0 %2132, %v2027
        %v2134 = vpop.permute.xlu0 %2133
        %2137 = vset.pattern.permute.xlu0 0
        %2138 = vperm.xlu0 %2137, %v2028
        %v2139 = vpop.permute.xlu0 %2138
        %2142 = vset.pattern.permute.xlu0 0
        %2143 = vperm.xlu0 %2142, %v2029
        %v2144 = vpop.permute.xlu0 %2143
        %2147 = vset.pattern.permute.xlu0 0
        %2148 = vperm.xlu0 %2147, %v2030
        %v2149 = vpop.permute.xlu0 %2148
        %2152 = vset.pattern.permute.xlu0 0
        %2153 = vperm.xlu0 %2152, %v2031
        %v2154 = vpop.permute.xlu0 %2153
        %2157 = vset.pattern.permute.xlu0 0
        %2158 = vperm.xlu0 %2157, %v2032
        %v2159 = vpop.permute.xlu0 %2158
        %2162 = vset.pattern.permute.xlu0 0
        %2163 = vperm.xlu0 %2162, %v2033
        %v2164 = vpop.permute.xlu0 %2163
        %2167 = vset.pattern.permute.xlu0 0
        %2168 = vperm.xlu0 %2167, %v2034
        %v2169 = vpop.permute.xlu0 %2168
        %2172 = vset.pattern.permute.xlu0 0
        %2173 = vperm.xlu0 %2172, %v2035
        %v2174 = vpop.permute.xlu0 %2173
        %2177 = vset.pattern.permute.xlu0 0
        %2178 = vperm.xlu0 %2177, %v2036
        %v2179 = vpop.permute.xlu0 %2178
        %2182 = vset.pattern.permute.xlu0 0
        %2183 = vperm.xlu0 %2182, %v2037
        %v2184 = vpop.permute.xlu0 %2183
        %2187 = vset.pattern.permute.xlu0 0
        %2188 = vperm.xlu0 %2187, %v2038
        %v2189 = vpop.permute.xlu0 %2188
        %2192 = vset.pattern.permute.xlu0 0
        %2193 = vperm.xlu0 %2192, %v2039
        %v2194 = vpop.permute.xlu0 %2193
        %2197 = vset.pattern.permute.xlu0 0
        %2198 = vperm.xlu0 %2197, %v2040
        %v2199 = vpop.permute.xlu0 %2198
        %2202 = vset.pattern.permute.xlu0 0
        %2203 = vperm.xlu0 %2202, %v2041
        %v2204 = vpop.permute.xlu0 %2203
        %2207 = vset.pattern.permute.xlu0 0
        %2208 = vperm.xlu0 %2207, %v2042
        %v2209 = vpop.permute.xlu0 %2208
        %2212 = vset.pattern.permute.xlu0 0
        %2213 = vperm.xlu0 %2212, %v2043
        %v2214 = vpop.permute.xlu0 %2213
        %2217 = vset.pattern.permute.xlu0 0
        %2218 = vperm.xlu0 %2217, %v2044
        %v2219 = vpop.permute.xlu0 %2218
        %2222 = vset.pattern.permute.xlu0 0
        %2223 = vperm.xlu0 %2222, %v2045
        %v2224 = vpop.permute.xlu0 %2223
        %2227 = vset.pattern.permute.xlu0 0
        %2228 = vperm.xlu0 %2227, %v2046
        %v2229 = vpop.permute.xlu0 %2228
        %2232 = vset.pattern.permute.xlu0 0
        %2233 = vperm.xlu0 %2232, %v2047
        %v2234 = vpop.permute.xlu0 %2233
        %2237 = vset.pattern.permute.xlu0 0
        %2238 = vperm.xlu0 %2237, %v2048
        %v2239 = vpop.permute.xlu0 %2238
        %2242 = vset.pattern.permute.xlu0 0
        %2243 = vperm.xlu0 %2242, %v2049
        %v2244 = vpop.permute.xlu0 %2243
        %2247 = vset.pattern.permute.xlu0 0
        %2248 = vperm.xlu0 %2247, %v2050
        %v2249 = vpop.permute.xlu0 %2248
        %2252 = vset.pattern.permute.xlu0 0
        %2253 = vperm.xlu0 %2252, %v2051
        %v2254 = vpop.permute.xlu0 %2253
        %2257 = vset.pattern.permute.xlu0 0
        %2258 = vperm.xlu0 %2257, %v2052
        %v2259 = vpop.permute.xlu0 %2258
        %2262 = vset.pattern.permute.xlu0 0
        %2263 = vperm.xlu0 %2262, %v2053
        %v2264 = vpop.permute.xlu0 %2263
        %2267 = vset.pattern.permute.xlu0 0
        %2268 = vperm.xlu0 %2267, %v2054
        %v2269 = vpop.permute.xlu0 %2268
        %2272 = vset.pattern.permute.xlu0 0
        %2273 = vperm.xlu0 %2272, %v2055
        %v2274 = vpop.permute.xlu0 %2273
        %2277 = vset.pattern.permute.xlu0 0
        %2278 = vperm.xlu0 %2277, %v2056
        %v2279 = vpop.permute.xlu0 %2278
        %2282 = vset.pattern.permute.xlu0 0
        %2283 = vperm.xlu0 %2282, %v2057
        %v2284 = vpop.permute.xlu0 %2283
        %2287 = vset.pattern.permute.xlu0 0
        %2288 = vperm.xlu0 %2287, %v2058
        %v2289 = vpop.permute.xlu0 %2288
        %2292 = vset.pattern.permute.xlu0 0
        %2293 = vperm.xlu0 %2292, %v2059
        %v2294 = vpop.permute.xlu0 %2293
        %2297 = vset.pattern.permute.xlu0 0
        %2298 = vperm.xlu0 %2297, %v2060
        %v2299 = vpop.permute.xlu0 %2298
        %2302 = vset.pattern.permute.xlu0 0
        %2303 = vperm.xlu0 %2302, %v2061
        %v2304 = vpop.permute.xlu0 %2303
        %2307 = vset.pattern.permute.xlu0 0
        %2308 = vperm.xlu0 %2307, %v2062
        %v2309 = vpop.permute.xlu0 %2308
        %2312 = vset.pattern.permute.xlu0 0
        %2313 = vperm.xlu0 %2312, %v2063
        %v2314 = vpop.permute.xlu0 %2313
        %2317 = vset.pattern.permute.xlu0 0
        %2318 = vperm.xlu0 %2317, %v2064
        %v2319 = vpop.permute.xlu0 %2318
        %2322 = vset.pattern.permute.xlu0 0
        %2323 = vperm.xlu0 %2322, %v2065
        %v2324 = vpop.permute.xlu0 %2323
        %2327 = vset.pattern.permute.xlu0 0
        %2328 = vperm.xlu0 %2327, %v2066
        %v2329 = vpop.permute.xlu0 %2328
        %2332 = vset.pattern.permute.xlu0 0
        %2333 = vperm.xlu0 %2332, %v2067
        %v2334 = vpop.permute.xlu0 %2333
        %2337 = vset.pattern.permute.xlu0 0
        %2338 = vperm.xlu0 %2337, %v2068
        %v2339 = vpop.permute.xlu0 %2338
        %2342 = vset.pattern.permute.xlu0 0
        %2343 = vperm.xlu0 %2342, %v2069
        %v2344 = vpop.permute.xlu0 %2343
        %2347 = vset.pattern.permute.xlu0 0
        %2348 = vperm.xlu0 %2347, %v2070
        %v2349 = vpop.permute.xlu0 %2348
        %2352 = vset.pattern.permute.xlu0 0
        %2353 = vperm.xlu0 %2352, %v2071
        %v2354 = vpop.permute.xlu0 %2353
        %2357 = vset.pattern.permute.xlu0 0
        %2358 = vperm.xlu0 %2357, %v2072
        %v2359 = vpop.permute.xlu0 %2358
        %2362 = vset.pattern.permute.xlu0 0
        %2363 = vperm.xlu0 %2362, %v2073
        %v2364 = vpop.permute.xlu0 %2363
        %2367 = vset.pattern.permute.xlu0 0
        %2368 = vperm.xlu0 %2367, %v2074
        %v2369 = vpop.permute.xlu0 %2368
        %2372 = vset.pattern.permute.xlu0 0
        %2373 = vperm.xlu0 %2372, %v2075
        %v2374 = vpop.permute.xlu0 %2373
        %2377 = vset.pattern.permute.xlu0 0
        %2378 = vperm.xlu0 %2377, %v2076
        %v2379 = vpop.permute.xlu0 %2378
        %2382 = vset.pattern.permute.xlu0 0
        %2383 = vperm.xlu0 %2382, %v2077
        %v2384 = vpop.permute.xlu0 %2383
        %2387 = vset.pattern.permute.xlu0 0
        %2388 = vperm.xlu0 %2387, %v2078
        %v2389 = vpop.permute.xlu0 %2388
        %2392 = vset.pattern.permute.xlu0 0
        %2393 = vperm.xlu0 %2392, %v2079
        %v2394 = vpop.permute.xlu0 %2393
        %2397 = vset.pattern.permute.xlu0 0
        %2398 = vperm.xlu0 %2397, %v2080
        %v2399 = vpop.permute.xlu0 %2398
        %v2401 = vlaneseq
        %v2402 = vshrl.u32 %v2401, 7
        %v2403 = vsub.s32 2, %v2402
        %v2404 = vrot.slane %v317, %v2403
        %v2405 = vmul.f32 %v2084, %v2404
        %v2406 = vmul.f32 %v2089, %v2404
        %v2407 = vmul.f32 %v2094, %v2404
        %v2408 = vmul.f32 %v2099, %v2404
        %v2409 = vmul.f32 %v2104, %v2404
        %v2410 = vmul.f32 %v2109, %v2404
        %v2411 = vmul.f32 %v2114, %v2404
        %v2412 = vmul.f32 %v2119, %v2404
        %v2413 = vmul.f32 %v2124, %v2404
        %v2414 = vmul.f32 %v2129, %v2404
        %v2415 = vmul.f32 %v2134, %v2404
        %v2416 = vmul.f32 %v2139, %v2404
        %v2417 = vmul.f32 %v2144, %v2404
        %v2418 = vmul.f32 %v2149, %v2404
        %v2419 = vmul.f32 %v2154, %v2404
        %v2420 = vmul.f32 %v2159, %v2404
        %v2421 = vmul.f32 %v2164, %v2404
        %v2422 = vmul.f32 %v2169, %v2404
        %v2423 = vmul.f32 %v2174, %v2404
        %v2424 = vmul.f32 %v2179, %v2404
        %v2425 = vmul.f32 %v2184, %v2404
        %v2426 = vmul.f32 %v2189, %v2404
        %v2427 = vmul.f32 %v2194, %v2404
        %v2428 = vmul.f32 %v2199, %v2404
        %v2429 = vmul.f32 %v2204, %v2404
        %v2430 = vmul.f32 %v2209, %v2404
        %v2431 = vmul.f32 %v2214, %v2404
        %v2432 = vmul.f32 %v2219, %v2404
        %v2433 = vmul.f32 %v2224, %v2404
        %v2434 = vmul.f32 %v2229, %v2404
        %v2435 = vmul.f32 %v2234, %v2404
        %v2436 = vmul.f32 %v2239, %v2404
        %v2437 = vmul.f32 %v2244, %v2404
        %v2438 = vmul.f32 %v2249, %v2404
        %v2439 = vmul.f32 %v2254, %v2404
        %v2440 = vmul.f32 %v2259, %v2404
        %v2441 = vmul.f32 %v2264, %v2404
        %v2442 = vmul.f32 %v2269, %v2404
        %v2443 = vmul.f32 %v2274, %v2404
        %v2444 = vmul.f32 %v2279, %v2404
        %v2445 = vmul.f32 %v2284, %v2404
        %v2446 = vmul.f32 %v2289, %v2404
        %v2447 = vmul.f32 %v2294, %v2404
        %v2448 = vmul.f32 %v2299, %v2404
        %v2449 = vmul.f32 %v2304, %v2404
        %v2450 = vmul.f32 %v2309, %v2404
        %v2451 = vmul.f32 %v2314, %v2404
        %v2452 = vmul.f32 %v2319, %v2404
        %v2453 = vmul.f32 %v2324, %v2404
        %v2454 = vmul.f32 %v2329, %v2404
        %v2455 = vmul.f32 %v2334, %v2404
        %v2456 = vmul.f32 %v2339, %v2404
        %v2457 = vmul.f32 %v2344, %v2404
        %v2458 = vmul.f32 %v2349, %v2404
        %v2459 = vmul.f32 %v2354, %v2404
        %v2460 = vmul.f32 %v2359, %v2404
        %v2461 = vmul.f32 %v2364, %v2404
        %v2462 = vmul.f32 %v2369, %v2404
        %v2463 = vmul.f32 %v2374, %v2404
        %v2464 = vmul.f32 %v2379, %v2404
        %v2465 = vmul.f32 %v2384, %v2404
        %v2466 = vmul.f32 %v2389, %v2404
        %v2467 = vmul.f32 %v2394, %v2404
        %v2468 = vmul.f32 %v2399, %v2404
        %v2469 = vadd.f32 %v1889, %v2405
        %v2470 = vadd.f32 %v1890, %v2406
        %v2471 = vadd.f32 %v1891, %v2407
        %v2472 = vadd.f32 %v1892, %v2408
        %v2473 = vadd.f32 %v1893, %v2409
        %v2474 = vadd.f32 %v1894, %v2410
        %v2475 = vadd.f32 %v1895, %v2411
        %v2476 = vadd.f32 %v1896, %v2412
        %v2477 = vadd.f32 %v1897, %v2413
        %v2478 = vadd.f32 %v1898, %v2414
        %v2479 = vadd.f32 %v1899, %v2415
        %v2480 = vadd.f32 %v1900, %v2416
        %v2481 = vadd.f32 %v1901, %v2417
        %v2482 = vadd.f32 %v1902, %v2418
        %v2483 = vadd.f32 %v1903, %v2419
        %v2484 = vadd.f32 %v1904, %v2420
        %v2485 = vadd.f32 %v1905, %v2421
        %v2486 = vadd.f32 %v1906, %v2422
        %v2487 = vadd.f32 %v1907, %v2423
        %v2488 = vadd.f32 %v1908, %v2424
        %v2489 = vadd.f32 %v1909, %v2425
        %v2490 = vadd.f32 %v1910, %v2426
        %v2491 = vadd.f32 %v1911, %v2427
        %v2492 = vadd.f32 %v1912, %v2428
        %v2493 = vadd.f32 %v1913, %v2429
        %v2494 = vadd.f32 %v1914, %v2430
        %v2495 = vadd.f32 %v1915, %v2431
        %v2496 = vadd.f32 %v1916, %v2432
        %v2497 = vadd.f32 %v1917, %v2433
        %v2498 = vadd.f32 %v1918, %v2434
        %v2499 = vadd.f32 %v1919, %v2435
        %v2500 = vadd.f32 %v1920, %v2436
        %v2501 = vadd.f32 %v1921, %v2437
        %v2502 = vadd.f32 %v1922, %v2438
        %v2503 = vadd.f32 %v1923, %v2439
        %v2504 = vadd.f32 %v1924, %v2440
        %v2505 = vadd.f32 %v1925, %v2441
        %v2506 = vadd.f32 %v1926, %v2442
        %v2507 = vadd.f32 %v1927, %v2443
        %v2508 = vadd.f32 %v1928, %v2444
        %v2509 = vadd.f32 %v1929, %v2445
        %v2510 = vadd.f32 %v1930, %v2446
        %v2511 = vadd.f32 %v1931, %v2447
        %v2512 = vadd.f32 %v1932, %v2448
        %v2513 = vadd.f32 %v1933, %v2449
        %v2514 = vadd.f32 %v1934, %v2450
        %v2515 = vadd.f32 %v1935, %v2451
        %v2516 = vadd.f32 %v1936, %v2452
        %v2517 = vadd.f32 %v1937, %v2453
        %v2518 = vadd.f32 %v1938, %v2454
        %v2519 = vadd.f32 %v1939, %v2455
        %v2520 = vadd.f32 %v1940, %v2456
        %v2521 = vadd.f32 %v1941, %v2457
        %v2522 = vadd.f32 %v1942, %v2458
        %v2523 = vadd.f32 %v1943, %v2459
        %v2524 = vadd.f32 %v1944, %v2460
        %v2525 = vadd.f32 %v1945, %v2461
        %v2526 = vadd.f32 %v1946, %v2462
        %v2527 = vadd.f32 %v1947, %v2463
        %v2528 = vadd.f32 %v1948, %v2464
        %v2529 = vadd.f32 %v1949, %v2465
        %v2530 = vadd.f32 %v1950, %v2466
        %v2531 = vadd.f32 %v1951, %v2467
        %v2532 = vadd.f32 %v1952, %v2468
        %v2533 = vmul.f32 %v1369, %v2469
        %v2534 = vmul.f32 %v1370, %v2470
        %v2535 = vmul.f32 %v1371, %v2471
        %v2536 = vmul.f32 %v1372, %v2472
        %v2537 = vmul.f32 %v1373, %v2473
        %v2538 = vmul.f32 %v1374, %v2474
        %v2539 = vmul.f32 %v1375, %v2475
        %v2540 = vmul.f32 %v1376, %v2476
        %v2541 = vmul.f32 %v1377, %v2477
        %v2542 = vmul.f32 %v1378, %v2478
        %v2543 = vmul.f32 %v1379, %v2479
        %v2544 = vmul.f32 %v1380, %v2480
        %v2545 = vmul.f32 %v1381, %v2481
        %v2546 = vmul.f32 %v1382, %v2482
        %v2547 = vmul.f32 %v1383, %v2483
        %v2548 = vmul.f32 %v1384, %v2484
        %v2549 = vmul.f32 %v1385, %v2485
        %v2550 = vmul.f32 %v1386, %v2486
        %v2551 = vmul.f32 %v1387, %v2487
        %v2552 = vmul.f32 %v1388, %v2488
        %v2553 = vmul.f32 %v1389, %v2489
        %v2554 = vmul.f32 %v1390, %v2490
        %v2555 = vmul.f32 %v1391, %v2491
        %v2556 = vmul.f32 %v1392, %v2492
        %v2557 = vmul.f32 %v1393, %v2493
        %v2558 = vmul.f32 %v1394, %v2494
        %v2559 = vmul.f32 %v1395, %v2495
        %v2560 = vmul.f32 %v1396, %v2496
        %v2561 = vmul.f32 %v1397, %v2497
        %v2562 = vmul.f32 %v1398, %v2498
        %v2563 = vmul.f32 %v1399, %v2499
        %v2564 = vmul.f32 %v1400, %v2500
        %v2565 = vmul.f32 %v1401, %v2501
        %v2566 = vmul.f32 %v1402, %v2502
        %v2567 = vmul.f32 %v1403, %v2503
        %v2568 = vmul.f32 %v1404, %v2504
        %v2569 = vmul.f32 %v1405, %v2505
        %v2570 = vmul.f32 %v1406, %v2506
        %v2571 = vmul.f32 %v1407, %v2507
        %v2572 = vmul.f32 %v1408, %v2508
        %v2573 = vmul.f32 %v1409, %v2509
        %v2574 = vmul.f32 %v1410, %v2510
        %v2575 = vmul.f32 %v1411, %v2511
        %v2576 = vmul.f32 %v1412, %v2512
        %v2577 = vmul.f32 %v1413, %v2513
        %v2578 = vmul.f32 %v1414, %v2514
        %v2579 = vmul.f32 %v1415, %v2515
        %v2580 = vmul.f32 %v1416, %v2516
        %v2581 = vmul.f32 %v1417, %v2517
        %v2582 = vmul.f32 %v1418, %v2518
        %v2583 = vmul.f32 %v1419, %v2519
        %v2584 = vmul.f32 %v1420, %v2520
        %v2585 = vmul.f32 %v1421, %v2521
        %v2586 = vmul.f32 %v1422, %v2522
        %v2587 = vmul.f32 %v1423, %v2523
        %v2588 = vmul.f32 %v1424, %v2524
        %v2589 = vmul.f32 %v1425, %v2525
        %v2590 = vmul.f32 %v1426, %v2526
        %v2591 = vmul.f32 %v1427, %v2527
        %v2592 = vmul.f32 %v1428, %v2528
        %v2593 = vmul.f32 %v1429, %v2529
        %v2594 = vmul.f32 %v1430, %v2530
        %v2595 = vmul.f32 %v1431, %v2531
        %v2596 = vmul.f32 %v1432, %v2532
        %v2597 = vld [vmem:[%s5] sm:$0xff]
        %v2598 = vld [vmem:[%s5 + $0x8] sm:$0xff]
        %v2599 = vld [vmem:[%s5 + $0x10] sm:$0xff]
        %v2600 = vld [vmem:[%s5 + $0x18] sm:$0xff]
        %v2601 = vld [vmem:[%s5 + $0x20] sm:$0xff]
        %v2602 = vld [vmem:[%s5 + $0x28] sm:$0xff]
        %v2603 = vld [vmem:[%s5 + $0x30] sm:$0xff]
        %v2604 = vld [vmem:[%s5 + $0x38] sm:$0xff]
        %v2605 = vld [vmem:[%s5 + $0x40] sm:$0xff]
        %v2606 = vld [vmem:[%s5 + $0x48] sm:$0xff]
        %v2607 = vld [vmem:[%s5 + $0x50] sm:$0xff]
        %v2608 = vld [vmem:[%s5 + $0x58] sm:$0xff]
        %v2609 = vld [vmem:[%s5 + $0x60] sm:$0xff]
        %v2610 = vld [vmem:[%s5 + $0x68] sm:$0xff]
        %v2611 = vld [vmem:[%s5 + $0x70] sm:$0xff]
        %v2612 = vld [vmem:[%s5 + $0x78] sm:$0xff]
        %s2613 = scalar_lea.vmem %s1, 8
        %v2614 = vld [vmem:[%s2613] sm:$0xff]
        %2615 = vmatprep.subr.mxu0 0.0
        %2616 = vmatpush1.msra.mxu0 %v2614
        %2617 = vmatprep.subr.mxu0 0.0
        %2618 = vmatpush1.msra.mxu0 0.0
        %2619 = vmatprep.subr.mxu0 0.0
        %2620 = vmatpush1.msra.mxu0 0.0
        %2621 = vmatprep.subr.mxu0 0.0
        %2622 = vmatpush1.msra.mxu0 0.0
        %2623 = vmatprep.subr.mxu0 0.0
        %2624 = vmatpush1.msra.mxu0 0.0
        %2625 = vmatprep.subr.mxu0 0.0
        %2626 = vmatpush1.msra.mxu0 0.0
        %2627 = vmatprep.subr.mxu0 0.0
        %2628 = vmatpush1.msra.mxu0 0.0
        %2629 = vmatprep.subr.mxu0 0.0
        %2630 = vmatpush1.msra.mxu0 0.0
        %2631 = vmatprep.subr.mxu0 0.0
        %2632 = vmatpush1.msra.mxu0 0.0
        %2633 = vmatprep.subr.mxu0 0.0
        %2634 = vmatpush1.msra.mxu0 0.0
        %2635 = vmatprep.subr.mxu0 0.0
        %2636 = vmatpush1.msra.mxu0 0.0
        %2637 = vmatprep.subr.mxu0 0.0
        %2638 = vmatpush1.msra.mxu0 0.0
        %2639 = vmatprep.subr.mxu0 0.0
        %2640 = vmatpush1.msra.mxu0 0.0
        %2641 = vmatprep.subr.mxu0 0.0
        %2642 = vmatpush1.msra.mxu0 0.0
        %2643 = vmatprep.subr.mxu0 0.0
        %2644 = vmatpush1.msra.mxu0 0.0
        %2645 = vmatprep.subr.mxu0 0.0
        %2646 = vmatpush1.msra.mxu0 0.0
        %2647 = vmatprep.subr.mxu0 0.0
        %2648 = vmatpush1.msra.mxu0 0.0
        %2649 = vmatprep.subr.mxu0 0.0
        %2650 = vmatpush1.msra.mxu0 0.0
        %2651 = vmatprep.subr.mxu0 0.0
        %2652 = vmatpush1.msra.mxu0 0.0
        %2653 = vmatprep.subr.mxu0 0.0
        %2654 = vmatpush1.msra.mxu0 0.0
        %2655 = vmatprep.subr.mxu0 0.0
        %2656 = vmatpush1.msra.mxu0 0.0
        %2657 = vmatprep.subr.mxu0 0.0
        %2658 = vmatpush1.msra.mxu0 0.0
        %2659 = vmatprep.subr.mxu0 0.0
        %2660 = vmatpush1.msra.mxu0 0.0
        %2661 = vmatprep.subr.mxu0 0.0
        %2662 = vmatpush1.msra.mxu0 0.0
        %2663 = vmatprep.subr.mxu0 0.0
        %2664 = vmatpush1.msra.mxu0 0.0
        %2665 = vmatprep.subr.mxu0 0.0
        %2666 = vmatpush1.msra.mxu0 0.0
        %2667 = vmatprep.subr.mxu0 0.0
        %2668 = vmatpush1.msra.mxu0 0.0
        %2669 = vmatprep.subr.mxu0 0.0
        %2670 = vmatpush1.msra.mxu0 0.0
        %2671 = vmatprep.subr.mxu0 0.0
        %2672 = vmatpush1.msra.mxu0 0.0
        %2673 = vmatprep.subr.mxu0 0.0
        %2674 = vmatpush1.msra.mxu0 0.0
        %2675 = vmatprep.subr.mxu0 0.0
        %2676 = vmatpush1.msra.mxu0 0.0
        %2677 = vmatprep.subr.mxu0 0.0
        %2678 = vmatpush1.msra.mxu0 0.0
        %2679 = vmatprep.mubr.f32.mxu0 0.0
        %2680 = vmatmul.mubr.f32.gmra.mrb[0].mxu0 %v321
        %v2681 = vpop.f32.mrb[0].mxu0
        %v2682 = vadd.f32 0.0, %v2681
        %v2683 = vpop.f32.mrb[0].mxu0
        %2684 = vmatprep.mubr.f32.mxu0 0.0
        %2685 = vmatmul.mubr.f32.gmra.mrb[0].mxu0 %v324
        %v2686 = vpop.f32.mrb[0].mxu0
        %v2687 = vadd.f32 0.0, %v2686
        %v2688 = vpop.f32.mrb[0].mxu0
        %2689 = vmatprep.mubr.f32.mxu0 0.0
        %2690 = vmatmul.mubr.f32.gmra.mrb[0].mxu0 %v327
        %v2691 = vpop.f32.mrb[0].mxu0
        %v2692 = vadd.f32 0.0, %v2691
        %v2693 = vpop.f32.mrb[0].mxu0
        %2694 = vmatprep.mubr.f32.mxu0 0.0
        %2695 = vmatmul.mubr.f32.gmra.mrb[0].mxu0 %v330
        %v2696 = vpop.f32.mrb[0].mxu0
        %v2697 = vadd.f32 0.0, %v2696
        %v2698 = vpop.f32.mrb[0].mxu0
        %2699 = vmatprep.mubr.f32.mxu0 0.0
        %2700 = vmatmul.mubr.f32.gmra.mrb[0].mxu0 %v333
        %v2701 = vpop.f32.mrb[0].mxu0
        %v2702 = vadd.f32 0.0, %v2701
        %v2703 = vpop.f32.mrb[0].mxu0
        %2704 = vmatprep.mubr.f32.mxu0 0.0
        %2705 = vmatmul.mubr.f32.gmra.mrb[0].mxu0 %v336
        %v2706 = vpop.f32.mrb[0].mxu0
        %v2707 = vadd.f32 0.0, %v2706
        %v2708 = vpop.f32.mrb[0].mxu0
        %2709 = vmatprep.mubr.f32.mxu0 0.0
        %2710 = vmatmul.mubr.f32.gmra.mrb[0].mxu0 %v339
        %v2711 = vpop.f32.mrb[0].mxu0
        %v2712 = vadd.f32 0.0, %v2711
        %v2713 = vpop.f32.mrb[0].mxu0
        %2714 = vmatprep.mubr.f32.mxu0 0.0
        %2715 = vmatmul.mubr.f32.gmra.mrb[0].mxu0 %v342
        %v2716 = vpop.f32.mrb[0].mxu0
        %v2717 = vadd.f32 0.0, %v2716
        %v2718 = vpop.f32.mrb[0].mxu0
        %2719 = vmatprep.mubr.f32.mxu0 0.0
        %2720 = vmatmul.mubr.f32.gmra.mrb[0].mxu0 %v345
        %v2721 = vpop.f32.mrb[0].mxu0
        %v2722 = vadd.f32 0.0, %v2721
        %v2723 = vpop.f32.mrb[0].mxu0
        %2724 = vmatprep.mubr.f32.mxu0 0.0
        %2725 = vmatmul.mubr.f32.gmra.mrb[0].mxu0 %v348
        %v2726 = vpop.f32.mrb[0].mxu0
        %v2727 = vadd.f32 0.0, %v2726
        %v2728 = vpop.f32.mrb[0].mxu0
        %2729 = vmatprep.mubr.f32.mxu0 0.0
        %2730 = vmatmul.mubr.f32.gmra.mrb[0].mxu0 %v351
        %v2731 = vpop.f32.mrb[0].mxu0
        %v2732 = vadd.f32 0.0, %v2731
        %v2733 = vpop.f32.mrb[0].mxu0
        %2734 = vmatprep.mubr.f32.mxu0 0.0
        %2735 = vmatmul.mubr.f32.gmra.mrb[0].mxu0 %v354
        %v2736 = vpop.f32.mrb[0].mxu0
        %v2737 = vadd.f32 0.0, %v2736
        %v2738 = vpop.f32.mrb[0].mxu0
        %2739 = vmatprep.mubr.f32.mxu0 0.0
        %2740 = vmatmul.mubr.f32.gmra.mrb[0].mxu0 %v357
        %v2741 = vpop.f32.mrb[0].mxu0
        %v2742 = vadd.f32 0.0, %v2741
        %v2743 = vpop.f32.mrb[0].mxu0
        %2744 = vmatprep.mubr.f32.mxu0 0.0
        %2745 = vmatmul.mubr.f32.gmra.mrb[0].mxu0 %v360
        %v2746 = vpop.f32.mrb[0].mxu0
        %v2747 = vadd.f32 0.0, %v2746
        %v2748 = vpop.f32.mrb[0].mxu0
        %2749 = vmatprep.mubr.f32.mxu0 0.0
        %2750 = vmatmul.mubr.f32.gmra.mrb[0].mxu0 %v363
        %v2751 = vpop.f32.mrb[0].mxu0
        %v2752 = vadd.f32 0.0, %v2751
        %v2753 = vpop.f32.mrb[0].mxu0
        %2754 = vmatprep.mubr.f32.mxu0 0.0
        %2755 = vmatmul.mubr.f32.gmra.mrb[0].mxu0 %v366
        %v2756 = vpop.f32.mrb[0].mxu0
        %v2757 = vadd.f32 0.0, %v2756
        %v2758 = vpop.f32.mrb[0].mxu0
        %2759 = vmatprep.mubr.f32.mxu0 0.0
        %2760 = vmatmul.mubr.f32.gmra.mrb[0].mxu0 %v369
        %v2761 = vpop.f32.mrb[0].mxu0
        %v2762 = vadd.f32 0.0, %v2761
        %v2763 = vpop.f32.mrb[0].mxu0
        %2764 = vmatprep.mubr.f32.mxu0 0.0
        %2765 = vmatmul.mubr.f32.gmra.mrb[0].mxu0 %v372
        %v2766 = vpop.f32.mrb[0].mxu0
        %v2767 = vadd.f32 0.0, %v2766
        %v2768 = vpop.f32.mrb[0].mxu0
        %2769 = vmatprep.mubr.f32.mxu0 0.0
        %2770 = vmatmul.mubr.f32.gmra.mrb[0].mxu0 %v375
        %v2771 = vpop.f32.mrb[0].mxu0
        %v2772 = vadd.f32 0.0, %v2771
        %v2773 = vpop.f32.mrb[0].mxu0
        %2774 = vmatprep.mubr.f32.mxu0 0.0
        %2775 = vmatmul.mubr.f32.gmra.mrb[0].mxu0 %v378
        %v2776 = vpop.f32.mrb[0].mxu0
        %v2777 = vadd.f32 0.0, %v2776
        %v2778 = vpop.f32.mrb[0].mxu0
        %2779 = vmatprep.mubr.f32.mxu0 0.0
        %2780 = vmatmul.mubr.f32.gmra.mrb[0].mxu0 %v381
        %v2781 = vpop.f32.mrb[0].mxu0
        %v2782 = vadd.f32 0.0, %v2781
        %v2783 = vpop.f32.mrb[0].mxu0
        %2784 = vmatprep.mubr.f32.mxu0 0.0
        %2785 = vmatmul.mubr.f32.gmra.mrb[0].mxu0 %v384
        %v2786 = vpop.f32.mrb[0].mxu0
        %v2787 = vadd.f32 0.0, %v2786
        %v2788 = vpop.f32.mrb[0].mxu0
        %2789 = vmatprep.mubr.f32.mxu0 0.0
        %2790 = vmatmul.mubr.f32.gmra.mrb[0].mxu0 %v387
        %v2791 = vpop.f32.mrb[0].mxu0
        %v2792 = vadd.f32 0.0, %v2791
        %v2793 = vpop.f32.mrb[0].mxu0
        %2794 = vmatprep.mubr.f32.mxu0 0.0
        %2795 = vmatmul.mubr.f32.gmra.mrb[0].mxu0 %v390
        %v2796 = vpop.f32.mrb[0].mxu0
        %v2797 = vadd.f32 0.0, %v2796
        %v2798 = vpop.f32.mrb[0].mxu0
        %2799 = vmatprep.mubr.f32.mxu0 0.0
        %2800 = vmatmul.mubr.f32.gmra.mrb[0].mxu0 %v393
        %v2801 = vpop.f32.mrb[0].mxu0
        %v2802 = vadd.f32 0.0, %v2801
        %v2803 = vpop.f32.mrb[0].mxu0
        %2804 = vmatprep.mubr.f32.mxu0 0.0
        %2805 = vmatmul.mubr.f32.gmra.mrb[0].mxu0 %v396
        %v2806 = vpop.f32.mrb[0].mxu0
        %v2807 = vadd.f32 0.0, %v2806
        %v2808 = vpop.f32.mrb[0].mxu0
        %2809 = vmatprep.mubr.f32.mxu0 0.0
        %2810 = vmatmul.mubr.f32.gmra.mrb[0].mxu0 %v399
        %v2811 = vpop.f32.mrb[0].mxu0
        %v2812 = vadd.f32 0.0, %v2811
        %v2813 = vpop.f32.mrb[0].mxu0
        %2814 = vmatprep.mubr.f32.mxu0 0.0
        %2815 = vmatmul.mubr.f32.gmra.mrb[0].mxu0 %v402
        %v2816 = vpop.f32.mrb[0].mxu0
        %v2817 = vadd.f32 0.0, %v2816
        %v2818 = vpop.f32.mrb[0].mxu0
        %2819 = vmatprep.mubr.f32.mxu0 0.0
        %2820 = vmatmul.mubr.f32.gmra.mrb[0].mxu0 %v405
        %v2821 = vpop.f32.mrb[0].mxu0
        %v2822 = vadd.f32 0.0, %v2821
        %v2823 = vpop.f32.mrb[0].mxu0
        %2824 = vmatprep.mubr.f32.mxu0 0.0
        %2825 = vmatmul.mubr.f32.gmra.mrb[0].mxu0 %v408
        %v2826 = vpop.f32.mrb[0].mxu0
        %v2827 = vadd.f32 0.0, %v2826
        %v2828 = vpop.f32.mrb[0].mxu0
        %2829 = vmatprep.mubr.f32.mxu0 0.0
        %2830 = vmatmul.mubr.f32.gmra.mrb[0].mxu0 %v411
        %v2831 = vpop.f32.mrb[0].mxu0
        %v2832 = vadd.f32 0.0, %v2831
        %v2833 = vpop.f32.mrb[0].mxu0
        %2834 = vmatprep.mubr.f32.mxu0 0.0
        %2835 = vmatmul.mubr.f32.gmra.mrb[0].mxu0 %v414
        %v2836 = vpop.f32.mrb[0].mxu0
        %v2837 = vadd.f32 0.0, %v2836
        %v2838 = vpop.f32.mrb[0].mxu0
        %2839 = vmatprep.mubr.f32.mxu0 0.0
        %2840 = vmatmul.mubr.f32.gmra.mrb[0].mxu0 %v417
        %v2841 = vpop.f32.mrb[0].mxu0
        %v2842 = vadd.f32 0.0, %v2841
        %v2843 = vpop.f32.mrb[0].mxu0
        %2844 = vmatprep.mubr.f32.mxu0 0.0
        %2845 = vmatmul.mubr.f32.gmra.mrb[0].mxu0 %v420
        %v2846 = vpop.f32.mrb[0].mxu0
        %v2847 = vadd.f32 0.0, %v2846
        %v2848 = vpop.f32.mrb[0].mxu0
        %2849 = vmatprep.mubr.f32.mxu0 0.0
        %2850 = vmatmul.mubr.f32.gmra.mrb[0].mxu0 %v423
        %v2851 = vpop.f32.mrb[0].mxu0
        %v2852 = vadd.f32 0.0, %v2851
        %v2853 = vpop.f32.mrb[0].mxu0
        %2854 = vmatprep.mubr.f32.mxu0 0.0
        %2855 = vmatmul.mubr.f32.gmra.mrb[0].mxu0 %v426
        %v2856 = vpop.f32.mrb[0].mxu0
        %v2857 = vadd.f32 0.0, %v2856
        %v2858 = vpop.f32.mrb[0].mxu0
        %2859 = vmatprep.mubr.f32.mxu0 0.0
        %2860 = vmatmul.mubr.f32.gmra.mrb[0].mxu0 %v429
        %v2861 = vpop.f32.mrb[0].mxu0
        %v2862 = vadd.f32 0.0, %v2861
        %v2863 = vpop.f32.mrb[0].mxu0
        %2864 = vmatprep.mubr.f32.mxu0 0.0
        %2865 = vmatmul.mubr.f32.gmra.mrb[0].mxu0 %v432
        %v2866 = vpop.f32.mrb[0].mxu0
        %v2867 = vadd.f32 0.0, %v2866
        %v2868 = vpop.f32.mrb[0].mxu0
        %2869 = vmatprep.mubr.f32.mxu0 0.0
        %2870 = vmatmul.mubr.f32.gmra.mrb[0].mxu0 %v435
        %v2871 = vpop.f32.mrb[0].mxu0
        %v2872 = vadd.f32 0.0, %v2871
        %v2873 = vpop.f32.mrb[0].mxu0
        %2874 = vmatprep.mubr.f32.mxu0 0.0
        %2875 = vmatmul.mubr.f32.gmra.mrb[0].mxu0 %v438
        %v2876 = vpop.f32.mrb[0].mxu0
        %v2877 = vadd.f32 0.0, %v2876
        %v2878 = vpop.f32.mrb[0].mxu0
        %2879 = vmatprep.mubr.f32.mxu0 0.0
        %2880 = vmatmul.mubr.f32.gmra.mrb[0].mxu0 %v441
        %v2881 = vpop.f32.mrb[0].mxu0
        %v2882 = vadd.f32 0.0, %v2881
        %v2883 = vpop.f32.mrb[0].mxu0
        %2884 = vmatprep.mubr.f32.mxu0 0.0
        %2885 = vmatmul.mubr.f32.gmra.mrb[0].mxu0 %v444
        %v2886 = vpop.f32.mrb[0].mxu0
        %v2887 = vadd.f32 0.0, %v2886
        %v2888 = vpop.f32.mrb[0].mxu0
        %2889 = vmatprep.mubr.f32.mxu0 0.0
        %2890 = vmatmul.mubr.f32.gmra.mrb[0].mxu0 %v447
        %v2891 = vpop.f32.mrb[0].mxu0
        %v2892 = vadd.f32 0.0, %v2891
        %v2893 = vpop.f32.mrb[0].mxu0
        %2894 = vmatprep.mubr.f32.mxu0 0.0
        %2895 = vmatmul.mubr.f32.gmra.mrb[0].mxu0 %v450
        %v2896 = vpop.f32.mrb[0].mxu0
        %v2897 = vadd.f32 0.0, %v2896
        %v2898 = vpop.f32.mrb[0].mxu0
        %2899 = vmatprep.mubr.f32.mxu0 0.0
        %2900 = vmatmul.mubr.f32.gmra.mrb[0].mxu0 %v453
        %v2901 = vpop.f32.mrb[0].mxu0
        %v2902 = vadd.f32 0.0, %v2901
        %v2903 = vpop.f32.mrb[0].mxu0
        %2904 = vmatprep.mubr.f32.mxu0 0.0
        %2905 = vmatmul.mubr.f32.gmra.mrb[0].mxu0 %v456
        %v2906 = vpop.f32.mrb[0].mxu0
        %v2907 = vadd.f32 0.0, %v2906
        %v2908 = vpop.f32.mrb[0].mxu0
        %2909 = vmatprep.mubr.f32.mxu0 0.0
        %2910 = vmatmul.mubr.f32.gmra.mrb[0].mxu0 %v459
        %v2911 = vpop.f32.mrb[0].mxu0
        %v2912 = vadd.f32 0.0, %v2911
        %v2913 = vpop.f32.mrb[0].mxu0
        %2914 = vmatprep.mubr.f32.mxu0 0.0
        %2915 = vmatmul.mubr.f32.gmra.mrb[0].mxu0 %v462
        %v2916 = vpop.f32.mrb[0].mxu0
        %v2917 = vadd.f32 0.0, %v2916
        %v2918 = vpop.f32.mrb[0].mxu0
        %2919 = vmatprep.mubr.f32.mxu0 0.0
        %2920 = vmatmul.mubr.f32.gmra.mrb[0].mxu0 %v465
        %v2921 = vpop.f32.mrb[0].mxu0
        %v2922 = vadd.f32 0.0, %v2921
        %v2923 = vpop.f32.mrb[0].mxu0
        %2924 = vmatprep.mubr.f32.mxu0 0.0
        %2925 = vmatmul.mubr.f32.gmra.mrb[0].mxu0 %v468
        %v2926 = vpop.f32.mrb[0].mxu0
        %v2927 = vadd.f32 0.0, %v2926
        %v2928 = vpop.f32.mrb[0].mxu0
        %2929 = vmatprep.mubr.f32.mxu0 0.0
        %2930 = vmatmul.mubr.f32.gmra.mrb[0].mxu0 %v471
        %v2931 = vpop.f32.mrb[0].mxu0
        %v2932 = vadd.f32 0.0, %v2931
        %v2933 = vpop.f32.mrb[0].mxu0
        %2934 = vmatprep.mubr.f32.mxu0 0.0
        %2935 = vmatmul.mubr.f32.gmra.mrb[0].mxu0 %v474
        %v2936 = vpop.f32.mrb[0].mxu0
        %v2937 = vadd.f32 0.0, %v2936
        %v2938 = vpop.f32.mrb[0].mxu0
        %2939 = vmatprep.mubr.f32.mxu0 0.0
        %2940 = vmatmul.mubr.f32.gmra.mrb[0].mxu0 %v477
        %v2941 = vpop.f32.mrb[0].mxu0
        %v2942 = vadd.f32 0.0, %v2941
        %v2943 = vpop.f32.mrb[0].mxu0
        %2944 = vmatprep.mubr.f32.mxu0 0.0
        %2945 = vmatmul.mubr.f32.gmra.mrb[0].mxu0 %v480
        %v2946 = vpop.f32.mrb[0].mxu0
        %v2947 = vadd.f32 0.0, %v2946
        %v2948 = vpop.f32.mrb[0].mxu0
        %2949 = vmatprep.mubr.f32.mxu0 0.0
        %2950 = vmatmul.mubr.f32.gmra.mrb[0].mxu0 %v483
        %v2951 = vpop.f32.mrb[0].mxu0
        %v2952 = vadd.f32 0.0, %v2951
        %v2953 = vpop.f32.mrb[0].mxu0
        %2954 = vmatprep.mubr.f32.mxu0 0.0
        %2955 = vmatmul.mubr.f32.gmra.mrb[0].mxu0 %v486
        %v2956 = vpop.f32.mrb[0].mxu0
        %v2957 = vadd.f32 0.0, %v2956
        %v2958 = vpop.f32.mrb[0].mxu0
        %2959 = vmatprep.mubr.f32.mxu0 0.0
        %2960 = vmatmul.mubr.f32.gmra.mrb[0].mxu0 %v489
        %v2961 = vpop.f32.mrb[0].mxu0
        %v2962 = vadd.f32 0.0, %v2961
        %v2963 = vpop.f32.mrb[0].mxu0
        %2964 = vmatprep.mubr.f32.mxu0 0.0
        %2965 = vmatmul.mubr.f32.gmra.mrb[0].mxu0 %v492
        %v2966 = vpop.f32.mrb[0].mxu0
        %v2967 = vadd.f32 0.0, %v2966
        %v2968 = vpop.f32.mrb[0].mxu0
        %2969 = vmatprep.mubr.f32.mxu0 0.0
        %2970 = vmatmul.mubr.f32.gmra.mrb[0].mxu0 %v495
        %v2971 = vpop.f32.mrb[0].mxu0
        %v2972 = vadd.f32 0.0, %v2971
        %v2973 = vpop.f32.mrb[0].mxu0
        %2974 = vmatprep.mubr.f32.mxu0 0.0
        %2975 = vmatmul.mubr.f32.gmra.mrb[0].mxu0 %v498
        %v2976 = vpop.f32.mrb[0].mxu0
        %v2977 = vadd.f32 0.0, %v2976
        %v2978 = vpop.f32.mrb[0].mxu0
        %2979 = vmatprep.mubr.f32.mxu0 0.0
        %2980 = vmatmul.mubr.f32.gmra.mrb[0].mxu0 %v501
        %v2981 = vpop.f32.mrb[0].mxu0
        %v2982 = vadd.f32 0.0, %v2981
        %v2983 = vpop.f32.mrb[0].mxu0
        %2984 = vmatprep.mubr.f32.mxu0 0.0
        %2985 = vmatmul.mubr.f32.gmra.mrb[0].mxu0 %v504
        %v2986 = vpop.f32.mrb[0].mxu0
        %v2987 = vadd.f32 0.0, %v2986
        %v2988 = vpop.f32.mrb[0].mxu0
        %2989 = vmatprep.mubr.f32.mxu0 0.0
        %2990 = vmatmul.mubr.f32.gmra.mrb[0].mxu0 %v507
        %v2991 = vpop.f32.mrb[0].mxu0
        %v2992 = vadd.f32 0.0, %v2991
        %v2993 = vpop.f32.mrb[0].mxu0
        %2994 = vmatprep.mubr.f32.mxu0 0.0
        %2995 = vmatmul.mubr.f32.gmra.mrb[0].mxu0 %v510
        %v2996 = vpop.f32.mrb[0].mxu0
        %v2997 = vadd.f32 0.0, %v2996
        %v2998 = vpop.f32.mrb[0].mxu0
        %2999 = vdwg.mxu0
        %v3000 = vmax.f32 %v2682, 0.0
        %v3001 = vmax.f32 %v2687, 0.0
        %v3002 = vmax.f32 %v2692, 0.0
        %v3003 = vmax.f32 %v2697, 0.0
        %v3004 = vmax.f32 %v2702, 0.0
        %v3005 = vmax.f32 %v2707, 0.0
        %v3006 = vmax.f32 %v2712, 0.0
        %v3007 = vmax.f32 %v2717, 0.0
        %v3008 = vmax.f32 %v2722, 0.0
        %v3009 = vmax.f32 %v2727, 0.0
        %v3010 = vmax.f32 %v2732, 0.0
        %v3011 = vmax.f32 %v2737, 0.0
        %v3012 = vmax.f32 %v2742, 0.0
        %v3013 = vmax.f32 %v2747, 0.0
        %v3014 = vmax.f32 %v2752, 0.0
        %v3015 = vmax.f32 %v2757, 0.0
        %v3016 = vmax.f32 %v2762, 0.0
        %v3017 = vmax.f32 %v2767, 0.0
        %v3018 = vmax.f32 %v2772, 0.0
        %v3019 = vmax.f32 %v2777, 0.0
        %v3020 = vmax.f32 %v2782, 0.0
        %v3021 = vmax.f32 %v2787, 0.0
        %v3022 = vmax.f32 %v2792, 0.0
        %v3023 = vmax.f32 %v2797, 0.0
        %v3024 = vmax.f32 %v2802, 0.0
        %v3025 = vmax.f32 %v2807, 0.0
        %v3026 = vmax.f32 %v2812, 0.0
        %v3027 = vmax.f32 %v2817, 0.0
        %v3028 = vmax.f32 %v2822, 0.0
        %v3029 = vmax.f32 %v2827, 0.0
        %v3030 = vmax.f32 %v2832, 0.0
        %v3031 = vmax.f32 %v2837, 0.0
        %v3032 = vmax.f32 %v2842, 0.0
        %v3033 = vmax.f32 %v2847, 0.0
        %v3034 = vmax.f32 %v2852, 0.0
        %v3035 = vmax.f32 %v2857, 0.0
        %v3036 = vmax.f32 %v2862, 0.0
        %v3037 = vmax.f32 %v2867, 0.0
        %v3038 = vmax.f32 %v2872, 0.0
        %v3039 = vmax.f32 %v2877, 0.0
        %v3040 = vmax.f32 %v2882, 0.0
        %v3041 = vmax.f32 %v2887, 0.0
        %v3042 = vmax.f32 %v2892, 0.0
        %v3043 = vmax.f32 %v2897, 0.0
        %v3044 = vmax.f32 %v2902, 0.0
        %v3045 = vmax.f32 %v2907, 0.0
        %v3046 = vmax.f32 %v2912, 0.0
        %v3047 = vmax.f32 %v2917, 0.0
        %v3048 = vmax.f32 %v2922, 0.0
        %v3049 = vmax.f32 %v2927, 0.0
        %v3050 = vmax.f32 %v2932, 0.0
        %v3051 = vmax.f32 %v2937, 0.0
        %v3052 = vmax.f32 %v2942, 0.0
        %v3053 = vmax.f32 %v2947, 0.0
        %v3054 = vmax.f32 %v2952, 0.0
        %v3055 = vmax.f32 %v2957, 0.0
        %v3056 = vmax.f32 %v2962, 0.0
        %v3057 = vmax.f32 %v2967, 0.0
        %v3058 = vmax.f32 %v2972, 0.0
        %v3059 = vmax.f32 %v2977, 0.0
        %v3060 = vmax.f32 %v2982, 0.0
        %v3061 = vmax.f32 %v2987, 0.0
        %v3062 = vmax.f32 %v2992, 0.0
        %v3063 = vmax.f32 %v2997, 0.0
        %s3064 = scalar_lea.vmem %s2, 128
        %v3065 = vld [vmem:[%s3064] sm:$0xff]
        %v3066 = vld [vmem:[%s3064 + $0x8] sm:$0xff]
        %v3067 = vld [vmem:[%s3064 + $0x10] sm:$0xff]
        %v3068 = vld [vmem:[%s3064 + $0x18] sm:$0xff]
        %v3069 = vld [vmem:[%s3064 + $0x20] sm:$0xff]
        %v3070 = vld [vmem:[%s3064 + $0x28] sm:$0xff]
        %v3071 = vld [vmem:[%s3064 + $0x30] sm:$0xff]
        %v3072 = vld [vmem:[%s3064 + $0x38] sm:$0xff]
        %v3073 = vld [vmem:[%s3064 + $0x40] sm:$0xff]
        %v3074 = vld [vmem:[%s3064 + $0x48] sm:$0xff]
        %v3075 = vld [vmem:[%s3064 + $0x50] sm:$0xff]
        %v3076 = vld [vmem:[%s3064 + $0x58] sm:$0xff]
        %v3077 = vld [vmem:[%s3064 + $0x60] sm:$0xff]
        %v3078 = vld [vmem:[%s3064 + $0x68] sm:$0xff]
        %v3079 = vld [vmem:[%s3064 + $0x70] sm:$0xff]
        %v3080 = vld [vmem:[%s3064 + $0x78] sm:$0xff]
        %s3081 = scalar_lea.vmem %s3, 1
        %v3082 = vld [vmem:[%s3081] sm:$0x1]
        %v3084 = vlaneseq
        %v3085 = vshrl.u32 %v3084, 7
        %v3086 = vsub.s32 0, %v3085
        %v3087 = vrot.slane %v3082, %v3086
        %3089 = vmatprep.subr.mxu0 0.0
        %3090 = vmatpush1.msra.mxu0 %v3065
        %3091 = vmatprep.subr.mxu0 0.0
        %3092 = vmatpush1.msra.mxu0 %v3066
        %3093 = vmatprep.subr.mxu0 0.0
        %3094 = vmatpush1.msra.mxu0 %v3067
        %3095 = vmatprep.subr.mxu0 0.0
        %3096 = vmatpush1.msra.mxu0 %v3068
        %3097 = vmatprep.subr.mxu0 0.0
        %3098 = vmatpush1.msra.mxu0 %v3069
        %3099 = vmatprep.subr.mxu0 0.0
        %3100 = vmatpush1.msra.mxu0 %v3070
        %3101 = vmatprep.subr.mxu0 0.0
        %3102 = vmatpush1.msra.mxu0 %v3071
        %3103 = vmatprep.subr.mxu0 0.0
        %3104 = vmatpush1.msra.mxu0 %v3072
        %3105 = vmatprep.subr.mxu0 0.0
        %3106 = vmatpush1.msra.mxu0 %v3073
        %3107 = vmatprep.subr.mxu0 0.0
        %3108 = vmatpush1.msra.mxu0 %v3074
        %3109 = vmatprep.subr.mxu0 0.0
        %3110 = vmatpush1.msra.mxu0 %v3075
        %3111 = vmatprep.subr.mxu0 0.0
        %3112 = vmatpush1.msra.mxu0 %v3076
        %3113 = vmatprep.subr.mxu0 0.0
        %3114 = vmatpush1.msra.mxu0 %v3077
        %3115 = vmatprep.subr.mxu0 0.0
        %3116 = vmatpush1.msra.mxu0 %v3078
        %3117 = vmatprep.subr.mxu0 0.0
        %3118 = vmatpush1.msra.mxu0 %v3079
        %3119 = vmatprep.subr.mxu0 0.0
        %3120 = vmatpush1.msra.mxu0 %v3080
        %3121 = vmatprep.subr.mxu0 0.0
        %3122 = vmatpush1.msra.mxu0 0.0
        %3123 = vmatprep.subr.mxu0 0.0
        %3124 = vmatpush1.msra.mxu0 0.0
        %3125 = vmatprep.subr.mxu0 0.0
        %3126 = vmatpush1.msra.mxu0 0.0
        %3127 = vmatprep.subr.mxu0 0.0
        %3128 = vmatpush1.msra.mxu0 0.0
        %3129 = vmatprep.subr.mxu0 0.0
        %3130 = vmatpush1.msra.mxu0 0.0
        %3131 = vmatprep.subr.mxu0 0.0
        %3132 = vmatpush1.msra.mxu0 0.0
        %3133 = vmatprep.subr.mxu0 0.0
        %3134 = vmatpush1.msra.mxu0 0.0
        %3135 = vmatprep.subr.mxu0 0.0
        %3136 = vmatpush1.msra.mxu0 0.0
        %3137 = vmatprep.subr.mxu0 0.0
        %3138 = vmatpush1.msra.mxu0 0.0
        %3139 = vmatprep.subr.mxu0 0.0
        %3140 = vmatpush1.msra.mxu0 0.0
        %3141 = vmatprep.subr.mxu0 0.0
        %3142 = vmatpush1.msra.mxu0 0.0
        %3143 = vmatprep.subr.mxu0 0.0
        %3144 = vmatpush1.msra.mxu0 0.0
        %3145 = vmatprep.subr.mxu0 0.0
        %3146 = vmatpush1.msra.mxu0 0.0
        %3147 = vmatprep.subr.mxu0 0.0
        %3148 = vmatpush1.msra.mxu0 0.0
        %3149 = vmatprep.subr.mxu0 0.0
        %3150 = vmatpush1.msra.mxu0 0.0
        %3151 = vmatprep.subr.mxu0 0.0
        %3152 = vmatpush1.msra.mxu0 0.0
        %3153 = vmatprep.mubr.f32.mxu0 0.0
        %3154 = vmatmul.mubr.f32.gmra.mrb[0].mxu0 %v3000
        %v3155 = vpop.f32.mrb[0].mxu0
        %v3156 = vadd.f32 %v3087, %v3155
        %v3157 = vpop.f32.mrb[0].mxu0
        %3158 = vmatprep.mubr.f32.mxu0 0.0
        %3159 = vmatmul.mubr.f32.gmra.mrb[0].mxu0 %v3001
        %v3160 = vpop.f32.mrb[0].mxu0
        %v3161 = vadd.f32 %v3087, %v3160
        %v3162 = vpop.f32.mrb[0].mxu0
        %3163 = vmatprep.mubr.f32.mxu0 0.0
        %3164 = vmatmul.mubr.f32.gmra.mrb[0].mxu0 %v3002
        %v3165 = vpop.f32.mrb[0].mxu0
        %v3166 = vadd.f32 %v3087, %v3165
        %v3167 = vpop.f32.mrb[0].mxu0
        %3168 = vmatprep.mubr.f32.mxu0 0.0
        %3169 = vmatmul.mubr.f32.gmra.mrb[0].mxu0 %v3003
        %v3170 = vpop.f32.mrb[0].mxu0
        %v3171 = vadd.f32 %v3087, %v3170
        %v3172 = vpop.f32.mrb[0].mxu0
        %3173 = vmatprep.mubr.f32.mxu0 0.0
        %3174 = vmatmul.mubr.f32.gmra.mrb[0].mxu0 %v3004
        %v3175 = vpop.f32.mrb[0].mxu0
        %v3176 = vadd.f32 %v3087, %v3175
        %v3177 = vpop.f32.mrb[0].mxu0
        %3178 = vmatprep.mubr.f32.mxu0 0.0
        %3179 = vmatmul.mubr.f32.gmra.mrb[0].mxu0 %v3005
        %v3180 = vpop.f32.mrb[0].mxu0
        %v3181 = vadd.f32 %v3087, %v3180
        %v3182 = vpop.f32.mrb[0].mxu0
        %3183 = vmatprep.mubr.f32.mxu0 0.0
        %3184 = vmatmul.mubr.f32.gmra.mrb[0].mxu0 %v3006
        %v3185 = vpop.f32.mrb[0].mxu0
        %v3186 = vadd.f32 %v3087, %v3185
        %v3187 = vpop.f32.mrb[0].mxu0
        %3188 = vmatprep.mubr.f32.mxu0 0.0
        %3189 = vmatmul.mubr.f32.gmra.mrb[0].mxu0 %v3007
        %v3190 = vpop.f32.mrb[0].mxu0
        %v3191 = vadd.f32 %v3087, %v3190
        %v3192 = vpop.f32.mrb[0].mxu0
        %3193 = vmatprep.mubr.f32.mxu0 0.0
        %3194 = vmatmul.mubr.f32.gmra.mrb[0].mxu0 %v3008
        %v3195 = vpop.f32.mrb[0].mxu0
        %v3196 = vadd.f32 %v3087, %v3195
        %v3197 = vpop.f32.mrb[0].mxu0
        %3198 = vmatprep.mubr.f32.mxu0 0.0
        %3199 = vmatmul.mubr.f32.gmra.mrb[0].mxu0 %v3009
        %v3200 = vpop.f32.mrb[0].mxu0
        %v3201 = vadd.f32 %v3087, %v3200
        %v3202 = vpop.f32.mrb[0].mxu0
        %3203 = vmatprep.mubr.f32.mxu0 0.0
        %3204 = vmatmul.mubr.f32.gmra.mrb[0].mxu0 %v3010
        %v3205 = vpop.f32.mrb[0].mxu0
        %v3206 = vadd.f32 %v3087, %v3205
        %v3207 = vpop.f32.mrb[0].mxu0
        %3208 = vmatprep.mubr.f32.mxu0 0.0
        %3209 = vmatmul.mubr.f32.gmra.mrb[0].mxu0 %v3011
        %v3210 = vpop.f32.mrb[0].mxu0
        %v3211 = vadd.f32 %v3087, %v3210
        %v3212 = vpop.f32.mrb[0].mxu0
        %3213 = vmatprep.mubr.f32.mxu0 0.0
        %3214 = vmatmul.mubr.f32.gmra.mrb[0].mxu0 %v3012
        %v3215 = vpop.f32.mrb[0].mxu0
        %v3216 = vadd.f32 %v3087, %v3215
        %v3217 = vpop.f32.mrb[0].mxu0
        %3218 = vmatprep.mubr.f32.mxu0 0.0
        %3219 = vmatmul.mubr.f32.gmra.mrb[0].mxu0 %v3013
        %v3220 = vpop.f32.mrb[0].mxu0
        %v3221 = vadd.f32 %v3087, %v3220
        %v3222 = vpop.f32.mrb[0].mxu0
        %3223 = vmatprep.mubr.f32.mxu0 0.0
        %3224 = vmatmul.mubr.f32.gmra.mrb[0].mxu0 %v3014
        %v3225 = vpop.f32.mrb[0].mxu0
        %v3226 = vadd.f32 %v3087, %v3225
        %v3227 = vpop.f32.mrb[0].mxu0
        %3228 = vmatprep.mubr.f32.mxu0 0.0
        %3229 = vmatmul.mubr.f32.gmra.mrb[0].mxu0 %v3015
        %v3230 = vpop.f32.mrb[0].mxu0
        %v3231 = vadd.f32 %v3087, %v3230
        %v3232 = vpop.f32.mrb[0].mxu0
        %3233 = vmatprep.mubr.f32.mxu0 0.0
        %3234 = vmatmul.mubr.f32.gmra.mrb[0].mxu0 %v3016
        %v3235 = vpop.f32.mrb[0].mxu0
        %v3236 = vadd.f32 %v3087, %v3235
        %v3237 = vpop.f32.mrb[0].mxu0
        %3238 = vmatprep.mubr.f32.mxu0 0.0
        %3239 = vmatmul.mubr.f32.gmra.mrb[0].mxu0 %v3017
        %v3240 = vpop.f32.mrb[0].mxu0
        %v3241 = vadd.f32 %v3087, %v3240
        %v3242 = vpop.f32.mrb[0].mxu0
        %3243 = vmatprep.mubr.f32.mxu0 0.0
        %3244 = vmatmul.mubr.f32.gmra.mrb[0].mxu0 %v3018
        %v3245 = vpop.f32.mrb[0].mxu0
        %v3246 = vadd.f32 %v3087, %v3245
        %v3247 = vpop.f32.mrb[0].mxu0
        %3248 = vmatprep.mubr.f32.mxu0 0.0
        %3249 = vmatmul.mubr.f32.gmra.mrb[0].mxu0 %v3019
        %v3250 = vpop.f32.mrb[0].mxu0
        %v3251 = vadd.f32 %v3087, %v3250
        %v3252 = vpop.f32.mrb[0].mxu0
        %3253 = vmatprep.mubr.f32.mxu0 0.0
        %3254 = vmatmul.mubr.f32.gmra.mrb[0].mxu0 %v3020
        %v3255 = vpop.f32.mrb[0].mxu0
        %v3256 = vadd.f32 %v3087, %v3255
        %v3257 = vpop.f32.mrb[0].mxu0
        %3258 = vmatprep.mubr.f32.mxu0 0.0
        %3259 = vmatmul.mubr.f32.gmra.mrb[0].mxu0 %v3021
        %v3260 = vpop.f32.mrb[0].mxu0
        %v3261 = vadd.f32 %v3087, %v3260
        %v3262 = vpop.f32.mrb[0].mxu0
        %3263 = vmatprep.mubr.f32.mxu0 0.0
        %3264 = vmatmul.mubr.f32.gmra.mrb[0].mxu0 %v3022
        %v3265 = vpop.f32.mrb[0].mxu0
        %v3266 = vadd.f32 %v3087, %v3265
        %v3267 = vpop.f32.mrb[0].mxu0
        %3268 = vmatprep.mubr.f32.mxu0 0.0
        %3269 = vmatmul.mubr.f32.gmra.mrb[0].mxu0 %v3023
        %v3270 = vpop.f32.mrb[0].mxu0
        %v3271 = vadd.f32 %v3087, %v3270
        %v3272 = vpop.f32.mrb[0].mxu0
        %3273 = vmatprep.mubr.f32.mxu0 0.0
        %3274 = vmatmul.mubr.f32.gmra.mrb[0].mxu0 %v3024
        %v3275 = vpop.f32.mrb[0].mxu0
        %v3276 = vadd.f32 %v3087, %v3275
        %v3277 = vpop.f32.mrb[0].mxu0
        %3278 = vmatprep.mubr.f32.mxu0 0.0
        %3279 = vmatmul.mubr.f32.gmra.mrb[0].mxu0 %v3025
        %v3280 = vpop.f32.mrb[0].mxu0
        %v3281 = vadd.f32 %v3087, %v3280
        %v3282 = vpop.f32.mrb[0].mxu0
        %3283 = vmatprep.mubr.f32.mxu0 0.0
        %3284 = vmatmul.mubr.f32.gmra.mrb[0].mxu0 %v3026
        %v3285 = vpop.f32.mrb[0].mxu0
        %v3286 = vadd.f32 %v3087, %v3285
        %v3287 = vpop.f32.mrb[0].mxu0
        %3288 = vmatprep.mubr.f32.mxu0 0.0
        %3289 = vmatmul.mubr.f32.gmra.mrb[0].mxu0 %v3027
        %v3290 = vpop.f32.mrb[0].mxu0
        %v3291 = vadd.f32 %v3087, %v3290
        %v3292 = vpop.f32.mrb[0].mxu0
        %3293 = vmatprep.mubr.f32.mxu0 0.0
        %3294 = vmatmul.mubr.f32.gmra.mrb[0].mxu0 %v3028
        %v3295 = vpop.f32.mrb[0].mxu0
        %v3296 = vadd.f32 %v3087, %v3295
        %v3297 = vpop.f32.mrb[0].mxu0
        %3298 = vmatprep.mubr.f32.mxu0 0.0
        %3299 = vmatmul.mubr.f32.gmra.mrb[0].mxu0 %v3029
        %v3300 = vpop.f32.mrb[0].mxu0
        %v3301 = vadd.f32 %v3087, %v3300
        %v3302 = vpop.f32.mrb[0].mxu0
        %3303 = vmatprep.mubr.f32.mxu0 0.0
        %3304 = vmatmul.mubr.f32.gmra.mrb[0].mxu0 %v3030
        %v3305 = vpop.f32.mrb[0].mxu0
        %v3306 = vadd.f32 %v3087, %v3305
        %v3307 = vpop.f32.mrb[0].mxu0
        %3308 = vmatprep.mubr.f32.mxu0 0.0
        %3309 = vmatmul.mubr.f32.gmra.mrb[0].mxu0 %v3031
        %v3310 = vpop.f32.mrb[0].mxu0
        %v3311 = vadd.f32 %v3087, %v3310
        %v3312 = vpop.f32.mrb[0].mxu0
        %3313 = vmatprep.mubr.f32.mxu0 0.0
        %3314 = vmatmul.mubr.f32.gmra.mrb[0].mxu0 %v3032
        %v3315 = vpop.f32.mrb[0].mxu0
        %v3316 = vadd.f32 %v3087, %v3315
        %v3317 = vpop.f32.mrb[0].mxu0
        %3318 = vmatprep.mubr.f32.mxu0 0.0
        %3319 = vmatmul.mubr.f32.gmra.mrb[0].mxu0 %v3033
        %v3320 = vpop.f32.mrb[0].mxu0
        %v3321 = vadd.f32 %v3087, %v3320
        %v3322 = vpop.f32.mrb[0].mxu0
        %3323 = vmatprep.mubr.f32.mxu0 0.0
        %3324 = vmatmul.mubr.f32.gmra.mrb[0].mxu0 %v3034
        %v3325 = vpop.f32.mrb[0].mxu0
        %v3326 = vadd.f32 %v3087, %v3325
        %v3327 = vpop.f32.mrb[0].mxu0
        %3328 = vmatprep.mubr.f32.mxu0 0.0
        %3329 = vmatmul.mubr.f32.gmra.mrb[0].mxu0 %v3035
        %v3330 = vpop.f32.mrb[0].mxu0
        %v3331 = vadd.f32 %v3087, %v3330
        %v3332 = vpop.f32.mrb[0].mxu0
        %3333 = vmatprep.mubr.f32.mxu0 0.0
        %3334 = vmatmul.mubr.f32.gmra.mrb[0].mxu0 %v3036
        %v3335 = vpop.f32.mrb[0].mxu0
        %v3336 = vadd.f32 %v3087, %v3335
        %v3337 = vpop.f32.mrb[0].mxu0
        %3338 = vmatprep.mubr.f32.mxu0 0.0
        %3339 = vmatmul.mubr.f32.gmra.mrb[0].mxu0 %v3037
        %v3340 = vpop.f32.mrb[0].mxu0
        %v3341 = vadd.f32 %v3087, %v3340
        %v3342 = vpop.f32.mrb[0].mxu0
        %3343 = vmatprep.mubr.f32.mxu0 0.0
        %3344 = vmatmul.mubr.f32.gmra.mrb[0].mxu0 %v3038
        %v3345 = vpop.f32.mrb[0].mxu0
        %v3346 = vadd.f32 %v3087, %v3345
        %v3347 = vpop.f32.mrb[0].mxu0
        %3348 = vmatprep.mubr.f32.mxu0 0.0
        %3349 = vmatmul.mubr.f32.gmra.mrb[0].mxu0 %v3039
        %v3350 = vpop.f32.mrb[0].mxu0
        %v3351 = vadd.f32 %v3087, %v3350
        %v3352 = vpop.f32.mrb[0].mxu0
        %3353 = vmatprep.mubr.f32.mxu0 0.0
        %3354 = vmatmul.mubr.f32.gmra.mrb[0].mxu0 %v3040
        %v3355 = vpop.f32.mrb[0].mxu0
        %v3356 = vadd.f32 %v3087, %v3355
        %v3357 = vpop.f32.mrb[0].mxu0
        %3358 = vmatprep.mubr.f32.mxu0 0.0
        %3359 = vmatmul.mubr.f32.gmra.mrb[0].mxu0 %v3041
        %v3360 = vpop.f32.mrb[0].mxu0
        %v3361 = vadd.f32 %v3087, %v3360
        %v3362 = vpop.f32.mrb[0].mxu0
        %3363 = vmatprep.mubr.f32.mxu0 0.0
        %3364 = vmatmul.mubr.f32.gmra.mrb[0].mxu0 %v3042
        %v3365 = vpop.f32.mrb[0].mxu0
        %v3366 = vadd.f32 %v3087, %v3365
        %v3367 = vpop.f32.mrb[0].mxu0
        %3368 = vmatprep.mubr.f32.mxu0 0.0
        %3369 = vmatmul.mubr.f32.gmra.mrb[0].mxu0 %v3043
        %v3370 = vpop.f32.mrb[0].mxu0
        %v3371 = vadd.f32 %v3087, %v3370
        %v3372 = vpop.f32.mrb[0].mxu0
        %3373 = vmatprep.mubr.f32.mxu0 0.0
        %3374 = vmatmul.mubr.f32.gmra.mrb[0].mxu0 %v3044
        %v3375 = vpop.f32.mrb[0].mxu0
        %v3376 = vadd.f32 %v3087, %v3375
        %v3377 = vpop.f32.mrb[0].mxu0
        %3378 = vmatprep.mubr.f32.mxu0 0.0
        %3379 = vmatmul.mubr.f32.gmra.mrb[0].mxu0 %v3045
        %v3380 = vpop.f32.mrb[0].mxu0
        %v3381 = vadd.f32 %v3087, %v3380
        %v3382 = vpop.f32.mrb[0].mxu0
        %3383 = vmatprep.mubr.f32.mxu0 0.0
        %3384 = vmatmul.mubr.f32.gmra.mrb[0].mxu0 %v3046
        %v3385 = vpop.f32.mrb[0].mxu0
        %v3386 = vadd.f32 %v3087, %v3385
        %v3387 = vpop.f32.mrb[0].mxu0
        %3388 = vmatprep.mubr.f32.mxu0 0.0
        %3389 = vmatmul.mubr.f32.gmra.mrb[0].mxu0 %v3047
        %v3390 = vpop.f32.mrb[0].mxu0
        %v3391 = vadd.f32 %v3087, %v3390
        %v3392 = vpop.f32.mrb[0].mxu0
        %3393 = vmatprep.mubr.f32.mxu0 0.0
        %3394 = vmatmul.mubr.f32.gmra.mrb[0].mxu0 %v3048
        %v3395 = vpop.f32.mrb[0].mxu0
        %v3396 = vadd.f32 %v3087, %v3395
        %v3397 = vpop.f32.mrb[0].mxu0
        %3398 = vmatprep.mubr.f32.mxu0 0.0
        %3399 = vmatmul.mubr.f32.gmra.mrb[0].mxu0 %v3049
        %v3400 = vpop.f32.mrb[0].mxu0
        %v3401 = vadd.f32 %v3087, %v3400
        %v3402 = vpop.f32.mrb[0].mxu0
        %3403 = vmatprep.mubr.f32.mxu0 0.0
        %3404 = vmatmul.mubr.f32.gmra.mrb[0].mxu0 %v3050
        %v3405 = vpop.f32.mrb[0].mxu0
        %v3406 = vadd.f32 %v3087, %v3405
        %v3407 = vpop.f32.mrb[0].mxu0
        %3408 = vmatprep.mubr.f32.mxu0 0.0
        %3409 = vmatmul.mubr.f32.gmra.mrb[0].mxu0 %v3051
        %v3410 = vpop.f32.mrb[0].mxu0
        %v3411 = vadd.f32 %v3087, %v3410
        %v3412 = vpop.f32.mrb[0].mxu0
        %3413 = vmatprep.mubr.f32.mxu0 0.0
        %3414 = vmatmul.mubr.f32.gmra.mrb[0].mxu0 %v3052
        %v3415 = vpop.f32.mrb[0].mxu0
        %v3416 = vadd.f32 %v3087, %v3415
        %v3417 = vpop.f32.mrb[0].mxu0
        %3418 = vmatprep.mubr.f32.mxu0 0.0
        %3419 = vmatmul.mubr.f32.gmra.mrb[0].mxu0 %v3053
        %v3420 = vpop.f32.mrb[0].mxu0
        %v3421 = vadd.f32 %v3087, %v3420
        %v3422 = vpop.f32.mrb[0].mxu0
        %3423 = vmatprep.mubr.f32.mxu0 0.0
        %3424 = vmatmul.mubr.f32.gmra.mrb[0].mxu0 %v3054
        %v3425 = vpop.f32.mrb[0].mxu0
        %v3426 = vadd.f32 %v3087, %v3425
        %v3427 = vpop.f32.mrb[0].mxu0
        %3428 = vmatprep.mubr.f32.mxu0 0.0
        %3429 = vmatmul.mubr.f32.gmra.mrb[0].mxu0 %v3055
        %v3430 = vpop.f32.mrb[0].mxu0
        %v3431 = vadd.f32 %v3087, %v3430
        %v3432 = vpop.f32.mrb[0].mxu0
        %3433 = vmatprep.mubr.f32.mxu0 0.0
        %3434 = vmatmul.mubr.f32.gmra.mrb[0].mxu0 %v3056
        %v3435 = vpop.f32.mrb[0].mxu0
        %v3436 = vadd.f32 %v3087, %v3435
        %v3437 = vpop.f32.mrb[0].mxu0
        %3438 = vmatprep.mubr.f32.mxu0 0.0
        %3439 = vmatmul.mubr.f32.gmra.mrb[0].mxu0 %v3057
        %v3440 = vpop.f32.mrb[0].mxu0
        %v3441 = vadd.f32 %v3087, %v3440
        %v3442 = vpop.f32.mrb[0].mxu0
        %3443 = vmatprep.mubr.f32.mxu0 0.0
        %3444 = vmatmul.mubr.f32.gmra.mrb[0].mxu0 %v3058
        %v3445 = vpop.f32.mrb[0].mxu0
        %v3446 = vadd.f32 %v3087, %v3445
        %v3447 = vpop.f32.mrb[0].mxu0
        %3448 = vmatprep.mubr.f32.mxu0 0.0
        %3449 = vmatmul.mubr.f32.gmra.mrb[0].mxu0 %v3059
        %v3450 = vpop.f32.mrb[0].mxu0
        %v3451 = vadd.f32 %v3087, %v3450
        %v3452 = vpop.f32.mrb[0].mxu0
        %3453 = vmatprep.mubr.f32.mxu0 0.0
        %3454 = vmatmul.mubr.f32.gmra.mrb[0].mxu0 %v3060
        %v3455 = vpop.f32.mrb[0].mxu0
        %v3456 = vadd.f32 %v3087, %v3455
        %v3457 = vpop.f32.mrb[0].mxu0
        %3458 = vmatprep.mubr.f32.mxu0 0.0
        %3459 = vmatmul.mubr.f32.gmra.mrb[0].mxu0 %v3061
        %v3460 = vpop.f32.mrb[0].mxu0
        %v3461 = vadd.f32 %v3087, %v3460
        %v3462 = vpop.f32.mrb[0].mxu0
        %3463 = vmatprep.mubr.f32.mxu0 0.0
        %3464 = vmatmul.mubr.f32.gmra.mrb[0].mxu0 %v3062
        %v3465 = vpop.f32.mrb[0].mxu0
        %v3466 = vadd.f32 %v3087, %v3465
        %v3467 = vpop.f32.mrb[0].mxu0
        %3468 = vmatprep.mubr.f32.mxu0 0.0
        %3469 = vmatmul.mubr.f32.gmra.mrb[0].mxu0 %v3063
        %v3470 = vpop.f32.mrb[0].mxu0
        %v3471 = vadd.f32 %v3087, %v3470
        %v3472 = vpop.f32.mrb[0].mxu0
        %3473 = vdwg.mxu0
        %v3474 = vmax.f32 %v3156, 0.0
        %v3475 = vmax.f32 %v3161, 0.0
        %v3476 = vmax.f32 %v3166, 0.0
        %v3477 = vmax.f32 %v3171, 0.0
        %v3478 = vmax.f32 %v3176, 0.0
        %v3479 = vmax.f32 %v3181, 0.0
        %v3480 = vmax.f32 %v3186, 0.0
        %v3481 = vmax.f32 %v3191, 0.0
        %v3482 = vmax.f32 %v3196, 0.0
        %v3483 = vmax.f32 %v3201, 0.0
        %v3484 = vmax.f32 %v3206, 0.0
        %v3485 = vmax.f32 %v3211, 0.0
        %v3486 = vmax.f32 %v3216, 0.0
        %v3487 = vmax.f32 %v3221, 0.0
        %v3488 = vmax.f32 %v3226, 0.0
        %v3489 = vmax.f32 %v3231, 0.0
        %v3490 = vmax.f32 %v3236, 0.0
        %v3491 = vmax.f32 %v3241, 0.0
        %v3492 = vmax.f32 %v3246, 0.0
        %v3493 = vmax.f32 %v3251, 0.0
        %v3494 = vmax.f32 %v3256, 0.0
        %v3495 = vmax.f32 %v3261, 0.0
        %v3496 = vmax.f32 %v3266, 0.0
        %v3497 = vmax.f32 %v3271, 0.0
        %v3498 = vmax.f32 %v3276, 0.0
        %v3499 = vmax.f32 %v3281, 0.0
        %v3500 = vmax.f32 %v3286, 0.0
        %v3501 = vmax.f32 %v3291, 0.0
        %v3502 = vmax.f32 %v3296, 0.0
        %v3503 = vmax.f32 %v3301, 0.0
        %v3504 = vmax.f32 %v3306, 0.0
        %v3505 = vmax.f32 %v3311, 0.0
        %v3506 = vmax.f32 %v3316, 0.0
        %v3507 = vmax.f32 %v3321, 0.0
        %v3508 = vmax.f32 %v3326, 0.0
        %v3509 = vmax.f32 %v3331, 0.0
        %v3510 = vmax.f32 %v3336, 0.0
        %v3511 = vmax.f32 %v3341, 0.0
        %v3512 = vmax.f32 %v3346, 0.0
        %v3513 = vmax.f32 %v3351, 0.0
        %v3514 = vmax.f32 %v3356, 0.0
        %v3515 = vmax.f32 %v3361, 0.0
        %v3516 = vmax.f32 %v3366, 0.0
        %v3517 = vmax.f32 %v3371, 0.0
        %v3518 = vmax.f32 %v3376, 0.0
        %v3519 = vmax.f32 %v3381, 0.0
        %v3520 = vmax.f32 %v3386, 0.0
        %v3521 = vmax.f32 %v3391, 0.0
        %v3522 = vmax.f32 %v3396, 0.0
        %v3523 = vmax.f32 %v3401, 0.0
        %v3524 = vmax.f32 %v3406, 0.0
        %v3525 = vmax.f32 %v3411, 0.0
        %v3526 = vmax.f32 %v3416, 0.0
        %v3527 = vmax.f32 %v3421, 0.0
        %v3528 = vmax.f32 %v3426, 0.0
        %v3529 = vmax.f32 %v3431, 0.0
        %v3530 = vmax.f32 %v3436, 0.0
        %v3531 = vmax.f32 %v3441, 0.0
        %v3532 = vmax.f32 %v3446, 0.0
        %v3533 = vmax.f32 %v3451, 0.0
        %v3534 = vmax.f32 %v3456, 0.0
        %v3535 = vmax.f32 %v3461, 0.0
        %v3536 = vmax.f32 %v3466, 0.0
        %v3537 = vmax.f32 %v3471, 0.0
        %3538 = vset.pattern.permute.xlu0 1
        %3539 = vperm.xlu0 %3538, %v1437
        %v3540 = vpop.permute.xlu0 %3539
        %3542 = vset.pattern.permute.xlu0 1
        %3543 = vperm.xlu0 %3542, %v1438
        %v3544 = vpop.permute.xlu0 %3543
        %3546 = vset.pattern.permute.xlu0 1
        %3547 = vperm.xlu0 %3546, %v1439
        %v3548 = vpop.permute.xlu0 %3547
        %3550 = vset.pattern.permute.xlu0 1
        %3551 = vperm.xlu0 %3550, %v1440
        %v3552 = vpop.permute.xlu0 %3551
        %3554 = vset.pattern.permute.xlu0 1
        %3555 = vperm.xlu0 %3554, %v1441
        %v3556 = vpop.permute.xlu0 %3555
        %3558 = vset.pattern.permute.xlu0 1
        %3559 = vperm.xlu0 %3558, %v1442
        %v3560 = vpop.permute.xlu0 %3559
        %3562 = vset.pattern.permute.xlu0 1
        %3563 = vperm.xlu0 %3562, %v1443
        %v3564 = vpop.permute.xlu0 %3563
        %3566 = vset.pattern.permute.xlu0 1
        %3567 = vperm.xlu0 %3566, %v1444
        %v3568 = vpop.permute.xlu0 %3567
        %3570 = vset.pattern.permute.xlu0 1
        %3571 = vperm.xlu0 %3570, %v1445
        %v3572 = vpop.permute.xlu0 %3571
        %3574 = vset.pattern.permute.xlu0 1
        %3575 = vperm.xlu0 %3574, %v1446
        %v3576 = vpop.permute.xlu0 %3575
        %3578 = vset.pattern.permute.xlu0 1
        %3579 = vperm.xlu0 %3578, %v1447
        %v3580 = vpop.permute.xlu0 %3579
        %3582 = vset.pattern.permute.xlu0 1
        %3583 = vperm.xlu0 %3582, %v1448
        %v3584 = vpop.permute.xlu0 %3583
        %3586 = vset.pattern.permute.xlu0 1
        %3587 = vperm.xlu0 %3586, %v1449
        %v3588 = vpop.permute.xlu0 %3587
        %3590 = vset.pattern.permute.xlu0 1
        %3591 = vperm.xlu0 %3590, %v1450
        %v3592 = vpop.permute.xlu0 %3591
        %3594 = vset.pattern.permute.xlu0 1
        %3595 = vperm.xlu0 %3594, %v1451
        %v3596 = vpop.permute.xlu0 %3595
        %3598 = vset.pattern.permute.xlu0 1
        %3599 = vperm.xlu0 %3598, %v1452
        %v3600 = vpop.permute.xlu0 %3599
        %3602 = vset.pattern.permute.xlu0 1
        %3603 = vperm.xlu0 %3602, %v1453
        %v3604 = vpop.permute.xlu0 %3603
        %3606 = vset.pattern.permute.xlu0 1
        %3607 = vperm.xlu0 %3606, %v1454
        %v3608 = vpop.permute.xlu0 %3607
        %3610 = vset.pattern.permute.xlu0 1
        %3611 = vperm.xlu0 %3610, %v1455
        %v3612 = vpop.permute.xlu0 %3611
        %3614 = vset.pattern.permute.xlu0 1
        %3615 = vperm.xlu0 %3614, %v1456
        %v3616 = vpop.permute.xlu0 %3615
        %3618 = vset.pattern.permute.xlu0 1
        %3619 = vperm.xlu0 %3618, %v1457
        %v3620 = vpop.permute.xlu0 %3619
        %3622 = vset.pattern.permute.xlu0 1
        %3623 = vperm.xlu0 %3622, %v1458
        %v3624 = vpop.permute.xlu0 %3623
        %3626 = vset.pattern.permute.xlu0 1
        %3627 = vperm.xlu0 %3626, %v1459
        %v3628 = vpop.permute.xlu0 %3627
        %3630 = vset.pattern.permute.xlu0 1
        %3631 = vperm.xlu0 %3630, %v1460
        %v3632 = vpop.permute.xlu0 %3631
        %3634 = vset.pattern.permute.xlu0 1
        %3635 = vperm.xlu0 %3634, %v1461
        %v3636 = vpop.permute.xlu0 %3635
        %3638 = vset.pattern.permute.xlu0 1
        %3639 = vperm.xlu0 %3638, %v1462
        %v3640 = vpop.permute.xlu0 %3639
        %3642 = vset.pattern.permute.xlu0 1
        %3643 = vperm.xlu0 %3642, %v1463
        %v3644 = vpop.permute.xlu0 %3643
        %3646 = vset.pattern.permute.xlu0 1
        %3647 = vperm.xlu0 %3646, %v1464
        %v3648 = vpop.permute.xlu0 %3647
        %3650 = vset.pattern.permute.xlu0 1
        %3651 = vperm.xlu0 %3650, %v1465
        %v3652 = vpop.permute.xlu0 %3651
        %3654 = vset.pattern.permute.xlu0 1
        %3655 = vperm.xlu0 %3654, %v1466
        %v3656 = vpop.permute.xlu0 %3655
        %3658 = vset.pattern.permute.xlu0 1
        %3659 = vperm.xlu0 %3658, %v1467
        %v3660 = vpop.permute.xlu0 %3659
        %3662 = vset.pattern.permute.xlu0 1
        %3663 = vperm.xlu0 %3662, %v1468
        %v3664 = vpop.permute.xlu0 %3663
        %3666 = vset.pattern.permute.xlu0 1
        %3667 = vperm.xlu0 %3666, %v1469
        %v3668 = vpop.permute.xlu0 %3667
        %3670 = vset.pattern.permute.xlu0 1
        %3671 = vperm.xlu0 %3670, %v1470
        %v3672 = vpop.permute.xlu0 %3671
        %3674 = vset.pattern.permute.xlu0 1
        %3675 = vperm.xlu0 %3674, %v1471
        %v3676 = vpop.permute.xlu0 %3675
        %3678 = vset.pattern.permute.xlu0 1
        %3679 = vperm.xlu0 %3678, %v1472
        %v3680 = vpop.permute.xlu0 %3679
        %3682 = vset.pattern.permute.xlu0 1
        %3683 = vperm.xlu0 %3682, %v1473
        %v3684 = vpop.permute.xlu0 %3683
        %3686 = vset.pattern.permute.xlu0 1
        %3687 = vperm.xlu0 %3686, %v1474
        %v3688 = vpop.permute.xlu0 %3687
        %3690 = vset.pattern.permute.xlu0 1
        %3691 = vperm.xlu0 %3690, %v1475
        %v3692 = vpop.permute.xlu0 %3691
        %3694 = vset.pattern.permute.xlu0 1
        %3695 = vperm.xlu0 %3694, %v1476
        %v3696 = vpop.permute.xlu0 %3695
        %3698 = vset.pattern.permute.xlu0 1
        %3699 = vperm.xlu0 %3698, %v1477
        %v3700 = vpop.permute.xlu0 %3699
        %3702 = vset.pattern.permute.xlu0 1
        %3703 = vperm.xlu0 %3702, %v1478
        %v3704 = vpop.permute.xlu0 %3703
        %3706 = vset.pattern.permute.xlu0 1
        %3707 = vperm.xlu0 %3706, %v1479
        %v3708 = vpop.permute.xlu0 %3707
        %3710 = vset.pattern.permute.xlu0 1
        %3711 = vperm.xlu0 %3710, %v1480
        %v3712 = vpop.permute.xlu0 %3711
        %3714 = vset.pattern.permute.xlu0 1
        %3715 = vperm.xlu0 %3714, %v1481
        %v3716 = vpop.permute.xlu0 %3715
        %3718 = vset.pattern.permute.xlu0 1
        %3719 = vperm.xlu0 %3718, %v1482
        %v3720 = vpop.permute.xlu0 %3719
        %3722 = vset.pattern.permute.xlu0 1
        %3723 = vperm.xlu0 %3722, %v1483
        %v3724 = vpop.permute.xlu0 %3723
        %3726 = vset.pattern.permute.xlu0 1
        %3727 = vperm.xlu0 %3726, %v1484
        %v3728 = vpop.permute.xlu0 %3727
        %3730 = vset.pattern.permute.xlu0 1
        %3731 = vperm.xlu0 %3730, %v1485
        %v3732 = vpop.permute.xlu0 %3731
        %3734 = vset.pattern.permute.xlu0 1
        %3735 = vperm.xlu0 %3734, %v1486
        %v3736 = vpop.permute.xlu0 %3735
        %3738 = vset.pattern.permute.xlu0 1
        %3739 = vperm.xlu0 %3738, %v1487
        %v3740 = vpop.permute.xlu0 %3739
        %3742 = vset.pattern.permute.xlu0 1
        %3743 = vperm.xlu0 %3742, %v1488
        %v3744 = vpop.permute.xlu0 %3743
        %3746 = vset.pattern.permute.xlu0 1
        %3747 = vperm.xlu0 %3746, %v1489
        %v3748 = vpop.permute.xlu0 %3747
        %3750 = vset.pattern.permute.xlu0 1
        %3751 = vperm.xlu0 %3750, %v1490
        %v3752 = vpop.permute.xlu0 %3751
        %3754 = vset.pattern.permute.xlu0 1
        %3755 = vperm.xlu0 %3754, %v1491
        %v3756 = vpop.permute.xlu0 %3755
        %3758 = vset.pattern.permute.xlu0 1
        %3759 = vperm.xlu0 %3758, %v1492
        %v3760 = vpop.permute.xlu0 %3759
        %3762 = vset.pattern.permute.xlu0 1
        %3763 = vperm.xlu0 %3762, %v1493
        %v3764 = vpop.permute.xlu0 %3763
        %3766 = vset.pattern.permute.xlu0 1
        %3767 = vperm.xlu0 %3766, %v1494
        %v3768 = vpop.permute.xlu0 %3767
        %3770 = vset.pattern.permute.xlu0 1
        %3771 = vperm.xlu0 %3770, %v1495
        %v3772 = vpop.permute.xlu0 %3771
        %3774 = vset.pattern.permute.xlu0 1
        %3775 = vperm.xlu0 %3774, %v1496
        %v3776 = vpop.permute.xlu0 %3775
        %3778 = vset.pattern.permute.xlu0 1
        %3779 = vperm.xlu0 %3778, %v1497
        %v3780 = vpop.permute.xlu0 %3779
        %3782 = vset.pattern.permute.xlu0 1
        %3783 = vperm.xlu0 %3782, %v1498
        %v3784 = vpop.permute.xlu0 %3783
        %3786 = vset.pattern.permute.xlu0 1
        %3787 = vperm.xlu0 %3786, %v1499
        %v3788 = vpop.permute.xlu0 %3787
        %3790 = vset.pattern.permute.xlu0 1
        %3791 = vperm.xlu0 %3790, %v1500
        %v3792 = vpop.permute.xlu0 %3791
        %v3794 = vmul.f32 %v3540, %v1824
        %v3795 = vmul.f32 %v3544, %v1824
        %v3796 = vmul.f32 %v3548, %v1824
        %v3797 = vmul.f32 %v3552, %v1824
        %v3798 = vmul.f32 %v3556, %v1824
        %v3799 = vmul.f32 %v3560, %v1824
        %v3800 = vmul.f32 %v3564, %v1824
        %v3801 = vmul.f32 %v3568, %v1824
        %v3802 = vmul.f32 %v3572, %v1824
        %v3803 = vmul.f32 %v3576, %v1824
        %v3804 = vmul.f32 %v3580, %v1824
        %v3805 = vmul.f32 %v3584, %v1824
        %v3806 = vmul.f32 %v3588, %v1824
        %v3807 = vmul.f32 %v3592, %v1824
        %v3808 = vmul.f32 %v3596, %v1824
        %v3809 = vmul.f32 %v3600, %v1824
        %v3810 = vmul.f32 %v3604, %v1824
        %v3811 = vmul.f32 %v3608, %v1824
        %v3812 = vmul.f32 %v3612, %v1824
        %v3813 = vmul.f32 %v3616, %v1824
        %v3814 = vmul.f32 %v3620, %v1824
        %v3815 = vmul.f32 %v3624, %v1824
        %v3816 = vmul.f32 %v3628, %v1824
        %v3817 = vmul.f32 %v3632, %v1824
        %v3818 = vmul.f32 %v3636, %v1824
        %v3819 = vmul.f32 %v3640, %v1824
        %v3820 = vmul.f32 %v3644, %v1824
        %v3821 = vmul.f32 %v3648, %v1824
        %v3822 = vmul.f32 %v3652, %v1824
        %v3823 = vmul.f32 %v3656, %v1824
        %v3824 = vmul.f32 %v3660, %v1824
        %v3825 = vmul.f32 %v3664, %v1824
        %v3826 = vmul.f32 %v3668, %v1824
        %v3827 = vmul.f32 %v3672, %v1824
        %v3828 = vmul.f32 %v3676, %v1824
        %v3829 = vmul.f32 %v3680, %v1824
        %v3830 = vmul.f32 %v3684, %v1824
        %v3831 = vmul.f32 %v3688, %v1824
        %v3832 = vmul.f32 %v3692, %v1824
        %v3833 = vmul.f32 %v3696, %v1824
        %v3834 = vmul.f32 %v3700, %v1824
        %v3835 = vmul.f32 %v3704, %v1824
        %v3836 = vmul.f32 %v3708, %v1824
        %v3837 = vmul.f32 %v3712, %v1824
        %v3838 = vmul.f32 %v3716, %v1824
        %v3839 = vmul.f32 %v3720, %v1824
        %v3840 = vmul.f32 %v3724, %v1824
        %v3841 = vmul.f32 %v3728, %v1824
        %v3842 = vmul.f32 %v3732, %v1824
        %v3843 = vmul.f32 %v3736, %v1824
        %v3844 = vmul.f32 %v3740, %v1824
        %v3845 = vmul.f32 %v3744, %v1824
        %v3846 = vmul.f32 %v3748, %v1824
        %v3847 = vmul.f32 %v3752, %v1824
        %v3848 = vmul.f32 %v3756, %v1824
        %v3849 = vmul.f32 %v3760, %v1824
        %v3850 = vmul.f32 %v3764, %v1824
        %v3851 = vmul.f32 %v3768, %v1824
        %v3852 = vmul.f32 %v3772, %v1824
        %v3853 = vmul.f32 %v3776, %v1824
        %v3854 = vmul.f32 %v3780, %v1824
        %v3855 = vmul.f32 %v3784, %v1824
        %v3856 = vmul.f32 %v3788, %v1824
        %v3857 = vmul.f32 %v3792, %v1824
        %v3858 = vadd.f32 %v1436, %v3794
        %v3859 = vadd.f32 %v1436, %v3795
        %v3860 = vadd.f32 %v1436, %v3796
        %v3861 = vadd.f32 %v1436, %v3797
        %v3862 = vadd.f32 %v1436, %v3798
        %v3863 = vadd.f32 %v1436, %v3799
        %v3864 = vadd.f32 %v1436, %v3800
        %v3865 = vadd.f32 %v1436, %v3801
        %v3866 = vadd.f32 %v1436, %v3802
        %v3867 = vadd.f32 %v1436, %v3803
        %v3868 = vadd.f32 %v1436, %v3804
        %v3869 = vadd.f32 %v1436, %v3805
        %v3870 = vadd.f32 %v1436, %v3806
        %v3871 = vadd.f32 %v1436, %v3807
        %v3872 = vadd.f32 %v1436, %v3808
        %v3873 = vadd.f32 %v1436, %v3809
        %v3874 = vadd.f32 %v1436, %v3810
        %v3875 = vadd.f32 %v1436, %v3811
        %v3876 = vadd.f32 %v1436, %v3812
        %v3877 = vadd.f32 %v1436, %v3813
        %v3878 = vadd.f32 %v1436, %v3814
        %v3879 = vadd.f32 %v1436, %v3815
        %v3880 = vadd.f32 %v1436, %v3816
        %v3881 = vadd.f32 %v1436, %v3817
        %v3882 = vadd.f32 %v1436, %v3818
        %v3883 = vadd.f32 %v1436, %v3819
        %v3884 = vadd.f32 %v1436, %v3820
        %v3885 = vadd.f32 %v1436, %v3821
        %v3886 = vadd.f32 %v1436, %v3822
        %v3887 = vadd.f32 %v1436, %v3823
        %v3888 = vadd.f32 %v1436, %v3824
        %v3889 = vadd.f32 %v1436, %v3825
        %v3890 = vadd.f32 %v1436, %v3826
        %v3891 = vadd.f32 %v1436, %v3827
        %v3892 = vadd.f32 %v1436, %v3828
        %v3893 = vadd.f32 %v1436, %v3829
        %v3894 = vadd.f32 %v1436, %v3830
        %v3895 = vadd.f32 %v1436, %v3831
        %v3896 = vadd.f32 %v1436, %v3832
        %v3897 = vadd.f32 %v1436, %v3833
        %v3898 = vadd.f32 %v1436, %v3834
        %v3899 = vadd.f32 %v1436, %v3835
        %v3900 = vadd.f32 %v1436, %v3836
        %v3901 = vadd.f32 %v1436, %v3837
        %v3902 = vadd.f32 %v1436, %v3838
        %v3903 = vadd.f32 %v1436, %v3839
        %v3904 = vadd.f32 %v1436, %v3840
        %v3905 = vadd.f32 %v1436, %v3841
        %v3906 = vadd.f32 %v1436, %v3842
        %v3907 = vadd.f32 %v1436, %v3843
        %v3908 = vadd.f32 %v1436, %v3844
        %v3909 = vadd.f32 %v1436, %v3845
        %v3910 = vadd.f32 %v1436, %v3846
        %v3911 = vadd.f32 %v1436, %v3847
        %v3912 = vadd.f32 %v1436, %v3848
        %v3913 = vadd.f32 %v1436, %v3849
        %v3914 = vadd.f32 %v1436, %v3850
        %v3915 = vadd.f32 %v1436, %v3851
        %v3916 = vadd.f32 %v1436, %v3852
        %v3917 = vadd.f32 %v1436, %v3853
        %v3918 = vadd.f32 %v1436, %v3854
        %v3919 = vadd.f32 %v1436, %v3855
        %v3920 = vadd.f32 %v1436, %v3856
        %v3921 = vadd.f32 %v1436, %v3857
        %3922 = vset.pattern.permute.xlu0 1
        %3923 = vperm.xlu0 %3922, %v2017
        %v3924 = vpop.permute.xlu0 %3923
        %3926 = vset.pattern.permute.xlu0 1
        %3927 = vperm.xlu0 %3926, %v2018
        %v3928 = vpop.permute.xlu0 %3927
        %3930 = vset.pattern.permute.xlu0 1
        %3931 = vperm.xlu0 %3930, %v2019
        %v3932 = vpop.permute.xlu0 %3931
        %3934 = vset.pattern.permute.xlu0 1
        %3935 = vperm.xlu0 %3934, %v2020
        %v3936 = vpop.permute.xlu0 %3935
        %3938 = vset.pattern.permute.xlu0 1
        %3939 = vperm.xlu0 %3938, %v2021
        %v3940 = vpop.permute.xlu0 %3939
        %3942 = vset.pattern.permute.xlu0 1
        %3943 = vperm.xlu0 %3942, %v2022
        %v3944 = vpop.permute.xlu0 %3943
        %3946 = vset.pattern.permute.xlu0 1
        %3947 = vperm.xlu0 %3946, %v2023
        %v3948 = vpop.permute.xlu0 %3947
        %3950 = vset.pattern.permute.xlu0 1
        %3951 = vperm.xlu0 %3950, %v2024
        %v3952 = vpop.permute.xlu0 %3951
        %3954 = vset.pattern.permute.xlu0 1
        %3955 = vperm.xlu0 %3954, %v2025
        %v3956 = vpop.permute.xlu0 %3955
        %3958 = vset.pattern.permute.xlu0 1
        %3959 = vperm.xlu0 %3958, %v2026
        %v3960 = vpop.permute.xlu0 %3959
        %3962 = vset.pattern.permute.xlu0 1
        %3963 = vperm.xlu0 %3962, %v2027
        %v3964 = vpop.permute.xlu0 %3963
        %3966 = vset.pattern.permute.xlu0 1
        %3967 = vperm.xlu0 %3966, %v2028
        %v3968 = vpop.permute.xlu0 %3967
        %3970 = vset.pattern.permute.xlu0 1
        %3971 = vperm.xlu0 %3970, %v2029
        %v3972 = vpop.permute.xlu0 %3971
        %3974 = vset.pattern.permute.xlu0 1
        %3975 = vperm.xlu0 %3974, %v2030
        %v3976 = vpop.permute.xlu0 %3975
        %3978 = vset.pattern.permute.xlu0 1
        %3979 = vperm.xlu0 %3978, %v2031
        %v3980 = vpop.permute.xlu0 %3979
        %3982 = vset.pattern.permute.xlu0 1
        %3983 = vperm.xlu0 %3982, %v2032
        %v3984 = vpop.permute.xlu0 %3983
        %3986 = vset.pattern.permute.xlu0 1
        %3987 = vperm.xlu0 %3986, %v2033
        %v3988 = vpop.permute.xlu0 %3987
        %3990 = vset.pattern.permute.xlu0 1
        %3991 = vperm.xlu0 %3990, %v2034
        %v3992 = vpop.permute.xlu0 %3991
        %3994 = vset.pattern.permute.xlu0 1
        %3995 = vperm.xlu0 %3994, %v2035
        %v3996 = vpop.permute.xlu0 %3995
        %3998 = vset.pattern.permute.xlu0 1
        %3999 = vperm.xlu0 %3998, %v2036
        %v4000 = vpop.permute.xlu0 %3999
        %4002 = vset.pattern.permute.xlu0 1
        %4003 = vperm.xlu0 %4002, %v2037
        %v4004 = vpop.permute.xlu0 %4003
        %4006 = vset.pattern.permute.xlu0 1
        %4007 = vperm.xlu0 %4006, %v2038
        %v4008 = vpop.permute.xlu0 %4007
        %4010 = vset.pattern.permute.xlu0 1
        %4011 = vperm.xlu0 %4010, %v2039
        %v4012 = vpop.permute.xlu0 %4011
        %4014 = vset.pattern.permute.xlu0 1
        %4015 = vperm.xlu0 %4014, %v2040
        %v4016 = vpop.permute.xlu0 %4015
        %4018 = vset.pattern.permute.xlu0 1
        %4019 = vperm.xlu0 %4018, %v2041
        %v4020 = vpop.permute.xlu0 %4019
        %4022 = vset.pattern.permute.xlu0 1
        %4023 = vperm.xlu0 %4022, %v2042
        %v4024 = vpop.permute.xlu0 %4023
        %4026 = vset.pattern.permute.xlu0 1
        %4027 = vperm.xlu0 %4026, %v2043
        %v4028 = vpop.permute.xlu0 %4027
        %4030 = vset.pattern.permute.xlu0 1
        %4031 = vperm.xlu0 %4030, %v2044
        %v4032 = vpop.permute.xlu0 %4031
        %4034 = vset.pattern.permute.xlu0 1
        %4035 = vperm.xlu0 %4034, %v2045
        %v4036 = vpop.permute.xlu0 %4035
        %4038 = vset.pattern.permute.xlu0 1
        %4039 = vperm.xlu0 %4038, %v2046
        %v4040 = vpop.permute.xlu0 %4039
        %4042 = vset.pattern.permute.xlu0 1
        %4043 = vperm.xlu0 %4042, %v2047
        %v4044 = vpop.permute.xlu0 %4043
        %4046 = vset.pattern.permute.xlu0 1
        %4047 = vperm.xlu0 %4046, %v2048
        %v4048 = vpop.permute.xlu0 %4047
        %4050 = vset.pattern.permute.xlu0 1
        %4051 = vperm.xlu0 %4050, %v2049
        %v4052 = vpop.permute.xlu0 %4051
        %4054 = vset.pattern.permute.xlu0 1
        %4055 = vperm.xlu0 %4054, %v2050
        %v4056 = vpop.permute.xlu0 %4055
        %4058 = vset.pattern.permute.xlu0 1
        %4059 = vperm.xlu0 %4058, %v2051
        %v4060 = vpop.permute.xlu0 %4059
        %4062 = vset.pattern.permute.xlu0 1
        %4063 = vperm.xlu0 %4062, %v2052
        %v4064 = vpop.permute.xlu0 %4063
        %4066 = vset.pattern.permute.xlu0 1
        %4067 = vperm.xlu0 %4066, %v2053
        %v4068 = vpop.permute.xlu0 %4067
        %4070 = vset.pattern.permute.xlu0 1
        %4071 = vperm.xlu0 %4070, %v2054
        %v4072 = vpop.permute.xlu0 %4071
        %4074 = vset.pattern.permute.xlu0 1
        %4075 = vperm.xlu0 %4074, %v2055
        %v4076 = vpop.permute.xlu0 %4075
        %4078 = vset.pattern.permute.xlu0 1
        %4079 = vperm.xlu0 %4078, %v2056
        %v4080 = vpop.permute.xlu0 %4079
        %4082 = vset.pattern.permute.xlu0 1
        %4083 = vperm.xlu0 %4082, %v2057
        %v4084 = vpop.permute.xlu0 %4083
        %4086 = vset.pattern.permute.xlu0 1
        %4087 = vperm.xlu0 %4086, %v2058
        %v4088 = vpop.permute.xlu0 %4087
        %4090 = vset.pattern.permute.xlu0 1
        %4091 = vperm.xlu0 %4090, %v2059
        %v4092 = vpop.permute.xlu0 %4091
        %4094 = vset.pattern.permute.xlu0 1
        %4095 = vperm.xlu0 %4094, %v2060
        %v4096 = vpop.permute.xlu0 %4095
        %4098 = vset.pattern.permute.xlu0 1
        %4099 = vperm.xlu0 %4098, %v2061
        %v4100 = vpop.permute.xlu0 %4099
        %4102 = vset.pattern.permute.xlu0 1
        %4103 = vperm.xlu0 %4102, %v2062
        %v4104 = vpop.permute.xlu0 %4103
        %4106 = vset.pattern.permute.xlu0 1
        %4107 = vperm.xlu0 %4106, %v2063
        %v4108 = vpop.permute.xlu0 %4107
        %4110 = vset.pattern.permute.xlu0 1
        %4111 = vperm.xlu0 %4110, %v2064
        %v4112 = vpop.permute.xlu0 %4111
        %4114 = vset.pattern.permute.xlu0 1
        %4115 = vperm.xlu0 %4114, %v2065
        %v4116 = vpop.permute.xlu0 %4115
        %4118 = vset.pattern.permute.xlu0 1
        %4119 = vperm.xlu0 %4118, %v2066
        %v4120 = vpop.permute.xlu0 %4119
        %4122 = vset.pattern.permute.xlu0 1
        %4123 = vperm.xlu0 %4122, %v2067
        %v4124 = vpop.permute.xlu0 %4123
        %4126 = vset.pattern.permute.xlu0 1
        %4127 = vperm.xlu0 %4126, %v2068
        %v4128 = vpop.permute.xlu0 %4127
        %4130 = vset.pattern.permute.xlu0 1
        %4131 = vperm.xlu0 %4130, %v2069
        %v4132 = vpop.permute.xlu0 %4131
        %4134 = vset.pattern.permute.xlu0 1
        %4135 = vperm.xlu0 %4134, %v2070
        %v4136 = vpop.permute.xlu0 %4135
        %4138 = vset.pattern.permute.xlu0 1
        %4139 = vperm.xlu0 %4138, %v2071
        %v4140 = vpop.permute.xlu0 %4139
        %4142 = vset.pattern.permute.xlu0 1
        %4143 = vperm.xlu0 %4142, %v2072
        %v4144 = vpop.permute.xlu0 %4143
        %4146 = vset.pattern.permute.xlu0 1
        %4147 = vperm.xlu0 %4146, %v2073
        %v4148 = vpop.permute.xlu0 %4147
        %4150 = vset.pattern.permute.xlu0 1
        %4151 = vperm.xlu0 %4150, %v2074
        %v4152 = vpop.permute.xlu0 %4151
        %4154 = vset.pattern.permute.xlu0 1
        %4155 = vperm.xlu0 %4154, %v2075
        %v4156 = vpop.permute.xlu0 %4155
        %4158 = vset.pattern.permute.xlu0 1
        %4159 = vperm.xlu0 %4158, %v2076
        %v4160 = vpop.permute.xlu0 %4159
        %4162 = vset.pattern.permute.xlu0 1
        %4163 = vperm.xlu0 %4162, %v2077
        %v4164 = vpop.permute.xlu0 %4163
        %4166 = vset.pattern.permute.xlu0 1
        %4167 = vperm.xlu0 %4166, %v2078
        %v4168 = vpop.permute.xlu0 %4167
        %4170 = vset.pattern.permute.xlu0 1
        %4171 = vperm.xlu0 %4170, %v2079
        %v4172 = vpop.permute.xlu0 %4171
        %4174 = vset.pattern.permute.xlu0 1
        %4175 = vperm.xlu0 %4174, %v2080
        %v4176 = vpop.permute.xlu0 %4175
        %v4178 = vmul.f32 %v3924, %v2404
        %v4179 = vmul.f32 %v3928, %v2404
        %v4180 = vmul.f32 %v3932, %v2404
        %v4181 = vmul.f32 %v3936, %v2404
        %v4182 = vmul.f32 %v3940, %v2404
        %v4183 = vmul.f32 %v3944, %v2404
        %v4184 = vmul.f32 %v3948, %v2404
        %v4185 = vmul.f32 %v3952, %v2404
        %v4186 = vmul.f32 %v3956, %v2404
        %v4187 = vmul.f32 %v3960, %v2404
        %v4188 = vmul.f32 %v3964, %v2404
        %v4189 = vmul.f32 %v3968, %v2404
        %v4190 = vmul.f32 %v3972, %v2404
        %v4191 = vmul.f32 %v3976, %v2404
        %v4192 = vmul.f32 %v3980, %v2404
        %v4193 = vmul.f32 %v3984, %v2404
        %v4194 = vmul.f32 %v3988, %v2404
        %v4195 = vmul.f32 %v3992, %v2404
        %v4196 = vmul.f32 %v3996, %v2404
        %v4197 = vmul.f32 %v4000, %v2404
        %v4198 = vmul.f32 %v4004, %v2404
        %v4199 = vmul.f32 %v4008, %v2404
        %v4200 = vmul.f32 %v4012, %v2404
        %v4201 = vmul.f32 %v4016, %v2404
        %v4202 = vmul.f32 %v4020, %v2404
        %v4203 = vmul.f32 %v4024, %v2404
        %v4204 = vmul.f32 %v4028, %v2404
        %v4205 = vmul.f32 %v4032, %v2404
        %v4206 = vmul.f32 %v4036, %v2404
        %v4207 = vmul.f32 %v4040, %v2404
        %v4208 = vmul.f32 %v4044, %v2404
        %v4209 = vmul.f32 %v4048, %v2404
        %v4210 = vmul.f32 %v4052, %v2404
        %v4211 = vmul.f32 %v4056, %v2404
        %v4212 = vmul.f32 %v4060, %v2404
        %v4213 = vmul.f32 %v4064, %v2404
        %v4214 = vmul.f32 %v4068, %v2404
        %v4215 = vmul.f32 %v4072, %v2404
        %v4216 = vmul.f32 %v4076, %v2404
        %v4217 = vmul.f32 %v4080, %v2404
        %v4218 = vmul.f32 %v4084, %v2404
        %v4219 = vmul.f32 %v4088, %v2404
        %v4220 = vmul.f32 %v4092, %v2404
        %v4221 = vmul.f32 %v4096, %v2404
        %v4222 = vmul.f32 %v4100, %v2404
        %v4223 = vmul.f32 %v4104, %v2404
        %v4224 = vmul.f32 %v4108, %v2404
        %v4225 = vmul.f32 %v4112, %v2404
        %v4226 = vmul.f32 %v4116, %v2404
        %v4227 = vmul.f32 %v4120, %v2404
        %v4228 = vmul.f32 %v4124, %v2404
        %v4229 = vmul.f32 %v4128, %v2404
        %v4230 = vmul.f32 %v4132, %v2404
        %v4231 = vmul.f32 %v4136, %v2404
        %v4232 = vmul.f32 %v4140, %v2404
        %v4233 = vmul.f32 %v4144, %v2404
        %v4234 = vmul.f32 %v4148, %v2404
        %v4235 = vmul.f32 %v4152, %v2404
        %v4236 = vmul.f32 %v4156, %v2404
        %v4237 = vmul.f32 %v4160, %v2404
        %v4238 = vmul.f32 %v4164, %v2404
        %v4239 = vmul.f32 %v4168, %v2404
        %v4240 = vmul.f32 %v4172, %v2404
        %v4241 = vmul.f32 %v4176, %v2404
        %v4242 = vadd.f32 %v3858, %v4178
        %v4243 = vadd.f32 %v3859, %v4179
        %v4244 = vadd.f32 %v3860, %v4180
        %v4245 = vadd.f32 %v3861, %v4181
        %v4246 = vadd.f32 %v3862, %v4182
        %v4247 = vadd.f32 %v3863, %v4183
        %v4248 = vadd.f32 %v3864, %v4184
        %v4249 = vadd.f32 %v3865, %v4185
        %v4250 = vadd.f32 %v3866, %v4186
        %v4251 = vadd.f32 %v3867, %v4187
        %v4252 = vadd.f32 %v3868, %v4188
        %v4253 = vadd.f32 %v3869, %v4189
        %v4254 = vadd.f32 %v3870, %v4190
        %v4255 = vadd.f32 %v3871, %v4191
        %v4256 = vadd.f32 %v3872, %v4192
        %v4257 = vadd.f32 %v3873, %v4193
        %v4258 = vadd.f32 %v3874, %v4194
        %v4259 = vadd.f32 %v3875, %v4195
        %v4260 = vadd.f32 %v3876, %v4196
        %v4261 = vadd.f32 %v3877, %v4197
        %v4262 = vadd.f32 %v3878, %v4198
        %v4263 = vadd.f32 %v3879, %v4199
        %v4264 = vadd.f32 %v3880, %v4200
        %v4265 = vadd.f32 %v3881, %v4201
        %v4266 = vadd.f32 %v3882, %v4202
        %v4267 = vadd.f32 %v3883, %v4203
        %v4268 = vadd.f32 %v3884, %v4204
        %v4269 = vadd.f32 %v3885, %v4205
        %v4270 = vadd.f32 %v3886, %v4206
        %v4271 = vadd.f32 %v3887, %v4207
        %v4272 = vadd.f32 %v3888, %v4208
        %v4273 = vadd.f32 %v3889, %v4209
        %v4274 = vadd.f32 %v3890, %v4210
        %v4275 = vadd.f32 %v3891, %v4211
        %v4276 = vadd.f32 %v3892, %v4212
        %v4277 = vadd.f32 %v3893, %v4213
        %v4278 = vadd.f32 %v3894, %v4214
        %v4279 = vadd.f32 %v3895, %v4215
        %v4280 = vadd.f32 %v3896, %v4216
        %v4281 = vadd.f32 %v3897, %v4217
        %v4282 = vadd.f32 %v3898, %v4218
        %v4283 = vadd.f32 %v3899, %v4219
        %v4284 = vadd.f32 %v3900, %v4220
        %v4285 = vadd.f32 %v3901, %v4221
        %v4286 = vadd.f32 %v3902, %v4222
        %v4287 = vadd.f32 %v3903, %v4223
        %v4288 = vadd.f32 %v3904, %v4224
        %v4289 = vadd.f32 %v3905, %v4225
        %v4290 = vadd.f32 %v3906, %v4226
        %v4291 = vadd.f32 %v3907, %v4227
        %v4292 = vadd.f32 %v3908, %v4228
        %v4293 = vadd.f32 %v3909, %v4229
        %v4294 = vadd.f32 %v3910, %v4230
        %v4295 = vadd.f32 %v3911, %v4231
        %v4296 = vadd.f32 %v3912, %v4232
        %v4297 = vadd.f32 %v3913, %v4233
        %v4298 = vadd.f32 %v3914, %v4234
        %v4299 = vadd.f32 %v3915, %v4235
        %v4300 = vadd.f32 %v3916, %v4236
        %v4301 = vadd.f32 %v3917, %v4237
        %v4302 = vadd.f32 %v3918, %v4238
        %v4303 = vadd.f32 %v3919, %v4239
        %v4304 = vadd.f32 %v3920, %v4240
        %v4305 = vadd.f32 %v3921, %v4241
        %v4306 = vmul.f32 %v3474, %v4242
        %v4307 = vmul.f32 %v3475, %v4243
        %v4308 = vmul.f32 %v3476, %v4244
        %v4309 = vmul.f32 %v3477, %v4245
        %v4310 = vmul.f32 %v3478, %v4246
        %v4311 = vmul.f32 %v3479, %v4247
        %v4312 = vmul.f32 %v3480, %v4248
        %v4313 = vmul.f32 %v3481, %v4249
        %v4314 = vmul.f32 %v3482, %v4250
        %v4315 = vmul.f32 %v3483, %v4251
        %v4316 = vmul.f32 %v3484, %v4252
        %v4317 = vmul.f32 %v3485, %v4253
        %v4318 = vmul.f32 %v3486, %v4254
        %v4319 = vmul.f32 %v3487, %v4255
        %v4320 = vmul.f32 %v3488, %v4256
        %v4321 = vmul.f32 %v3489, %v4257
        %v4322 = vmul.f32 %v3490, %v4258
        %v4323 = vmul.f32 %v3491, %v4259
        %v4324 = vmul.f32 %v3492, %v4260
        %v4325 = vmul.f32 %v3493, %v4261
        %v4326 = vmul.f32 %v3494, %v4262
        %v4327 = vmul.f32 %v3495, %v4263
        %v4328 = vmul.f32 %v3496, %v4264
        %v4329 = vmul.f32 %v3497, %v4265
        %v4330 = vmul.f32 %v3498, %v4266
        %v4331 = vmul.f32 %v3499, %v4267
        %v4332 = vmul.f32 %v3500, %v4268
        %v4333 = vmul.f32 %v3501, %v4269
        %v4334 = vmul.f32 %v3502, %v4270
        %v4335 = vmul.f32 %v3503, %v4271
        %v4336 = vmul.f32 %v3504, %v4272
        %v4337 = vmul.f32 %v3505, %v4273
        %v4338 = vmul.f32 %v3506, %v4274
        %v4339 = vmul.f32 %v3507, %v4275
        %v4340 = vmul.f32 %v3508, %v4276
        %v4341 = vmul.f32 %v3509, %v4277
        %v4342 = vmul.f32 %v3510, %v4278
        %v4343 = vmul.f32 %v3511, %v4279
        %v4344 = vmul.f32 %v3512, %v4280
        %v4345 = vmul.f32 %v3513, %v4281
        %v4346 = vmul.f32 %v3514, %v4282
        %v4347 = vmul.f32 %v3515, %v4283
        %v4348 = vmul.f32 %v3516, %v4284
        %v4349 = vmul.f32 %v3517, %v4285
        %v4350 = vmul.f32 %v3518, %v4286
        %v4351 = vmul.f32 %v3519, %v4287
        %v4352 = vmul.f32 %v3520, %v4288
        %v4353 = vmul.f32 %v3521, %v4289
        %v4354 = vmul.f32 %v3522, %v4290
        %v4355 = vmul.f32 %v3523, %v4291
        %v4356 = vmul.f32 %v3524, %v4292
        %v4357 = vmul.f32 %v3525, %v4293
        %v4358 = vmul.f32 %v3526, %v4294
        %v4359 = vmul.f32 %v3527, %v4295
        %v4360 = vmul.f32 %v3528, %v4296
        %v4361 = vmul.f32 %v3529, %v4297
        %v4362 = vmul.f32 %v3530, %v4298
        %v4363 = vmul.f32 %v3531, %v4299
        %v4364 = vmul.f32 %v3532, %v4300
        %v4365 = vmul.f32 %v3533, %v4301
        %v4366 = vmul.f32 %v3534, %v4302
        %v4367 = vmul.f32 %v3535, %v4303
        %v4368 = vmul.f32 %v3536, %v4304
        %v4369 = vmul.f32 %v3537, %v4305
        %s4370 = scalar_lea.vmem %s5, 128
        %v4371 = vld [vmem:[%s4370] sm:$0xff]
        %v4372 = vld [vmem:[%s4370 + $0x8] sm:$0xff]
        %v4373 = vld [vmem:[%s4370 + $0x10] sm:$0xff]
        %v4374 = vld [vmem:[%s4370 + $0x18] sm:$0xff]
        %v4375 = vld [vmem:[%s4370 + $0x20] sm:$0xff]
        %v4376 = vld [vmem:[%s4370 + $0x28] sm:$0xff]
        %v4377 = vld [vmem:[%s4370 + $0x30] sm:$0xff]
        %v4378 = vld [vmem:[%s4370 + $0x38] sm:$0xff]
        %v4379 = vld [vmem:[%s4370 + $0x40] sm:$0xff]
        %v4380 = vld [vmem:[%s4370 + $0x48] sm:$0xff]
        %v4381 = vld [vmem:[%s4370 + $0x50] sm:$0xff]
        %v4382 = vld [vmem:[%s4370 + $0x58] sm:$0xff]
        %v4383 = vld [vmem:[%s4370 + $0x60] sm:$0xff]
        %v4384 = vld [vmem:[%s4370 + $0x68] sm:$0xff]
        %v4385 = vld [vmem:[%s4370 + $0x70] sm:$0xff]
        %v4386 = vld [vmem:[%s4370 + $0x78] sm:$0xff]
        %4387 = vmatprep.subr.mxu0 0.0
        %4388 = vmatpush1.msra.mxu0 %v4371
        %4389 = vmatprep.subr.mxu0 0.0
        %4390 = vmatpush1.msra.mxu0 %v4372
        %4391 = vmatprep.subr.mxu0 0.0
        %4392 = vmatpush1.msra.mxu0 %v4373
        %4393 = vmatprep.subr.mxu0 0.0
        %4394 = vmatpush1.msra.mxu0 %v4374
        %4395 = vmatprep.subr.mxu0 0.0
        %4396 = vmatpush1.msra.mxu0 %v4375
        %4397 = vmatprep.subr.mxu0 0.0
        %4398 = vmatpush1.msra.mxu0 %v4376
        %4399 = vmatprep.subr.mxu0 0.0
        %4400 = vmatpush1.msra.mxu0 %v4377
        %4401 = vmatprep.subr.mxu0 0.0
        %4402 = vmatpush1.msra.mxu0 %v4378
        %4403 = vmatprep.subr.mxu0 0.0
        %4404 = vmatpush1.msra.mxu0 %v4379
        %4405 = vmatprep.subr.mxu0 0.0
        %4406 = vmatpush1.msra.mxu0 %v4380
        %4407 = vmatprep.subr.mxu0 0.0
        %4408 = vmatpush1.msra.mxu0 %v4381
        %4409 = vmatprep.subr.mxu0 0.0
        %4410 = vmatpush1.msra.mxu0 %v4382
        %4411 = vmatprep.subr.mxu0 0.0
        %4412 = vmatpush1.msra.mxu0 %v4383
        %4413 = vmatprep.subr.mxu0 0.0
        %4414 = vmatpush1.msra.mxu0 %v4384
        %4415 = vmatprep.subr.mxu0 0.0
        %4416 = vmatpush1.msra.mxu0 %v4385
        %4417 = vmatprep.subr.mxu0 0.0
        %4418 = vmatpush1.msra.mxu0 %v4386
        %4419 = vmatprep.subr.mxu0 0.0
        %4420 = vmatpush1.msra.mxu0 0.0
        %4421 = vmatprep.subr.mxu0 0.0
        %4422 = vmatpush1.msra.mxu0 0.0
        %4423 = vmatprep.subr.mxu0 0.0
        %4424 = vmatpush1.msra.mxu0 0.0
        %4425 = vmatprep.subr.mxu0 0.0
        %4426 = vmatpush1.msra.mxu0 0.0
        %4427 = vmatprep.subr.mxu0 0.0
        %4428 = vmatpush1.msra.mxu0 0.0
        %4429 = vmatprep.subr.mxu0 0.0
        %4430 = vmatpush1.msra.mxu0 0.0
        %4431 = vmatprep.subr.mxu0 0.0
        %4432 = vmatpush1.msra.mxu0 0.0
        %4433 = vmatprep.subr.mxu0 0.0
        %4434 = vmatpush1.msra.mxu0 0.0
        %4435 = vmatprep.subr.mxu0 0.0
        %4436 = vmatpush1.msra.mxu0 0.0
        %4437 = vmatprep.subr.mxu0 0.0
        %4438 = vmatpush1.msra.mxu0 0.0
        %4439 = vmatprep.subr.mxu0 0.0
        %4440 = vmatpush1.msra.mxu0 0.0
        %4441 = vmatprep.subr.mxu0 0.0
        %4442 = vmatpush1.msra.mxu0 0.0
        %4443 = vmatprep.subr.mxu0 0.0
        %4444 = vmatpush1.msra.mxu0 0.0
        %4445 = vmatprep.subr.mxu0 0.0
        %4446 = vmatpush1.msra.mxu0 0.0
        %4447 = vmatprep.subr.mxu0 0.0
        %4448 = vmatpush1.msra.mxu0 0.0
        %4449 = vmatprep.subr.mxu0 0.0
        %4450 = vmatpush1.msra.mxu0 0.0
        %4451 = vmatprep.mubr.f32.mxu0 0.0
        %4452 = vmatmul.mubr.f32.gmra.mrb[0].mxu0 %v4306
        %v4453 = vpop.f32.mrb[0].mxu0
        %v4454 = vadd.f32 0.0, %v4453
        %v4455 = vpop.f32.mrb[0].mxu0
        %4456 = vmatprep.mubr.f32.mxu0 0.0
        %4457 = vmatmul.mubr.f32.gmra.mrb[0].mxu0 %v4307
        %v4458 = vpop.f32.mrb[0].mxu0
        %v4459 = vadd.f32 0.0, %v4458
        %v4460 = vpop.f32.mrb[0].mxu0
        %4461 = vmatprep.mubr.f32.mxu0 0.0
        %4462 = vmatmul.mubr.f32.gmra.mrb[0].mxu0 %v4308
        %v4463 = vpop.f32.mrb[0].mxu0
        %v4464 = vadd.f32 0.0, %v4463
        %v4465 = vpop.f32.mrb[0].mxu0
        %4466 = vmatprep.mubr.f32.mxu0 0.0
        %4467 = vmatmul.mubr.f32.gmra.mrb[0].mxu0 %v4309
        %v4468 = vpop.f32.mrb[0].mxu0
        %v4469 = vadd.f32 0.0, %v4468
        %v4470 = vpop.f32.mrb[0].mxu0
        %4471 = vmatprep.mubr.f32.mxu0 0.0
        %4472 = vmatmul.mubr.f32.gmra.mrb[0].mxu0 %v4310
        %v4473 = vpop.f32.mrb[0].mxu0
        %v4474 = vadd.f32 0.0, %v4473
        %v4475 = vpop.f32.mrb[0].mxu0
        %4476 = vmatprep.mubr.f32.mxu0 0.0
        %4477 = vmatmul.mubr.f32.gmra.mrb[0].mxu0 %v4311
        %v4478 = vpop.f32.mrb[0].mxu0
        %v4479 = vadd.f32 0.0, %v4478
        %v4480 = vpop.f32.mrb[0].mxu0
        %4481 = vmatprep.mubr.f32.mxu0 0.0
        %4482 = vmatmul.mubr.f32.gmra.mrb[0].mxu0 %v4312
        %v4483 = vpop.f32.mrb[0].mxu0
        %v4484 = vadd.f32 0.0, %v4483
        %v4485 = vpop.f32.mrb[0].mxu0
        %4486 = vmatprep.mubr.f32.mxu0 0.0
        %4487 = vmatmul.mubr.f32.gmra.mrb[0].mxu0 %v4313
        %v4488 = vpop.f32.mrb[0].mxu0
        %v4489 = vadd.f32 0.0, %v4488
        %v4490 = vpop.f32.mrb[0].mxu0
        %4491 = vmatprep.mubr.f32.mxu0 0.0
        %4492 = vmatmul.mubr.f32.gmra.mrb[0].mxu0 %v4314
        %v4493 = vpop.f32.mrb[0].mxu0
        %v4494 = vadd.f32 0.0, %v4493
        %v4495 = vpop.f32.mrb[0].mxu0
        %4496 = vmatprep.mubr.f32.mxu0 0.0
        %4497 = vmatmul.mubr.f32.gmra.mrb[0].mxu0 %v4315
        %v4498 = vpop.f32.mrb[0].mxu0
        %v4499 = vadd.f32 0.0, %v4498
        %v4500 = vpop.f32.mrb[0].mxu0
        %4501 = vmatprep.mubr.f32.mxu0 0.0
        %4502 = vmatmul.mubr.f32.gmra.mrb[0].mxu0 %v4316
        %v4503 = vpop.f32.mrb[0].mxu0
        %v4504 = vadd.f32 0.0, %v4503
        %v4505 = vpop.f32.mrb[0].mxu0
        %4506 = vmatprep.mubr.f32.mxu0 0.0
        %4507 = vmatmul.mubr.f32.gmra.mrb[0].mxu0 %v4317
        %v4508 = vpop.f32.mrb[0].mxu0
        %v4509 = vadd.f32 0.0, %v4508
        %v4510 = vpop.f32.mrb[0].mxu0
        %4511 = vmatprep.mubr.f32.mxu0 0.0
        %4512 = vmatmul.mubr.f32.gmra.mrb[0].mxu0 %v4318
        %v4513 = vpop.f32.mrb[0].mxu0
        %v4514 = vadd.f32 0.0, %v4513
        %v4515 = vpop.f32.mrb[0].mxu0
        %4516 = vmatprep.mubr.f32.mxu0 0.0
        %4517 = vmatmul.mubr.f32.gmra.mrb[0].mxu0 %v4319
        %v4518 = vpop.f32.mrb[0].mxu0
        %v4519 = vadd.f32 0.0, %v4518
        %v4520 = vpop.f32.mrb[0].mxu0
        %4521 = vmatprep.mubr.f32.mxu0 0.0
        %4522 = vmatmul.mubr.f32.gmra.mrb[0].mxu0 %v4320
        %v4523 = vpop.f32.mrb[0].mxu0
        %v4524 = vadd.f32 0.0, %v4523
        %v4525 = vpop.f32.mrb[0].mxu0
        %4526 = vmatprep.mubr.f32.mxu0 0.0
        %4527 = vmatmul.mubr.f32.gmra.mrb[0].mxu0 %v4321
        %v4528 = vpop.f32.mrb[0].mxu0
        %v4529 = vadd.f32 0.0, %v4528
        %v4530 = vpop.f32.mrb[0].mxu0
        %4531 = vmatprep.mubr.f32.mxu0 0.0
        %4532 = vmatmul.mubr.f32.gmra.mrb[0].mxu0 %v4322
        %v4533 = vpop.f32.mrb[0].mxu0
        %v4534 = vadd.f32 0.0, %v4533
        %v4535 = vpop.f32.mrb[0].mxu0
        %4536 = vmatprep.mubr.f32.mxu0 0.0
        %4537 = vmatmul.mubr.f32.gmra.mrb[0].mxu0 %v4323
        %v4538 = vpop.f32.mrb[0].mxu0
        %v4539 = vadd.f32 0.0, %v4538
        %v4540 = vpop.f32.mrb[0].mxu0
        %4541 = vmatprep.mubr.f32.mxu0 0.0
        %4542 = vmatmul.mubr.f32.gmra.mrb[0].mxu0 %v4324
        %v4543 = vpop.f32.mrb[0].mxu0
        %v4544 = vadd.f32 0.0, %v4543
        %v4545 = vpop.f32.mrb[0].mxu0
        %4546 = vmatprep.mubr.f32.mxu0 0.0
        %4547 = vmatmul.mubr.f32.gmra.mrb[0].mxu0 %v4325
        %v4548 = vpop.f32.mrb[0].mxu0
        %v4549 = vadd.f32 0.0, %v4548
        %v4550 = vpop.f32.mrb[0].mxu0
        %4551 = vmatprep.mubr.f32.mxu0 0.0
        %4552 = vmatmul.mubr.f32.gmra.mrb[0].mxu0 %v4326
        %v4553 = vpop.f32.mrb[0].mxu0
        %v4554 = vadd.f32 0.0, %v4553
        %v4555 = vpop.f32.mrb[0].mxu0
        %4556 = vmatprep.mubr.f32.mxu0 0.0
        %4557 = vmatmul.mubr.f32.gmra.mrb[0].mxu0 %v4327
        %v4558 = vpop.f32.mrb[0].mxu0
        %v4559 = vadd.f32 0.0, %v4558
        %v4560 = vpop.f32.mrb[0].mxu0
        %4561 = vmatprep.mubr.f32.mxu0 0.0
        %4562 = vmatmul.mubr.f32.gmra.mrb[0].mxu0 %v4328
        %v4563 = vpop.f32.mrb[0].mxu0
        %v4564 = vadd.f32 0.0, %v4563
        %v4565 = vpop.f32.mrb[0].mxu0
        %4566 = vmatprep.mubr.f32.mxu0 0.0
        %4567 = vmatmul.mubr.f32.gmra.mrb[0].mxu0 %v4329
        %v4568 = vpop.f32.mrb[0].mxu0
        %v4569 = vadd.f32 0.0, %v4568
        %v4570 = vpop.f32.mrb[0].mxu0
        %4571 = vmatprep.mubr.f32.mxu0 0.0
        %4572 = vmatmul.mubr.f32.gmra.mrb[0].mxu0 %v4330
        %v4573 = vpop.f32.mrb[0].mxu0
        %v4574 = vadd.f32 0.0, %v4573
        %v4575 = vpop.f32.mrb[0].mxu0
        %4576 = vmatprep.mubr.f32.mxu0 0.0
        %4577 = vmatmul.mubr.f32.gmra.mrb[0].mxu0 %v4331
        %v4578 = vpop.f32.mrb[0].mxu0
        %v4579 = vadd.f32 0.0, %v4578
        %v4580 = vpop.f32.mrb[0].mxu0
        %4581 = vmatprep.mubr.f32.mxu0 0.0
        %4582 = vmatmul.mubr.f32.gmra.mrb[0].mxu0 %v4332
        %v4583 = vpop.f32.mrb[0].mxu0
        %v4584 = vadd.f32 0.0, %v4583
        %v4585 = vpop.f32.mrb[0].mxu0
        %4586 = vmatprep.mubr.f32.mxu0 0.0
        %4587 = vmatmul.mubr.f32.gmra.mrb[0].mxu0 %v4333
        %v4588 = vpop.f32.mrb[0].mxu0
        %v4589 = vadd.f32 0.0, %v4588
        %v4590 = vpop.f32.mrb[0].mxu0
        %4591 = vmatprep.mubr.f32.mxu0 0.0
        %4592 = vmatmul.mubr.f32.gmra.mrb[0].mxu0 %v4334
        %v4593 = vpop.f32.mrb[0].mxu0
        %v4594 = vadd.f32 0.0, %v4593
        %v4595 = vpop.f32.mrb[0].mxu0
        %4596 = vmatprep.mubr.f32.mxu0 0.0
        %4597 = vmatmul.mubr.f32.gmra.mrb[0].mxu0 %v4335
        %v4598 = vpop.f32.mrb[0].mxu0
        %v4599 = vadd.f32 0.0, %v4598
        %v4600 = vpop.f32.mrb[0].mxu0
        %4601 = vmatprep.mubr.f32.mxu0 0.0
        %4602 = vmatmul.mubr.f32.gmra.mrb[0].mxu0 %v4336
        %v4603 = vpop.f32.mrb[0].mxu0
        %v4604 = vadd.f32 0.0, %v4603
        %v4605 = vpop.f32.mrb[0].mxu0
        %4606 = vmatprep.mubr.f32.mxu0 0.0
        %4607 = vmatmul.mubr.f32.gmra.mrb[0].mxu0 %v4337
        %v4608 = vpop.f32.mrb[0].mxu0
        %v4609 = vadd.f32 0.0, %v4608
        %v4610 = vpop.f32.mrb[0].mxu0
        %4611 = vmatprep.mubr.f32.mxu0 0.0
        %4612 = vmatmul.mubr.f32.gmra.mrb[0].mxu0 %v4338
        %v4613 = vpop.f32.mrb[0].mxu0
        %v4614 = vadd.f32 0.0, %v4613
        %v4615 = vpop.f32.mrb[0].mxu0
        %4616 = vmatprep.mubr.f32.mxu0 0.0
        %4617 = vmatmul.mubr.f32.gmra.mrb[0].mxu0 %v4339
        %v4618 = vpop.f32.mrb[0].mxu0
        %v4619 = vadd.f32 0.0, %v4618
        %v4620 = vpop.f32.mrb[0].mxu0
        %4621 = vmatprep.mubr.f32.mxu0 0.0
        %4622 = vmatmul.mubr.f32.gmra.mrb[0].mxu0 %v4340
        %v4623 = vpop.f32.mrb[0].mxu0
        %v4624 = vadd.f32 0.0, %v4623
        %v4625 = vpop.f32.mrb[0].mxu0
        %4626 = vmatprep.mubr.f32.mxu0 0.0
        %4627 = vmatmul.mubr.f32.gmra.mrb[0].mxu0 %v4341
        %v4628 = vpop.f32.mrb[0].mxu0
        %v4629 = vadd.f32 0.0, %v4628
        %v4630 = vpop.f32.mrb[0].mxu0
        %4631 = vmatprep.mubr.f32.mxu0 0.0
        %4632 = vmatmul.mubr.f32.gmra.mrb[0].mxu0 %v4342
        %v4633 = vpop.f32.mrb[0].mxu0
        %v4634 = vadd.f32 0.0, %v4633
        %v4635 = vpop.f32.mrb[0].mxu0
        %4636 = vmatprep.mubr.f32.mxu0 0.0
        %4637 = vmatmul.mubr.f32.gmra.mrb[0].mxu0 %v4343
        %v4638 = vpop.f32.mrb[0].mxu0
        %v4639 = vadd.f32 0.0, %v4638
        %v4640 = vpop.f32.mrb[0].mxu0
        %4641 = vmatprep.mubr.f32.mxu0 0.0
        %4642 = vmatmul.mubr.f32.gmra.mrb[0].mxu0 %v4344
        %v4643 = vpop.f32.mrb[0].mxu0
        %v4644 = vadd.f32 0.0, %v4643
        %v4645 = vpop.f32.mrb[0].mxu0
        %4646 = vmatprep.mubr.f32.mxu0 0.0
        %4647 = vmatmul.mubr.f32.gmra.mrb[0].mxu0 %v4345
        %v4648 = vpop.f32.mrb[0].mxu0
        %v4649 = vadd.f32 0.0, %v4648
        %v4650 = vpop.f32.mrb[0].mxu0
        %4651 = vmatprep.mubr.f32.mxu0 0.0
        %4652 = vmatmul.mubr.f32.gmra.mrb[0].mxu0 %v4346
        %v4653 = vpop.f32.mrb[0].mxu0
        %v4654 = vadd.f32 0.0, %v4653
        %v4655 = vpop.f32.mrb[0].mxu0
        %4656 = vmatprep.mubr.f32.mxu0 0.0
        %4657 = vmatmul.mubr.f32.gmra.mrb[0].mxu0 %v4347
        %v4658 = vpop.f32.mrb[0].mxu0
        %v4659 = vadd.f32 0.0, %v4658
        %v4660 = vpop.f32.mrb[0].mxu0
        %4661 = vmatprep.mubr.f32.mxu0 0.0
        %4662 = vmatmul.mubr.f32.gmra.mrb[0].mxu0 %v4348
        %v4663 = vpop.f32.mrb[0].mxu0
        %v4664 = vadd.f32 0.0, %v4663
        %v4665 = vpop.f32.mrb[0].mxu0
        %4666 = vmatprep.mubr.f32.mxu0 0.0
        %4667 = vmatmul.mubr.f32.gmra.mrb[0].mxu0 %v4349
        %v4668 = vpop.f32.mrb[0].mxu0
        %v4669 = vadd.f32 0.0, %v4668
        %v4670 = vpop.f32.mrb[0].mxu0
        %4671 = vmatprep.mubr.f32.mxu0 0.0
        %4672 = vmatmul.mubr.f32.gmra.mrb[0].mxu0 %v4350
        %v4673 = vpop.f32.mrb[0].mxu0
        %v4674 = vadd.f32 0.0, %v4673
        %v4675 = vpop.f32.mrb[0].mxu0
        %4676 = vmatprep.mubr.f32.mxu0 0.0
        %4677 = vmatmul.mubr.f32.gmra.mrb[0].mxu0 %v4351
        %v4678 = vpop.f32.mrb[0].mxu0
        %v4679 = vadd.f32 0.0, %v4678
        %v4680 = vpop.f32.mrb[0].mxu0
        %4681 = vmatprep.mubr.f32.mxu0 0.0
        %4682 = vmatmul.mubr.f32.gmra.mrb[0].mxu0 %v4352
        %v4683 = vpop.f32.mrb[0].mxu0
        %v4684 = vadd.f32 0.0, %v4683
        %v4685 = vpop.f32.mrb[0].mxu0
        %4686 = vmatprep.mubr.f32.mxu0 0.0
        %4687 = vmatmul.mubr.f32.gmra.mrb[0].mxu0 %v4353
        %v4688 = vpop.f32.mrb[0].mxu0
        %v4689 = vadd.f32 0.0, %v4688
        %v4690 = vpop.f32.mrb[0].mxu0
        %4691 = vmatprep.mubr.f32.mxu0 0.0
        %4692 = vmatmul.mubr.f32.gmra.mrb[0].mxu0 %v4354
        %v4693 = vpop.f32.mrb[0].mxu0
        %v4694 = vadd.f32 0.0, %v4693
        %v4695 = vpop.f32.mrb[0].mxu0
        %4696 = vmatprep.mubr.f32.mxu0 0.0
        %4697 = vmatmul.mubr.f32.gmra.mrb[0].mxu0 %v4355
        %v4698 = vpop.f32.mrb[0].mxu0
        %v4699 = vadd.f32 0.0, %v4698
        %v4700 = vpop.f32.mrb[0].mxu0
        %4701 = vmatprep.mubr.f32.mxu0 0.0
        %4702 = vmatmul.mubr.f32.gmra.mrb[0].mxu0 %v4356
        %v4703 = vpop.f32.mrb[0].mxu0
        %v4704 = vadd.f32 0.0, %v4703
        %v4705 = vpop.f32.mrb[0].mxu0
        %4706 = vmatprep.mubr.f32.mxu0 0.0
        %4707 = vmatmul.mubr.f32.gmra.mrb[0].mxu0 %v4357
        %v4708 = vpop.f32.mrb[0].mxu0
        %v4709 = vadd.f32 0.0, %v4708
        %v4710 = vpop.f32.mrb[0].mxu0
        %4711 = vmatprep.mubr.f32.mxu0 0.0
        %4712 = vmatmul.mubr.f32.gmra.mrb[0].mxu0 %v4358
        %v4713 = vpop.f32.mrb[0].mxu0
        %v4714 = vadd.f32 0.0, %v4713
        %v4715 = vpop.f32.mrb[0].mxu0
        %4716 = vmatprep.mubr.f32.mxu0 0.0
        %4717 = vmatmul.mubr.f32.gmra.mrb[0].mxu0 %v4359
        %v4718 = vpop.f32.mrb[0].mxu0
        %v4719 = vadd.f32 0.0, %v4718
        %v4720 = vpop.f32.mrb[0].mxu0
        %4721 = vmatprep.mubr.f32.mxu0 0.0
        %4722 = vmatmul.mubr.f32.gmra.mrb[0].mxu0 %v4360
        %v4723 = vpop.f32.mrb[0].mxu0
        %v4724 = vadd.f32 0.0, %v4723
        %v4725 = vpop.f32.mrb[0].mxu0
        %4726 = vmatprep.mubr.f32.mxu0 0.0
        %4727 = vmatmul.mubr.f32.gmra.mrb[0].mxu0 %v4361
        %v4728 = vpop.f32.mrb[0].mxu0
        %v4729 = vadd.f32 0.0, %v4728
        %v4730 = vpop.f32.mrb[0].mxu0
        %4731 = vmatprep.mubr.f32.mxu0 0.0
        %4732 = vmatmul.mubr.f32.gmra.mrb[0].mxu0 %v4362
        %v4733 = vpop.f32.mrb[0].mxu0
        %v4734 = vadd.f32 0.0, %v4733
        %v4735 = vpop.f32.mrb[0].mxu0
        %4736 = vmatprep.mubr.f32.mxu0 0.0
        %4737 = vmatmul.mubr.f32.gmra.mrb[0].mxu0 %v4363
        %v4738 = vpop.f32.mrb[0].mxu0
        %v4739 = vadd.f32 0.0, %v4738
        %v4740 = vpop.f32.mrb[0].mxu0
        %4741 = vmatprep.mubr.f32.mxu0 0.0
        %4742 = vmatmul.mubr.f32.gmra.mrb[0].mxu0 %v4364
        %v4743 = vpop.f32.mrb[0].mxu0
        %v4744 = vadd.f32 0.0, %v4743
        %v4745 = vpop.f32.mrb[0].mxu0
        %4746 = vmatprep.mubr.f32.mxu0 0.0
        %4747 = vmatmul.mubr.f32.gmra.mrb[0].mxu0 %v4365
        %v4748 = vpop.f32.mrb[0].mxu0
        %v4749 = vadd.f32 0.0, %v4748
        %v4750 = vpop.f32.mrb[0].mxu0
        %4751 = vmatprep.mubr.f32.mxu0 0.0
        %4752 = vmatmul.mubr.f32.gmra.mrb[0].mxu0 %v4366
        %v4753 = vpop.f32.mrb[0].mxu0
        %v4754 = vadd.f32 0.0, %v4753
        %v4755 = vpop.f32.mrb[0].mxu0
        %4756 = vmatprep.mubr.f32.mxu0 0.0
        %4757 = vmatmul.mubr.f32.gmra.mrb[0].mxu0 %v4367
        %v4758 = vpop.f32.mrb[0].mxu0
        %v4759 = vadd.f32 0.0, %v4758
        %v4760 = vpop.f32.mrb[0].mxu0
        %4761 = vmatprep.mubr.f32.mxu0 0.0
        %4762 = vmatmul.mubr.f32.gmra.mrb[0].mxu0 %v4368
        %v4763 = vpop.f32.mrb[0].mxu0
        %v4764 = vadd.f32 0.0, %v4763
        %v4765 = vpop.f32.mrb[0].mxu0
        %4766 = vmatprep.mubr.f32.mxu0 0.0
        %4767 = vmatmul.mubr.f32.gmra.mrb[0].mxu0 %v4369
        %v4768 = vpop.f32.mrb[0].mxu0
        %v4769 = vadd.f32 0.0, %v4768
        %v4770 = vpop.f32.mrb[0].mxu0
        %4771 = vdwg.mxu0
        %4772 = vmatprep.subr.mxu0 0.0
        %4773 = vmatpush1.msra.mxu0 %v2597
        %4774 = vmatprep.subr.mxu0 0.0
        %4775 = vmatpush1.msra.mxu0 %v2598
        %4776 = vmatprep.subr.mxu0 0.0
        %4777 = vmatpush1.msra.mxu0 %v2599
        %4778 = vmatprep.subr.mxu0 0.0
        %4779 = vmatpush1.msra.mxu0 %v2600
        %4780 = vmatprep.subr.mxu0 0.0
        %4781 = vmatpush1.msra.mxu0 %v2601
        %4782 = vmatprep.subr.mxu0 0.0
        %4783 = vmatpush1.msra.mxu0 %v2602
        %4784 = vmatprep.subr.mxu0 0.0
        %4785 = vmatpush1.msra.mxu0 %v2603
        %4786 = vmatprep.subr.mxu0 0.0
        %4787 = vmatpush1.msra.mxu0 %v2604
        %4788 = vmatprep.subr.mxu0 0.0
        %4789 = vmatpush1.msra.mxu0 %v2605
        %4790 = vmatprep.subr.mxu0 0.0
        %4791 = vmatpush1.msra.mxu0 %v2606
        %4792 = vmatprep.subr.mxu0 0.0
        %4793 = vmatpush1.msra.mxu0 %v2607
        %4794 = vmatprep.subr.mxu0 0.0
        %4795 = vmatpush1.msra.mxu0 %v2608
        %4796 = vmatprep.subr.mxu0 0.0
        %4797 = vmatpush1.msra.mxu0 %v2609
        %4798 = vmatprep.subr.mxu0 0.0
        %4799 = vmatpush1.msra.mxu0 %v2610
        %4800 = vmatprep.subr.mxu0 0.0
        %4801 = vmatpush1.msra.mxu0 %v2611
        %4802 = vmatprep.subr.mxu0 0.0
        %4803 = vmatpush1.msra.mxu0 %v2612
        %4804 = vmatprep.subr.mxu0 0.0
        %4805 = vmatpush1.msra.mxu0 0.0
        %4806 = vmatprep.subr.mxu0 0.0
        %4807 = vmatpush1.msra.mxu0 0.0
        %4808 = vmatprep.subr.mxu0 0.0
        %4809 = vmatpush1.msra.mxu0 0.0
        %4810 = vmatprep.subr.mxu0 0.0
        %4811 = vmatpush1.msra.mxu0 0.0
        %4812 = vmatprep.subr.mxu0 0.0
        %4813 = vmatpush1.msra.mxu0 0.0
        %4814 = vmatprep.subr.mxu0 0.0
        %4815 = vmatpush1.msra.mxu0 0.0
        %4816 = vmatprep.subr.mxu0 0.0
        %4817 = vmatpush1.msra.mxu0 0.0
        %4818 = vmatprep.subr.mxu0 0.0
        %4819 = vmatpush1.msra.mxu0 0.0
        %4820 = vmatprep.subr.mxu0 0.0
        %4821 = vmatpush1.msra.mxu0 0.0
        %4822 = vmatprep.subr.mxu0 0.0
        %4823 = vmatpush1.msra.mxu0 0.0
        %4824 = vmatprep.subr.mxu0 0.0
        %4825 = vmatpush1.msra.mxu0 0.0
        %4826 = vmatprep.subr.mxu0 0.0
        %4827 = vmatpush1.msra.mxu0 0.0
        %4828 = vmatprep.subr.mxu0 0.0
        %4829 = vmatpush1.msra.mxu0 0.0
        %4830 = vmatprep.subr.mxu0 0.0
        %4831 = vmatpush1.msra.mxu0 0.0
        %4832 = vmatprep.subr.mxu0 0.0
        %4833 = vmatpush1.msra.mxu0 0.0
        %4834 = vmatprep.subr.mxu0 0.0
        %4835 = vmatpush1.msra.mxu0 0.0
        %4836 = vmatprep.mubr.f32.mxu0 0.0
        %4837 = vmatmul.mubr.f32.gmra.mrb[0].mxu0 %v2533
        %v4838 = vpop.f32.mrb[0].mxu0
        %v4839 = vadd.f32 %v4454, %v4838
        %v4840 = vpop.f32.mrb[0].mxu0
        %4841 = vmatprep.mubr.f32.mxu0 0.0
        %4842 = vmatmul.mubr.f32.gmra.mrb[0].mxu0 %v2534
        %v4843 = vpop.f32.mrb[0].mxu0
        %v4844 = vadd.f32 %v4459, %v4843
        %v4845 = vpop.f32.mrb[0].mxu0
        %4846 = vmatprep.mubr.f32.mxu0 0.0
        %4847 = vmatmul.mubr.f32.gmra.mrb[0].mxu0 %v2535
        %v4848 = vpop.f32.mrb[0].mxu0
        %v4849 = vadd.f32 %v4464, %v4848
        %v4850 = vpop.f32.mrb[0].mxu0
        %4851 = vmatprep.mubr.f32.mxu0 0.0
        %4852 = vmatmul.mubr.f32.gmra.mrb[0].mxu0 %v2536
        %v4853 = vpop.f32.mrb[0].mxu0
        %v4854 = vadd.f32 %v4469, %v4853
        %v4855 = vpop.f32.mrb[0].mxu0
        %4856 = vmatprep.mubr.f32.mxu0 0.0
        %4857 = vmatmul.mubr.f32.gmra.mrb[0].mxu0 %v2537
        %v4858 = vpop.f32.mrb[0].mxu0
        %v4859 = vadd.f32 %v4474, %v4858
        %v4860 = vpop.f32.mrb[0].mxu0
        %4861 = vmatprep.mubr.f32.mxu0 0.0
        %4862 = vmatmul.mubr.f32.gmra.mrb[0].mxu0 %v2538
        %v4863 = vpop.f32.mrb[0].mxu0
        %v4864 = vadd.f32 %v4479, %v4863
        %v4865 = vpop.f32.mrb[0].mxu0
        %4866 = vmatprep.mubr.f32.mxu0 0.0
        %4867 = vmatmul.mubr.f32.gmra.mrb[0].mxu0 %v2539
        %v4868 = vpop.f32.mrb[0].mxu0
        %v4869 = vadd.f32 %v4484, %v4868
        %v4870 = vpop.f32.mrb[0].mxu0
        %4871 = vmatprep.mubr.f32.mxu0 0.0
        %4872 = vmatmul.mubr.f32.gmra.mrb[0].mxu0 %v2540
        %v4873 = vpop.f32.mrb[0].mxu0
        %v4874 = vadd.f32 %v4489, %v4873
        %v4875 = vpop.f32.mrb[0].mxu0
        %4876 = vmatprep.mubr.f32.mxu0 0.0
        %4877 = vmatmul.mubr.f32.gmra.mrb[0].mxu0 %v2541
        %v4878 = vpop.f32.mrb[0].mxu0
        %v4879 = vadd.f32 %v4494, %v4878
        %v4880 = vpop.f32.mrb[0].mxu0
        %4881 = vmatprep.mubr.f32.mxu0 0.0
        %4882 = vmatmul.mubr.f32.gmra.mrb[0].mxu0 %v2542
        %v4883 = vpop.f32.mrb[0].mxu0
        %v4884 = vadd.f32 %v4499, %v4883
        %v4885 = vpop.f32.mrb[0].mxu0
        %4886 = vmatprep.mubr.f32.mxu0 0.0
        %4887 = vmatmul.mubr.f32.gmra.mrb[0].mxu0 %v2543
        %v4888 = vpop.f32.mrb[0].mxu0
        %v4889 = vadd.f32 %v4504, %v4888
        %v4890 = vpop.f32.mrb[0].mxu0
        %4891 = vmatprep.mubr.f32.mxu0 0.0
        %4892 = vmatmul.mubr.f32.gmra.mrb[0].mxu0 %v2544
        %v4893 = vpop.f32.mrb[0].mxu0
        %v4894 = vadd.f32 %v4509, %v4893
        %v4895 = vpop.f32.mrb[0].mxu0
        %4896 = vmatprep.mubr.f32.mxu0 0.0
        %4897 = vmatmul.mubr.f32.gmra.mrb[0].mxu0 %v2545
        %v4898 = vpop.f32.mrb[0].mxu0
        %v4899 = vadd.f32 %v4514, %v4898
        %v4900 = vpop.f32.mrb[0].mxu0
        %4901 = vmatprep.mubr.f32.mxu0 0.0
        %4902 = vmatmul.mubr.f32.gmra.mrb[0].mxu0 %v2546
        %v4903 = vpop.f32.mrb[0].mxu0
        %v4904 = vadd.f32 %v4519, %v4903
        %v4905 = vpop.f32.mrb[0].mxu0
        %4906 = vmatprep.mubr.f32.mxu0 0.0
        %4907 = vmatmul.mubr.f32.gmra.mrb[0].mxu0 %v2547
        %v4908 = vpop.f32.mrb[0].mxu0
        %v4909 = vadd.f32 %v4524, %v4908
        %v4910 = vpop.f32.mrb[0].mxu0
        %4911 = vmatprep.mubr.f32.mxu0 0.0
        %4912 = vmatmul.mubr.f32.gmra.mrb[0].mxu0 %v2548
        %v4913 = vpop.f32.mrb[0].mxu0
        %v4914 = vadd.f32 %v4529, %v4913
        %v4915 = vpop.f32.mrb[0].mxu0
        %4916 = vmatprep.mubr.f32.mxu0 0.0
        %4917 = vmatmul.mubr.f32.gmra.mrb[0].mxu0 %v2549
        %v4918 = vpop.f32.mrb[0].mxu0
        %v4919 = vadd.f32 %v4534, %v4918
        %v4920 = vpop.f32.mrb[0].mxu0
        %4921 = vmatprep.mubr.f32.mxu0 0.0
        %4922 = vmatmul.mubr.f32.gmra.mrb[0].mxu0 %v2550
        %v4923 = vpop.f32.mrb[0].mxu0
        %v4924 = vadd.f32 %v4539, %v4923
        %v4925 = vpop.f32.mrb[0].mxu0
        %4926 = vmatprep.mubr.f32.mxu0 0.0
        %4927 = vmatmul.mubr.f32.gmra.mrb[0].mxu0 %v2551
        %v4928 = vpop.f32.mrb[0].mxu0
        %v4929 = vadd.f32 %v4544, %v4928
        %v4930 = vpop.f32.mrb[0].mxu0
        %4931 = vmatprep.mubr.f32.mxu0 0.0
        %4932 = vmatmul.mubr.f32.gmra.mrb[0].mxu0 %v2552
        %v4933 = vpop.f32.mrb[0].mxu0
        %v4934 = vadd.f32 %v4549, %v4933
        %v4935 = vpop.f32.mrb[0].mxu0
        %4936 = vmatprep.mubr.f32.mxu0 0.0
        %4937 = vmatmul.mubr.f32.gmra.mrb[0].mxu0 %v2553
        %v4938 = vpop.f32.mrb[0].mxu0
        %v4939 = vadd.f32 %v4554, %v4938
        %v4940 = vpop.f32.mrb[0].mxu0
        %4941 = vmatprep.mubr.f32.mxu0 0.0
        %4942 = vmatmul.mubr.f32.gmra.mrb[0].mxu0 %v2554
        %v4943 = vpop.f32.mrb[0].mxu0
        %v4944 = vadd.f32 %v4559, %v4943
        %v4945 = vpop.f32.mrb[0].mxu0
        %4946 = vmatprep.mubr.f32.mxu0 0.0
        %4947 = vmatmul.mubr.f32.gmra.mrb[0].mxu0 %v2555
        %v4948 = vpop.f32.mrb[0].mxu0
        %v4949 = vadd.f32 %v4564, %v4948
        %v4950 = vpop.f32.mrb[0].mxu0
        %4951 = vmatprep.mubr.f32.mxu0 0.0
        %4952 = vmatmul.mubr.f32.gmra.mrb[0].mxu0 %v2556
        %v4953 = vpop.f32.mrb[0].mxu0
        %v4954 = vadd.f32 %v4569, %v4953
        %v4955 = vpop.f32.mrb[0].mxu0
        %4956 = vmatprep.mubr.f32.mxu0 0.0
        %4957 = vmatmul.mubr.f32.gmra.mrb[0].mxu0 %v2557
        %v4958 = vpop.f32.mrb[0].mxu0
        %v4959 = vadd.f32 %v4574, %v4958
        %v4960 = vpop.f32.mrb[0].mxu0
        %4961 = vmatprep.mubr.f32.mxu0 0.0
        %4962 = vmatmul.mubr.f32.gmra.mrb[0].mxu0 %v2558
        %v4963 = vpop.f32.mrb[0].mxu0
        %v4964 = vadd.f32 %v4579, %v4963
        %v4965 = vpop.f32.mrb[0].mxu0
        %4966 = vmatprep.mubr.f32.mxu0 0.0
        %4967 = vmatmul.mubr.f32.gmra.mrb[0].mxu0 %v2559
        %v4968 = vpop.f32.mrb[0].mxu0
        %v4969 = vadd.f32 %v4584, %v4968
        %v4970 = vpop.f32.mrb[0].mxu0
        %4971 = vmatprep.mubr.f32.mxu0 0.0
        %4972 = vmatmul.mubr.f32.gmra.mrb[0].mxu0 %v2560
        %v4973 = vpop.f32.mrb[0].mxu0
        %v4974 = vadd.f32 %v4589, %v4973
        %v4975 = vpop.f32.mrb[0].mxu0
        %4976 = vmatprep.mubr.f32.mxu0 0.0
        %4977 = vmatmul.mubr.f32.gmra.mrb[0].mxu0 %v2561
        %v4978 = vpop.f32.mrb[0].mxu0
        %v4979 = vadd.f32 %v4594, %v4978
        %v4980 = vpop.f32.mrb[0].mxu0
        %4981 = vmatprep.mubr.f32.mxu0 0.0
        %4982 = vmatmul.mubr.f32.gmra.mrb[0].mxu0 %v2562
        %v4983 = vpop.f32.mrb[0].mxu0
        %v4984 = vadd.f32 %v4599, %v4983
        %v4985 = vpop.f32.mrb[0].mxu0
        %4986 = vmatprep.mubr.f32.mxu0 0.0
        %4987 = vmatmul.mubr.f32.gmra.mrb[0].mxu0 %v2563
        %v4988 = vpop.f32.mrb[0].mxu0
        %v4989 = vadd.f32 %v4604, %v4988
        %v4990 = vpop.f32.mrb[0].mxu0
        %4991 = vmatprep.mubr.f32.mxu0 0.0
        %4992 = vmatmul.mubr.f32.gmra.mrb[0].mxu0 %v2564
        %v4993 = vpop.f32.mrb[0].mxu0
        %v4994 = vadd.f32 %v4609, %v4993
        %v4995 = vpop.f32.mrb[0].mxu0
        %4996 = vmatprep.mubr.f32.mxu0 0.0
        %4997 = vmatmul.mubr.f32.gmra.mrb[0].mxu0 %v2565
        %v4998 = vpop.f32.mrb[0].mxu0
        %v4999 = vadd.f32 %v4614, %v4998
        %v5000 = vpop.f32.mrb[0].mxu0
        %5001 = vmatprep.mubr.f32.mxu0 0.0
        %5002 = vmatmul.mubr.f32.gmra.mrb[0].mxu0 %v2566
        %v5003 = vpop.f32.mrb[0].mxu0
        %v5004 = vadd.f32 %v4619, %v5003
        %v5005 = vpop.f32.mrb[0].mxu0
        %5006 = vmatprep.mubr.f32.mxu0 0.0
        %5007 = vmatmul.mubr.f32.gmra.mrb[0].mxu0 %v2567
        %v5008 = vpop.f32.mrb[0].mxu0
        %v5009 = vadd.f32 %v4624, %v5008
        %v5010 = vpop.f32.mrb[0].mxu0
        %5011 = vmatprep.mubr.f32.mxu0 0.0
        %5012 = vmatmul.mubr.f32.gmra.mrb[0].mxu0 %v2568
        %v5013 = vpop.f32.mrb[0].mxu0
        %v5014 = vadd.f32 %v4629, %v5013
        %v5015 = vpop.f32.mrb[0].mxu0
        %5016 = vmatprep.mubr.f32.mxu0 0.0
        %5017 = vmatmul.mubr.f32.gmra.mrb[0].mxu0 %v2569
        %v5018 = vpop.f32.mrb[0].mxu0
        %v5019 = vadd.f32 %v4634, %v5018
        %v5020 = vpop.f32.mrb[0].mxu0
        %5021 = vmatprep.mubr.f32.mxu0 0.0
        %5022 = vmatmul.mubr.f32.gmra.mrb[0].mxu0 %v2570
        %v5023 = vpop.f32.mrb[0].mxu0
        %v5024 = vadd.f32 %v4639, %v5023
        %v5025 = vpop.f32.mrb[0].mxu0
        %5026 = vmatprep.mubr.f32.mxu0 0.0
        %5027 = vmatmul.mubr.f32.gmra.mrb[0].mxu0 %v2571
        %v5028 = vpop.f32.mrb[0].mxu0
        %v5029 = vadd.f32 %v4644, %v5028
        %v5030 = vpop.f32.mrb[0].mxu0
        %5031 = vmatprep.mubr.f32.mxu0 0.0
        %5032 = vmatmul.mubr.f32.gmra.mrb[0].mxu0 %v2572
        %v5033 = vpop.f32.mrb[0].mxu0
        %v5034 = vadd.f32 %v4649, %v5033
        %v5035 = vpop.f32.mrb[0].mxu0
        %5036 = vmatprep.mubr.f32.mxu0 0.0
        %5037 = vmatmul.mubr.f32.gmra.mrb[0].mxu0 %v2573
        %v5038 = vpop.f32.mrb[0].mxu0
        %v5039 = vadd.f32 %v4654, %v5038
        %v5040 = vpop.f32.mrb[0].mxu0
        %5041 = vmatprep.mubr.f32.mxu0 0.0
        %5042 = vmatmul.mubr.f32.gmra.mrb[0].mxu0 %v2574
        %v5043 = vpop.f32.mrb[0].mxu0
        %v5044 = vadd.f32 %v4659, %v5043
        %v5045 = vpop.f32.mrb[0].mxu0
        %5046 = vmatprep.mubr.f32.mxu0 0.0
        %5047 = vmatmul.mubr.f32.gmra.mrb[0].mxu0 %v2575
        %v5048 = vpop.f32.mrb[0].mxu0
        %v5049 = vadd.f32 %v4664, %v5048
        %v5050 = vpop.f32.mrb[0].mxu0
        %5051 = vmatprep.mubr.f32.mxu0 0.0
        %5052 = vmatmul.mubr.f32.gmra.mrb[0].mxu0 %v2576
        %v5053 = vpop.f32.mrb[0].mxu0
        %v5054 = vadd.f32 %v4669, %v5053
        %v5055 = vpop.f32.mrb[0].mxu0
        %5056 = vmatprep.mubr.f32.mxu0 0.0
        %5057 = vmatmul.mubr.f32.gmra.mrb[0].mxu0 %v2577
        %v5058 = vpop.f32.mrb[0].mxu0
        %v5059 = vadd.f32 %v4674, %v5058
        %v5060 = vpop.f32.mrb[0].mxu0
        %5061 = vmatprep.mubr.f32.mxu0 0.0
        %5062 = vmatmul.mubr.f32.gmra.mrb[0].mxu0 %v2578
        %v5063 = vpop.f32.mrb[0].mxu0
        %v5064 = vadd.f32 %v4679, %v5063
        %v5065 = vpop.f32.mrb[0].mxu0
        %5066 = vmatprep.mubr.f32.mxu0 0.0
        %5067 = vmatmul.mubr.f32.gmra.mrb[0].mxu0 %v2579
        %v5068 = vpop.f32.mrb[0].mxu0
        %v5069 = vadd.f32 %v4684, %v5068
        %v5070 = vpop.f32.mrb[0].mxu0
        %5071 = vmatprep.mubr.f32.mxu0 0.0
        %5072 = vmatmul.mubr.f32.gmra.mrb[0].mxu0 %v2580
        %v5073 = vpop.f32.mrb[0].mxu0
        %v5074 = vadd.f32 %v4689, %v5073
        %v5075 = vpop.f32.mrb[0].mxu0
        %5076 = vmatprep.mubr.f32.mxu0 0.0
        %5077 = vmatmul.mubr.f32.gmra.mrb[0].mxu0 %v2581
        %v5078 = vpop.f32.mrb[0].mxu0
        %v5079 = vadd.f32 %v4694, %v5078
        %v5080 = vpop.f32.mrb[0].mxu0
        %5081 = vmatprep.mubr.f32.mxu0 0.0
        %5082 = vmatmul.mubr.f32.gmra.mrb[0].mxu0 %v2582
        %v5083 = vpop.f32.mrb[0].mxu0
        %v5084 = vadd.f32 %v4699, %v5083
        %v5085 = vpop.f32.mrb[0].mxu0
        %5086 = vmatprep.mubr.f32.mxu0 0.0
        %5087 = vmatmul.mubr.f32.gmra.mrb[0].mxu0 %v2583
        %v5088 = vpop.f32.mrb[0].mxu0
        %v5089 = vadd.f32 %v4704, %v5088
        %v5090 = vpop.f32.mrb[0].mxu0
        %5091 = vmatprep.mubr.f32.mxu0 0.0
        %5092 = vmatmul.mubr.f32.gmra.mrb[0].mxu0 %v2584
        %v5093 = vpop.f32.mrb[0].mxu0
        %v5094 = vadd.f32 %v4709, %v5093
        %v5095 = vpop.f32.mrb[0].mxu0
        %5096 = vmatprep.mubr.f32.mxu0 0.0
        %5097 = vmatmul.mubr.f32.gmra.mrb[0].mxu0 %v2585
        %v5098 = vpop.f32.mrb[0].mxu0
        %v5099 = vadd.f32 %v4714, %v5098
        %v5100 = vpop.f32.mrb[0].mxu0
        %5101 = vmatprep.mubr.f32.mxu0 0.0
        %5102 = vmatmul.mubr.f32.gmra.mrb[0].mxu0 %v2586
        %v5103 = vpop.f32.mrb[0].mxu0
        %v5104 = vadd.f32 %v4719, %v5103
        %v5105 = vpop.f32.mrb[0].mxu0
        %5106 = vmatprep.mubr.f32.mxu0 0.0
        %5107 = vmatmul.mubr.f32.gmra.mrb[0].mxu0 %v2587
        %v5108 = vpop.f32.mrb[0].mxu0
        %v5109 = vadd.f32 %v4724, %v5108
        %v5110 = vpop.f32.mrb[0].mxu0
        %5111 = vmatprep.mubr.f32.mxu0 0.0
        %5112 = vmatmul.mubr.f32.gmra.mrb[0].mxu0 %v2588
        %v5113 = vpop.f32.mrb[0].mxu0
        %v5114 = vadd.f32 %v4729, %v5113
        %v5115 = vpop.f32.mrb[0].mxu0
        %5116 = vmatprep.mubr.f32.mxu0 0.0
        %5117 = vmatmul.mubr.f32.gmra.mrb[0].mxu0 %v2589
        %v5118 = vpop.f32.mrb[0].mxu0
        %v5119 = vadd.f32 %v4734, %v5118
        %v5120 = vpop.f32.mrb[0].mxu0
        %5121 = vmatprep.mubr.f32.mxu0 0.0
        %5122 = vmatmul.mubr.f32.gmra.mrb[0].mxu0 %v2590
        %v5123 = vpop.f32.mrb[0].mxu0
        %v5124 = vadd.f32 %v4739, %v5123
        %v5125 = vpop.f32.mrb[0].mxu0
        %5126 = vmatprep.mubr.f32.mxu0 0.0
        %5127 = vmatmul.mubr.f32.gmra.mrb[0].mxu0 %v2591
        %v5128 = vpop.f32.mrb[0].mxu0
        %v5129 = vadd.f32 %v4744, %v5128
        %v5130 = vpop.f32.mrb[0].mxu0
        %5131 = vmatprep.mubr.f32.mxu0 0.0
        %5132 = vmatmul.mubr.f32.gmra.mrb[0].mxu0 %v2592
        %v5133 = vpop.f32.mrb[0].mxu0
        %v5134 = vadd.f32 %v4749, %v5133
        %v5135 = vpop.f32.mrb[0].mxu0
        %5136 = vmatprep.mubr.f32.mxu0 0.0
        %5137 = vmatmul.mubr.f32.gmra.mrb[0].mxu0 %v2593
        %v5138 = vpop.f32.mrb[0].mxu0
        %v5139 = vadd.f32 %v4754, %v5138
        %v5140 = vpop.f32.mrb[0].mxu0
        %5141 = vmatprep.mubr.f32.mxu0 0.0
        %5142 = vmatmul.mubr.f32.gmra.mrb[0].mxu0 %v2594
        %v5143 = vpop.f32.mrb[0].mxu0
        %v5144 = vadd.f32 %v4759, %v5143
        %v5145 = vpop.f32.mrb[0].mxu0
        %5146 = vmatprep.mubr.f32.mxu0 0.0
        %5147 = vmatmul.mubr.f32.gmra.mrb[0].mxu0 %v2595
        %v5148 = vpop.f32.mrb[0].mxu0
        %v5149 = vadd.f32 %v4764, %v5148
        %v5150 = vpop.f32.mrb[0].mxu0
        %5151 = vmatprep.mubr.f32.mxu0 0.0
        %5152 = vmatmul.mubr.f32.gmra.mrb[0].mxu0 %v2596
        %v5153 = vpop.f32.mrb[0].mxu0
        %v5154 = vadd.f32 %v4769, %v5153
        %v5155 = vpop.f32.mrb[0].mxu0
        %5156 = vdwg.mxu0
        %5157 = vst [vmem:[%s245] sm:$0xff] %v4839
        %5158 = vst [vmem:[%s245 + $0x8] sm:$0xff] %v4844
        %5159 = vst [vmem:[%s245 + $0x10] sm:$0xff] %v4849
        %5160 = vst [vmem:[%s245 + $0x18] sm:$0xff] %v4854
        %5161 = vst [vmem:[%s245 + $0x20] sm:$0xff] %v4859
        %5162 = vst [vmem:[%s245 + $0x28] sm:$0xff] %v4864
        %5163 = vst [vmem:[%s245 + $0x30] sm:$0xff] %v4869
        %5164 = vst [vmem:[%s245 + $0x38] sm:$0xff] %v4874
        %5165 = vst [vmem:[%s245 + $0x40] sm:$0xff] %v4879
        %5166 = vst [vmem:[%s245 + $0x48] sm:$0xff] %v4884
        %5167 = vst [vmem:[%s245 + $0x50] sm:$0xff] %v4889
        %5168 = vst [vmem:[%s245 + $0x58] sm:$0xff] %v4894
        %5169 = vst [vmem:[%s245 + $0x60] sm:$0xff] %v4899
        %5170 = vst [vmem:[%s245 + $0x68] sm:$0xff] %v4904
        %5171 = vst [vmem:[%s245 + $0x70] sm:$0xff] %v4909
        %5172 = vst [vmem:[%s245 + $0x78] sm:$0xff] %v4914
        %5173 = vst [vmem:[%s245 + $0x80] sm:$0xff] %v4919
        %5174 = vst [vmem:[%s245 + $0x88] sm:$0xff] %v4924
        %5175 = vst [vmem:[%s245 + $0x90] sm:$0xff] %v4929
        %5176 = vst [vmem:[%s245 + $0x98] sm:$0xff] %v4934
        %5177 = vst [vmem:[%s245 + $0xa0] sm:$0xff] %v4939
        %5178 = vst [vmem:[%s245 + $0xa8] sm:$0xff] %v4944
        %5179 = vst [vmem:[%s245 + $0xb0] sm:$0xff] %v4949
        %5180 = vst [vmem:[%s245 + $0xb8] sm:$0xff] %v4954
        %5181 = vst [vmem:[%s245 + $0xc0] sm:$0xff] %v4959
        %5182 = vst [vmem:[%s245 + $0xc8] sm:$0xff] %v4964
        %5183 = vst [vmem:[%s245 + $0xd0] sm:$0xff] %v4969
        %5184 = vst [vmem:[%s245 + $0xd8] sm:$0xff] %v4974
        %5185 = vst [vmem:[%s245 + $0xe0] sm:$0xff] %v4979
        %5186 = vst [vmem:[%s245 + $0xe8] sm:$0xff] %v4984
        %5187 = vst [vmem:[%s245 + $0xf0] sm:$0xff] %v4989
        %5188 = vst [vmem:[%s245 + $0xf8] sm:$0xff] %v4994
        %5189 = vst [vmem:[%s245 + $0x100] sm:$0xff] %v4999
        %5190 = vst [vmem:[%s245 + $0x108] sm:$0xff] %v5004
        %5191 = vst [vmem:[%s245 + $0x110] sm:$0xff] %v5009
        %5192 = vst [vmem:[%s245 + $0x118] sm:$0xff] %v5014
        %5193 = vst [vmem:[%s245 + $0x120] sm:$0xff] %v5019
        %5194 = vst [vmem:[%s245 + $0x128] sm:$0xff] %v5024
        %5195 = vst [vmem:[%s245 + $0x130] sm:$0xff] %v5029
        %5196 = vst [vmem:[%s245 + $0x138] sm:$0xff] %v5034
        %5197 = vst [vmem:[%s245 + $0x140] sm:$0xff] %v5039
        %5198 = vst [vmem:[%s245 + $0x148] sm:$0xff] %v5044
        %5199 = vst [vmem:[%s245 + $0x150] sm:$0xff] %v5049
        %5200 = vst [vmem:[%s245 + $0x158] sm:$0xff] %v5054
        %5201 = vst [vmem:[%s245 + $0x160] sm:$0xff] %v5059
        %5202 = vst [vmem:[%s245 + $0x168] sm:$0xff] %v5064
        %5203 = vst [vmem:[%s245 + $0x170] sm:$0xff] %v5069
        %5204 = vst [vmem:[%s245 + $0x178] sm:$0xff] %v5074
        %5205 = vst [vmem:[%s245 + $0x180] sm:$0xff] %v5079
        %5206 = vst [vmem:[%s245 + $0x188] sm:$0xff] %v5084
        %5207 = vst [vmem:[%s245 + $0x190] sm:$0xff] %v5089
        %5208 = vst [vmem:[%s245 + $0x198] sm:$0xff] %v5094
        %5209 = vst [vmem:[%s245 + $0x1a0] sm:$0xff] %v5099
        %5210 = vst [vmem:[%s245 + $0x1a8] sm:$0xff] %v5104
        %5211 = vst [vmem:[%s245 + $0x1b0] sm:$0xff] %v5109
        %5212 = vst [vmem:[%s245 + $0x1b8] sm:$0xff] %v5114
        %5213 = vst [vmem:[%s245 + $0x1c0] sm:$0xff] %v5119
        %5214 = vst [vmem:[%s245 + $0x1c8] sm:$0xff] %v5124
        %5215 = vst [vmem:[%s245 + $0x1d0] sm:$0xff] %v5129
        %5216 = vst [vmem:[%s245 + $0x1d8] sm:$0xff] %v5134
        %5217 = vst [vmem:[%s245 + $0x1e0] sm:$0xff] %v5139
        %5218 = vst [vmem:[%s245 + $0x1e8] sm:$0xff] %v5144
        %5219 = vst [vmem:[%s245 + $0x1f0] sm:$0xff] %v5149
        %5220 = vst [vmem:[%s245 + $0x1f8] sm:$0xff] %v5154
        %s5221 = sand.u32 %s159, 1
        %s5222 = scalar_lea.sflag [#allocation3], %s5221
        %s5223 = sand.u32 %s159, 1
        %s5224 = smul.addr %s5223, 512
        %s5225 = scalar_lea.vmem [#allocation2], %s5224
        // Predicated region
        $region45: #{tpu_custom_call.1} parent=43 // pred_check
          %p5226 = pneg %p169
        $region46: #{tpu_custom_call.1} parent=43 // pred_check_branch
          %5228 = sbr.rel (%p5226) target = $region48
        $region47: #{tpu_custom_call.1} parent=43 // pred_region
          %s5229 = smul.u32 64, %s20
          %s5231 = ssub.s32 8192, 8192
          %5232 = vsyncadd %s5222, %s5231
          %s5233 = smul.addr %s5229, 128
          %s5234 = scalar_lea.hbm %s6, %s5233
          %s5235 = sshll.u32 %s5225, 4
          %s5236 = int_to_ptr.vmem [resolvable:$true] %s5235
          %5241 = dma.vmem_to_hbm [thread:$0]  %s5236, 8192, %s5234, %s5222, 128, 128, 8
        $region48: #{tpu_custom_call.1} parent=43 // pred_fallthru
          _
      $region44: #{tpu_custom_call.1} parent=5 // pred_fallthru
        _
      %p5242 = scmp.le.s32.totalorder 2, %s15
      // Predicated region
      $region49: #{tpu_custom_call.1} parent=5 // pred_check
        %p5243 = pneg %p5242
      $region50: #{tpu_custom_call.1} parent=5 // pred_check_branch
        %5245 = sbr.rel (%p5243) target = $region52
      $region51: #{tpu_custom_call.1} parent=5 // pred_region
        %s5246 = ssub.s32 %s15, 2
        // Predicated region
        $region53: #{tpu_custom_call.1} parent=51 // pred_check
          %p5247 = pneg %p175
        $region54: #{tpu_custom_call.1} parent=51 // pred_check_branch
          %5249 = sbr.rel (%p5247) target = $region56
        $region55: #{tpu_custom_call.1} parent=51 // pred_region
          %s5250 = sand.u32 %s160, 1
          %s5251 = scalar_lea.sflag [#allocation3], %s5250
          %s5252 = sand.u32 %s160, 1
          %s5253 = smul.addr %s5252, 512
          %s5254 = scalar_lea.vmem [#allocation2], %s5253
          %5255 = dma.done %s5251, 8192
        $region56: #{tpu_custom_call.1} parent=51 // pred_fallthru
          _
      $region52: #{tpu_custom_call.1} parent=5 // pred_fallthru
        _
    $region6: #{tpu_custom_call.1} parent=1 // loop_footer
      %s19 = sadd.s32 1, %s15
    $region7: #{tpu_custom_call.1} parent=1 // loop_footer_branch
      %14 = sbr.rel target = $region3
    $region8: #{tpu_custom_call.1} parent=1 // loop_exit
      _
    %5256 = vsyncpa [#allocation3], 1
    %s5257 = scalar_lea.sflag [#allocation3], 1
    %5258 = vsyncpa %s5257, 1

</llo_original>
